<compile_context>
chip_gen: v7x
topology: tpu7x:2x2x1
jax: 0.10.0
libtpu: 0.0.40
codegen_flags: <defaults>
</compile_context>

<pallas_src>
import functools

import jax
import jax.numpy as jnp
from jax import lax
from jax.experimental import pallas as pl
from jax.experimental.pallas import tpu as pltpu

CFG = dict(
    input_features_dim=4,
    num_hiddens=32,
    num_residual_layers=2,
    residual_channels=8,
    embedding_dim=16,
    num_embeddings=32,
    commitment_cost=0.25,
    quantization_channels=32,
    wavenet_residual_channels=16,
    wavenet_skip_channels=16,
    gc_embedding_dim=8,
    num_speakers=4,
    wavenet_dilations=(1, 2, 4),
    record_codebook_stats=False,
)


def _dot(a, b):
    return jnp.dot(a, b, preferred_element_type=jnp.float32)


def _roll_rows(x, shift):
    # positive `shift` means row i receives x[i - shift] (wraparound rows are
    # masked by the caller); shift is normalized to be non-negative.
    n = x.shape[0]
    return pltpu.roll(x, shift=shift % n, axis=0)


# ---------------------------------------------------------------------------
# Kernel 1: fused encoder + pre-VQ conv + vector quantizer
# ---------------------------------------------------------------------------
def _encoder_vq_kernel(B, T2, TQ, rows0_ref, tidx_ref,
                       w1_ref, b1_ref, w2_ref, b2_ref,
                       rw1_ref, rb1_ref, rw2_ref, rb2_ref,
                       wpre_ref, bpre_ref, cb_ref, cb2_ref,
                       q_ref, idx_ref, probs_ref, mse_ref,
                       zs):
    NQ, D = zs.shape
    K = cb_ref.shape[0]
    n_res = rw2_ref.shape[0]
    tidx = tidx_ref[...]                                     # [N2,1] t within batch

    # conv1 (stride-2, k=4): im2col rows precomputed outside, matmul + relu here
    h = jnp.maximum(_dot(rows0_ref[...], w1_ref[...]) + b1_ref[...], 0.0)   # [N2,H]

    def conv3(val, w_stacked, bias):
        # k=3, padding=1 conv on [N2,C] rows (rows grouped per batch, length T2).
        # +-1 time shifts via XLU roll; batch-boundary / edge rows masked to 0;
        # the three taps are fused into a single [N2,3C] x [3C,Cout] matmul.
        xp = jnp.where(tidx >= 1, _roll_rows(val, 1), 0.0)
        xn = jnp.where(tidx <= T2 - 2, _roll_rows(val, -1), 0.0)
        x3 = jnp.concatenate([xp, val, xn], axis=1)
        return _dot(x3, w_stacked) + bias

    # conv2 (k=3, pad 1) + relu
    h = jnp.maximum(conv3(h, w2_ref[...], b2_ref[...]), 0.0)

    # residual stack: relu -> k3 conv (+relu) -> 1x1 conv -> add
    for l in range(n_res):
        t = conv3(jnp.maximum(h, 0.0), rw1_ref[l], rb1_ref[l])
        t = jnp.maximum(t, 0.0)
        t = _dot(t, rw2_ref[l]) + rb2_ref[l]
        h = h + t
    henc = jnp.maximum(h, 0.0)                               # [N2,H]

    # pre-VQ 1x1 conv with padding=1 (adds 2 bias-only timesteps per batch).
    # zmid rows are placed with B static pl.ds row-block stores; the remaining
    # rows of the [NQ,D] scratch keep the bias (no quadratic placement matmul).
    zmid = _dot(henc, wpre_ref[...])                         # [N2,D]
    bpre = bpre_ref[...]                                     # [1,D]
    zs[...] = jnp.broadcast_to(bpre, (NQ, D))
    for b in range(B):
        zs[pl.ds(b * TQ + 1, T2), :] = zmid[b * T2:(b + 1) * T2, :] + bpre
    z = zs[...]                                              # [NQ,D]

    # Vector quantizer: distances, first-argmin, one-hot, codebook gather.
    cb = cb_ref[...]
    z2 = jnp.sum(z * z, axis=1, keepdims=True)               # [NQ,1]
    cross = lax.dot_general(z, cb, (((1,), (1,)), ((), ())),
                            preferred_element_type=jnp.float32)            # [NQ,K]
    dmat = z2 - 2.0 * cross + cb2_ref[...]                   # cb2 hoisted (param const)
    dmin = jnp.min(dmat, axis=1, keepdims=True)
    kiota = lax.broadcasted_iota(jnp.int32, dmat.shape, 1)
    idx = jnp.min(jnp.where(dmat <= dmin, kiota, K), axis=1, keepdims=True)
    onehot = (kiota == idx).astype(jnp.float32)
    q = _dot(onehot, cb)

    q_ref[...] = q
    idx_ref[...] = idx
    # epilogue stats via XLU reductions (no M=1 matmuls)
    probs_ref[...] = jnp.sum(onehot, axis=0, keepdims=True) * (1.0 / NQ)    # [1,K]
    diff = q - z
    sq = jnp.sum(diff * diff, axis=0, keepdims=True)                        # [1,D]
    mse_ref[...] = jnp.sum(sq, axis=1, keepdims=True) * (1.0 / (NQ * D))    # [1,1]


# ---------------------------------------------------------------------------
# Kernel 2: fused WaveNet decoder (all dilated gated layers + post-net)
# ---------------------------------------------------------------------------
def _wavenet_decoder_kernel(dilations,
                            x0_ref, lc_ref, boh_ref, tidx_ref, gcb_ref, wlc_ref,
                            wxp_ref, wrs_ref, brs_ref,
                            wp1_ref, bp1_ref, wp2_ref, bp2_ref,
                            out_ref):
    N, R = x0_ref.shape
    R2 = 2 * R                           # packed [f | g] columns
    S = wrs_ref.shape[2] - R             # skip channels
    tidx = tidx_ref[...]                 # [N,1] t within batch

    # residual state is a traced value (register-resident across the unrolled
    # layer loop); dilated causal reads are XLU rolls + masks.
    x = x0_ref[...]                      # [N,R]

    # local + global conditioning (incl. gate biases) for ALL layers: 2 matmuls
    cond = _dot(lc_ref[...], wlc_ref[...]) + _dot(boh_ref[...], gcb_ref[...])  # [N, L*2R]

    skip = jnp.zeros((N, S), jnp.float32)
    for l, d in enumerate(dilations):
        x_prev = jnp.where(tidx >= d, _roll_rows(x, d), 0.0)
        x2 = jnp.concatenate([x, x_prev], axis=1)            # [N, 2R]
        fg = _dot(x2, wxp_ref[l]) + cond[:, l * R2:(l + 1) * R2]
        zact = jnp.tanh(fg[:, :R]) * jax.nn.sigmoid(fg[:, R:])
        rs = _dot(zact, wrs_ref[l]) + brs_ref[l]             # packed [res | skip]
        x = x + rs[:, :R]
        skip = skip + rs[:, R:]

    # fused post-net: relu -> 1x1 -> relu -> 1x1
    hp = jnp.maximum(skip, 0.0)
    hp = jnp.maximum(_dot(hp, wp1_ref[...]) + bp1_ref[...], 0.0)
    out_ref[...] = _dot(hp, wp2_ref[...]) + bp2_ref[...]


# ---------------------------------------------------------------------------
# Wrappers (plain-JAX glue is only boundary layout / gathers / tiny constants)
# ---------------------------------------------------------------------------
def encoder_vq_pallas(p, x_enc):
    B, Cin, T = x_enc.shape
    T2 = (T + 2 - 4) // 2 + 1            # stride-2 k=4 pad(1,1)
    N2 = B * T2
    D = CFG['embedding_dim']
    K = CFG['num_embeddings']
    TQ = T2 + 2
    NQ = B * TQ

    # im2col for the stride-2 k=4 conv, built directly in [B, T, C] row layout
    xt = jnp.transpose(x_enc, (0, 2, 1))                     # single boundary transpose
    xpad = jnp.pad(xt, ((0, 0), (1, 1), (0, 0)))
    cols = [xpad[:, j:j + 2 * (T2 - 1) + 1:2, :] for j in range(4)]
    rows0 = jnp.concatenate(cols, axis=-1).reshape(N2, Cin * 4)

    tidx = jnp.tile(jnp.arange(T2, dtype=jnp.int32), B).reshape(N2, 1)
    cb2 = jnp.sum(p['codebook'] * p['codebook'], axis=1)[None, :]   # [1,K], hoisted

    kernel = functools.partial(_encoder_vq_kernel, B, T2, TQ)
    return pl.pallas_call(
        kernel,
        out_shape=(jax.ShapeDtypeStruct((NQ, D), jnp.float32),   # quantized rows
                   jax.ShapeDtypeStruct((NQ, 1), jnp.int32),     # encoding indices
                   jax.ShapeDtypeStruct((1, K), jnp.float32),    # avg codebook probs
                   jax.ShapeDtypeStruct((1, 1), jnp.float32)),   # mean (q - z)^2
        scratch_shapes=[pltpu.VMEM((NQ, D), jnp.float32)],
    )(rows0, tidx,
      p['w1'], p['b1'], p['w2'], p['b2'],
      p['rw1'], p['rb1'], p['rw2'], p['rb2'],
      p['wpre'], p['bpre'], p['codebook'], cb2)


def wavenet_decoder_pallas(p, x_dec_s, q_rows, gc_ids):
    B, T = x_dec_s.shape
    Q = CFG['quantization_channels']
    R = CFG['wavenet_residual_channels']
    D = CFG['embedding_dim']
    N = B * T
    TQ = q_rows.shape[0] // B
    assert T % TQ == 0, "decoder length must be a multiple of the latent length"

    # mu-law quantize + causal k=2 conv on the one-hot input done as weight gathers
    mu = float(Q - 1)
    x_mu = jnp.sign(x_dec_s) * jnp.log1p(mu * jnp.abs(x_dec_s)) / jnp.log1p(mu)
    ids = jnp.clip(((x_mu + 1.0) * 0.5 * mu + 0.5).astype(jnp.int32), 0, Q - 1)  # [B,T]
    cur = p['causal_wa'][ids]                                # [B,T,R] current tap
    prv = p['causal_wb'][ids]                                # [B,T,R] previous tap
    prv = jnp.concatenate([jnp.zeros((B, 1, R), jnp.float32), prv[:, :-1, :]], axis=1)
    x0 = (cur + prv + p['causal_b']).reshape(N, R)

    # local conditioning: nearest-neighbour upsample, stays in row layout
    # TODO(synk): at real upsample factors, move this expansion in-kernel
    # (stride-0 broadcast reads) to cut lc HBM traffic by T/TQ.
    lc = jnp.repeat(q_rows.reshape(B, TQ, D), T // TQ, axis=1).reshape(N, D)

    # per-batch global-conditioning + gate-bias table, one [B, L*2R] matrix
    gcvec = p['gc_embedding'][gc_ids]                        # [B,G]
    gcb = gcvec @ p['wgc'] + p['bfg']                        # [B, L*2R]
    boh = jnp.repeat(jnp.eye(B, dtype=jnp.float32), T, axis=0)           # [N,B]
    tidx = jnp.tile(jnp.arange(T, dtype=jnp.int32), B).reshape(N, 1)

    kernel = functools.partial(_wavenet_decoder_kernel, CFG['wavenet_dilations'])
    logits = pl.pallas_call(
        kernel,
        out_shape=jax.ShapeDtypeStruct((N, Q), jnp.float32),
    )(x0, lc, boh, tidx, gcb, p['wlc'],
      p['wxp'], p['wrs'], p['brs'],
      p['wpost1'], p['bpost1'], p['wpost2'], p['bpost2'])
    return jnp.transpose(logits.reshape(B, T, Q), (0, 2, 1))  # boundary NCL layout only


# ---------------------------------------------------------------------------
# Parameters (submodule internals not given -> deterministic synthetic params,
# stored directly in the packed layouts the kernels consume)
# ---------------------------------------------------------------------------
def init_params(key):
    def nrm(k, shape, scale=0.1):
        return scale * jax.random.normal(k, shape, jnp.float32)

    keys = iter(jax.random.split(key, 64))
    H, RH = CFG['num_hiddens'], CFG['residual_channels']
    Cin, D, K = CFG['input_features_dim'], CFG['embedding_dim'], CFG['num_embeddings']
    Q, R = CFG['quantization_channels'], CFG['wavenet_residual_channels']
    S, G = CFG['wavenet_skip_channels'], CFG['gc_embedding_dim']
    L = len(CFG['wavenet_dilations'])
    Lr = CFG['num_residual_layers']

    p = {}
    # encoder (k=3 conv weights pre-stacked as [prev; cur; next] along rows)
    p['w1'] = nrm(next(keys), (Cin * 4, H)); p['b1'] = jnp.zeros((1, H))
    p['w2'] = nrm(next(keys), (3 * H, H));   p['b2'] = jnp.zeros((1, H))
    p['rw1'] = nrm(next(keys), (Lr, 3 * H, RH)); p['rb1'] = jnp.zeros((Lr, 1, RH))
    p['rw2'] = nrm(next(keys), (Lr, RH, H));     p['rb2'] = jnp.zeros((Lr, 1, H))
    p['wpre'] = nrm(next(keys), (H, D)); p['bpre'] = jnp.zeros((1, D))
    # VQ
    p['codebook'] = jax.random.uniform(next(keys), (K, D), jnp.float32, -1.0 / K, 1.0 / K)
    # decoder (cur+prev taps pre-stacked as [cur; prev] rows; [f | g] columns)
    p['gc_embedding'] = nrm(next(keys), (CFG['num_speakers'], G))
    p['causal_wa'] = nrm(next(keys), (Q, R))     # tap on x[t]
    p['causal_wb'] = nrm(next(keys), (Q, R))     # tap on x[t-1]
    p['causal_b'] = jnp.zeros((1, R))
    p['wxp'] = nrm(next(keys), (L, 2 * R, 2 * R))  # [[wf_cur|wg_cur];[wf_prev|wg_prev]]
    p['wlc'] = nrm(next(keys), (D, L * 2 * R))   # [wlf | wlg] per layer, layers concat
    p['wgc'] = nrm(next(keys), (G, L * 2 * R))   # [wgf | wgg] per layer, layers concat
    p['bfg'] = jnp.zeros((1, L * 2 * R))         # [bf | bg] per layer, layers concat
    p['wrs'] = nrm(next(keys), (L, R, R + S))    # [wres | wskip] per layer
    p['brs'] = jnp.zeros((L, 1, R + S))
    p['wpost1'] = nrm(next(keys), (S, Q)); p['bpost1'] = jnp.zeros((1, Q))
    p['wpost2'] = nrm(next(keys), (Q, Q)); p['bpost2'] = jnp.zeros((1, Q))
    return p


# ---------------------------------------------------------------------------
# Module forward
# ---------------------------------------------------------------------------
def wavenet_vqvae_forward(p, x_enc, x_dec, global_condition):
    # encoder + pre-VQ + VQ (one pallas_call)
    q_rows, encoding_indices, avg_probs, mse = encoder_vq_pallas(p, x_enc)

    mse_s = mse[0, 0]
    e_latent_loss = mse_s
    q_latent_loss = mse_s                         # same forward value (stop_gradient only
    commitment_loss = CFG['commitment_cost'] * e_latent_loss   # matters for backward)
    vq_loss = q_latent_loss + commitment_loss
    perplexity = jnp.exp(-jnp.sum(avg_probs * jnp.log(avg_probs + 1e-10)))
    losses = dict(e_latent_loss=e_latent_loss, q_latent_loss=q_latent_loss,
                  commitment_loss=commitment_loss, vq_loss=vq_loss)

    # torch .squeeze(-1) semantics
    x_dec_s = x_dec[..., 0] if x_dec.shape[-1] == 1 else x_dec           # [B, T_dec]

    # fused WaveNet decoder (one pallas_call); local condition = quantized codes
    recon = wavenet_decoder_pallas(p, x_dec_s, q_rows, global_condition)  # [B, Q, T_dec]

    reconstructed_x = recon[..., None]            # unsqueeze(-1)
    x_dec_out = x_dec_s[..., None]
    concatenated_quantized = None                 # record_codebook_stats=False path
    return (reconstructed_x, x_dec_out, vq_loss, losses, perplexity,
            encoding_indices, concatenated_quantized)


# ---------------------------------------------------------------------------
if __name__ == "__main__":
    key = jax.random.PRNGKey(0)
    kp, k1, k2 = jax.random.split(key, 3)
    params = init_params(kp)

    B, T_ENC, T_DEC = 2, 16, 20
    x_enc = jax.random.normal(k1, (B, CFG['input_features_dim'], T_ENC), jnp.float32)
    x_dec = jax.random.uniform(k2, (B, T_DEC, 1), jnp.float32, -1.0, 1.0)
    global_condition = jnp.array([0, 2], jnp.int32)

    fwd = jax.jit(lambda a, b, c: wavenet_vqvae_forward(params, a, b, c))
    outs = fwd(x_enc, x_dec, global_condition)
    jax.block_until_ready(outs)

    recon, x_dec_out, vq_loss, losses, perplexity, enc_idx, concat_q = outs
    assert recon.shape == (B, CFG['quantization_channels'], T_DEC, 1)
    assert x_dec_out.shape == (B, T_DEC, 1)
    assert enc_idx.shape == (B * (T_ENC // 2 + 2), 1)
    assert concat_q is None
    print("KERNEL_OK")
</pallas_src>

<mosaic_0001>
module attributes {stable_mosaic.version = 11 : i64} {
  func.func @_encoder_vq_kernel(%arg0: memref<16x16xf32, #tpu.memory_space<vmem>>, %arg1: memref<16x1xi32, #tpu.memory_space<vmem>>, %arg2: memref<16x32xf32, #tpu.memory_space<vmem>>, %arg3: memref<1x32xf32, #tpu.memory_space<vmem>>, %arg4: memref<96x32xf32, #tpu.memory_space<vmem>>, %arg5: memref<1x32xf32, #tpu.memory_space<vmem>>, %arg6: memref<2x96x8xf32, #tpu.memory_space<vmem>>, %arg7: memref<2x1x8xf32, #tpu.memory_space<vmem>>, %arg8: memref<2x8x32xf32, #tpu.memory_space<vmem>>, %arg9: memref<2x1x32xf32, #tpu.memory_space<vmem>>, %arg10: memref<32x16xf32, #tpu.memory_space<vmem>>, %arg11: memref<1x16xf32, #tpu.memory_space<vmem>>, %arg12: memref<32x16xf32, #tpu.memory_space<vmem>>, %arg13: memref<1x32xf32, #tpu.memory_space<vmem>>, %arg14: memref<20x16xf32, #tpu.memory_space<vmem>>, %arg15: memref<20x1xi32, #tpu.memory_space<vmem>>, %arg16: memref<1x32xf32, #tpu.memory_space<vmem>>, %arg17: memref<1x1xf32, #tpu.memory_space<vmem>>, %arg18: memref<20x16xf32, #tpu.memory_space<vmem>>) attributes {dimension_semantics = [], scalar_prefetch = 0 : i64, scratch_operands = 1 : i64, tpu.core_type = #tpu.core_type<tc>} {
    %c0 = arith.constant 0 : index
    %c0_0 = arith.constant 0 : index
    %0 = vector.load %arg1[%c0, %c0_0] : memref<16x1xi32, #tpu.memory_space<vmem>>, vector<16x1xi32>
    %c0_1 = arith.constant 0 : index
    %c0_2 = arith.constant 0 : index
    %1 = vector.load %arg0[%c0_1, %c0_2] : memref<16x16xf32, #tpu.memory_space<vmem>>, vector<16x16xf32>
    %c0_3 = arith.constant 0 : index
    %c0_4 = arith.constant 0 : index
    %2 = vector.load %arg2[%c0_3, %c0_4] : memref<16x32xf32, #tpu.memory_space<vmem>>, vector<16x32xf32>
    %cst = arith.constant dense<0.000000e+00> : vector<16x32xf32>
    %3 = tpu.matmul %1, %2, %cst {dimension_numbers = #tpu.dot_dimension_numbers<[1], [0], [0], [1], [0, 0, 1, 1], [], []>} : vector<16x16xf32>, vector<16x32xf32>, vector<16x32xf32> -> vector<16x32xf32>
    %c0_5 = arith.constant 0 : index
    %c0_6 = arith.constant 0 : index
    %4 = vector.load %arg3[%c0_5, %c0_6] : memref<1x32xf32, #tpu.memory_space<vmem>>, vector<1x32xf32>
    %5 = vector.broadcast %4 : vector<1x32xf32> to vector<16x32xf32>
    %6 = arith.addf %3, %5 : vector<16x32xf32>
    %cst_7 = arith.constant 0.000000e+00 : f32
    %7 = vector.broadcast %cst_7 : f32 to vector<16x32xf32>
    %8 = arith.maximumf %6, %7 : vector<16x32xf32>
    %c0_8 = arith.constant 0 : index
    %c0_9 = arith.constant 0 : index
    %9 = vector.load %arg4[%c0_8, %c0_9] : memref<96x32xf32, #tpu.memory_space<vmem>>, vector<96x32xf32>
    %c0_10 = arith.constant 0 : index
    %c0_11 = arith.constant 0 : index
    %10 = vector.load %arg5[%c0_10, %c0_11] : memref<1x32xf32, #tpu.memory_space<vmem>>, vector<1x32xf32>
    %c1_i32 = arith.constant 1 : i32
    %11 = vector.broadcast %c1_i32 : i32 to vector<16x1xi32>
    %12 = arith.cmpi sge, %0, %11 : vector<16x1xi32>
    %c1_i32_12 = arith.constant 1 : i32
    %13 = tpu.dynamic_rotate %8 by %c1_i32_12 dim 0 : vector<16x32xf32>, i32 -> vector<16x32xf32>
    %cst_13 = arith.constant 0.000000e+00 : f32
    %14 = vector.shape_cast %12 : vector<16x1xi1> to vector<16x1xi1>
    %15 = vector.broadcast %14 : vector<16x1xi1> to vector<16x32xi1>
    %16 = vector.broadcast %cst_13 : f32 to vector<16x32xf32>
    %17 = arith.select %15, %13, %16 : vector<16x32xi1>, vector<16x32xf32>
    %c6_i32 = arith.constant 6 : i32
    %18 = vector.broadcast %c6_i32 : i32 to vector<16x1xi32>
    %19 = arith.cmpi sle, %0, %18 : vector<16x1xi32>
    %c15_i32 = arith.constant 15 : i32
    %20 = tpu.dynamic_rotate %8 by %c15_i32 dim 0 : vector<16x32xf32>, i32 -> vector<16x32xf32>
    %cst_14 = arith.constant 0.000000e+00 : f32
    %21 = vector.shape_cast %19 : vector<16x1xi1> to vector<16x1xi1>
    %22 = vector.broadcast %21 : vector<16x1xi1> to vector<16x32xi1>
    %23 = vector.broadcast %cst_14 : f32 to vector<16x32xf32>
    %24 = arith.select %22, %20, %23 : vector<16x32xi1>, vector<16x32xf32>
    %25 = tpu.concatenate %17, %8, %24 in 1 : vector<16x32xf32>, vector<16x32xf32>, vector<16x32xf32> -> vector<16x96xf32>
    %cst_15 = arith.constant dense<0.000000e+00> : vector<16x32xf32>
    %26 = tpu.matmul %25, %9, %cst_15 {dimension_numbers = #tpu.dot_dimension_numbers<[1], [0], [0], [1], [0, 0, 1, 1], [], []>} : vector<16x96xf32>, vector<96x32xf32>, vector<16x32xf32> -> vector<16x32xf32>
    %27 = vector.broadcast %10 : vector<1x32xf32> to vector<16x32xf32>
    %28 = arith.addf %26, %27 : vector<16x32xf32>
    %cst_16 = arith.constant 0.000000e+00 : f32
    %29 = vector.broadcast %cst_16 : f32 to vector<16x32xf32>
    %30 = arith.maximumf %28, %29 : vector<16x32xf32>
    %cst_17 = arith.constant 0.000000e+00 : f32
    %31 = vector.broadcast %cst_17 : f32 to vector<16x32xf32>
    %32 = arith.maximumf %30, %31 : vector<16x32xf32>
    %c0_18 = arith.constant 0 : index
    %c0_19 = arith.constant 0 : index
    %c0_20 = arith.constant 0 : index
    %33 = vector.load %arg6[%c0_18, %c0_19, %c0_20] : memref<2x96x8xf32, #tpu.memory_space<vmem>>, vector<1x96x8xf32>
    %34 = vector.shape_cast %33 : vector<1x96x8xf32> to vector<96x8xf32>
    %c0_21 = arith.constant 0 : index
    %c0_22 = arith.constant 0 : index
    %c0_23 = arith.constant 0 : index
    %35 = vector.load %arg7[%c0_21, %c0_22, %c0_23] : memref<2x1x8xf32, #tpu.memory_space<vmem>>, vector<1x1x8xf32>
    %36 = vector.shape_cast %35 : vector<1x1x8xf32> to vector<1x8xf32>
    %c1_i32_24 = arith.constant 1 : i32
    %37 = vector.broadcast %c1_i32_24 : i32 to vector<16x1xi32>
    %38 = arith.cmpi sge, %0, %37 : vector<16x1xi32>
    %c1_i32_25 = arith.constant 1 : i32
    %39 = tpu.dynamic_rotate %32 by %c1_i32_25 dim 0 : vector<16x32xf32>, i32 -> vector<16x32xf32>
    %cst_26 = arith.constant 0.000000e+00 : f32
    %40 = vector.shape_cast %38 : vector<16x1xi1> to vector<16x1xi1>
    %41 = vector.broadcast %40 : vector<16x1xi1> to vector<16x32xi1>
    %42 = vector.broadcast %cst_26 : f32 to vector<16x32xf32>
    %43 = arith.select %41, %39, %42 : vector<16x32xi1>, vector<16x32xf32>
    %c6_i32_27 = arith.constant 6 : i32
    %44 = vector.broadcast %c6_i32_27 : i32 to vector<16x1xi32>
    %45 = arith.cmpi sle, %0, %44 : vector<16x1xi32>
    %c15_i32_28 = arith.constant 15 : i32
    %46 = tpu.dynamic_rotate %32 by %c15_i32_28 dim 0 : vector<16x32xf32>, i32 -> vector<16x32xf32>
    %cst_29 = arith.constant 0.000000e+00 : f32
    %47 = vector.shape_cast %45 : vector<16x1xi1> to vector<16x1xi1>
    %48 = vector.broadcast %47 : vector<16x1xi1> to vector<16x32xi1>
    %49 = vector.broadcast %cst_29 : f32 to vector<16x32xf32>
    %50 = arith.select %48, %46, %49 : vector<16x32xi1>, vector<16x32xf32>
    %51 = tpu.concatenate %43, %32, %50 in 1 : vector<16x32xf32>, vector<16x32xf32>, vector<16x32xf32> -> vector<16x96xf32>
    %cst_30 = arith.constant dense<0.000000e+00> : vector<16x8xf32>
    %52 = tpu.matmul %51, %34, %cst_30 {dimension_numbers = #tpu.dot_dimension_numbers<[1], [0], [0], [1], [0, 0, 1, 1], [], []>} : vector<16x96xf32>, vector<96x8xf32>, vector<16x8xf32> -> vector<16x8xf32>
    %53 = vector.broadcast %36 : vector<1x8xf32> to vector<16x8xf32>
    %54 = arith.addf %52, %53 : vector<16x8xf32>
    %cst_31 = arith.constant 0.000000e+00 : f32
    %55 = vector.broadcast %cst_31 : f32 to vector<16x8xf32>
    %56 = arith.maximumf %54, %55 : vector<16x8xf32>
    %c0_32 = arith.constant 0 : index
    %c0_33 = arith.constant 0 : index
    %c0_34 = arith.constant 0 : index
    %57 = vector.load %arg8[%c0_32, %c0_33, %c0_34] : memref<2x8x32xf32, #tpu.memory_space<vmem>>, vector<1x8x32xf32>
    %58 = vector.shape_cast %57 : vector<1x8x32xf32> to vector<8x32xf32>
    %cst_35 = arith.constant dense<0.000000e+00> : vector<16x32xf32>
    %59 = tpu.matmul %56, %58, %cst_35 {dimension_numbers = #tpu.dot_dimension_numbers<[1], [0], [0], [1], [0, 0, 1, 1], [], []>} : vector<16x8xf32>, vector<8x32xf32>, vector<16x32xf32> -> vector<16x32xf32>
    %c0_36 = arith.constant 0 : index
    %c0_37 = arith.constant 0 : index
    %c0_38 = arith.constant 0 : index
    %60 = vector.load %arg9[%c0_36, %c0_37, %c0_38] : memref<2x1x32xf32, #tpu.memory_space<vmem>>, vector<1x1x32xf32>
    %61 = vector.shape_cast %60 : vector<1x1x32xf32> to vector<1x32xf32>
    %62 = vector.broadcast %61 : vector<1x32xf32> to vector<16x32xf32>
    %63 = arith.addf %59, %62 : vector<16x32xf32>
    %64 = arith.addf %30, %63 : vector<16x32xf32>
    %cst_39 = arith.constant 0.000000e+00 : f32
    %65 = vector.broadcast %cst_39 : f32 to vector<16x32xf32>
    %66 = arith.maximumf %64, %65 : vector<16x32xf32>
    %c1 = arith.constant 1 : index
    %c0_40 = arith.constant 0 : index
    %c0_41 = arith.constant 0 : index
    %67 = vector.load %arg6[%c1, %c0_40, %c0_41] : memref<2x96x8xf32, #tpu.memory_space<vmem>>, vector<1x96x8xf32>
    %68 = vector.shape_cast %67 : vector<1x96x8xf32> to vector<96x8xf32>
    %c1_42 = arith.constant 1 : index
    %c0_43 = arith.constant 0 : index
    %c0_44 = arith.constant 0 : index
    %69 = vector.load %arg7[%c1_42, %c0_43, %c0_44] : memref<2x1x8xf32, #tpu.memory_space<vmem>>, vector<1x1x8xf32>
    %70 = vector.shape_cast %69 : vector<1x1x8xf32> to vector<1x8xf32>
    %c1_i32_45 = arith.constant 1 : i32
    %71 = vector.broadcast %c1_i32_45 : i32 to vector<16x1xi32>
    %72 = arith.cmpi sge, %0, %71 : vector<16x1xi32>
    %c1_i32_46 = arith.constant 1 : i32
    %73 = tpu.dynamic_rotate %66 by %c1_i32_46 dim 0 : vector<16x32xf32>, i32 -> vector<16x32xf32>
    %cst_47 = arith.constant 0.000000e+00 : f32
    %74 = vector.shape_cast %72 : vector<16x1xi1> to vector<16x1xi1>
    %75 = vector.broadcast %74 : vector<16x1xi1> to vector<16x32xi1>
    %76 = vector.broadcast %cst_47 : f32 to vector<16x32xf32>
    %77 = arith.select %75, %73, %76 : vector<16x32xi1>, vector<16x32xf32>
    %c6_i32_48 = arith.constant 6 : i32
    %78 = vector.broadcast %c6_i32_48 : i32 to vector<16x1xi32>
    %79 = arith.cmpi sle, %0, %78 : vector<16x1xi32>
    %c15_i32_49 = arith.constant 15 : i32
    %80 = tpu.dynamic_rotate %66 by %c15_i32_49 dim 0 : vector<16x32xf32>, i32 -> vector<16x32xf32>
    %cst_50 = arith.constant 0.000000e+00 : f32
    %81 = vector.shape_cast %79 : vector<16x1xi1> to vector<16x1xi1>
    %82 = vector.broadcast %81 : vector<16x1xi1> to vector<16x32xi1>
    %83 = vector.broadcast %cst_50 : f32 to vector<16x32xf32>
    %84 = arith.select %82, %80, %83 : vector<16x32xi1>, vector<16x32xf32>
    %85 = tpu.concatenate %77, %66, %84 in 1 : vector<16x32xf32>, vector<16x32xf32>, vector<16x32xf32> -> vector<16x96xf32>
    %cst_51 = arith.constant dense<0.000000e+00> : vector<16x8xf32>
    %86 = tpu.matmul %85, %68, %cst_51 {dimension_numbers = #tpu.dot_dimension_numbers<[1], [0], [0], [1], [0, 0, 1, 1], [], []>} : vector<16x96xf32>, vector<96x8xf32>, vector<16x8xf32> -> vector<16x8xf32>
    %87 = vector.broadcast %70 : vector<1x8xf32> to vector<16x8xf32>
    %88 = arith.addf %86, %87 : vector<16x8xf32>
    %cst_52 = arith.constant 0.000000e+00 : f32
    %89 = vector.broadcast %cst_52 : f32 to vector<16x8xf32>
    %90 = arith.maximumf %88, %89 : vector<16x8xf32>
    %c1_53 = arith.constant 1 : index
    %c0_54 = arith.constant 0 : index
    %c0_55 = arith.constant 0 : index
    %91 = vector.load %arg8[%c1_53, %c0_54, %c0_55] : memref<2x8x32xf32, #tpu.memory_space<vmem>>, vector<1x8x32xf32>
    %92 = vector.shape_cast %91 : vector<1x8x32xf32> to vector<8x32xf32>
    %cst_56 = arith.constant dense<0.000000e+00> : vector<16x32xf32>
    %93 = tpu.matmul %90, %92, %cst_56 {dimension_numbers = #tpu.dot_dimension_numbers<[1], [0], [0], [1], [0, 0, 1, 1], [], []>} : vector<16x8xf32>, vector<8x32xf32>, vector<16x32xf32> -> vector<16x32xf32>
    %c1_57 = arith.constant 1 : index
    %c0_58 = arith.constant 0 : index
    %c0_59 = arith.constant 0 : index
    %94 = vector.load %arg9[%c1_57, %c0_58, %c0_59] : memref<2x1x32xf32, #tpu.memory_space<vmem>>, vector<1x1x32xf32>
    %95 = vector.shape_cast %94 : vector<1x1x32xf32> to vector<1x32xf32>
    %96 = vector.broadcast %95 : vector<1x32xf32> to vector<16x32xf32>
    %97 = arith.addf %93, %96 : vector<16x32xf32>
    %98 = arith.addf %64, %97 : vector<16x32xf32>
    %cst_60 = arith.constant 0.000000e+00 : f32
    %99 = vector.broadcast %cst_60 : f32 to vector<16x32xf32>
    %100 = arith.maximumf %98, %99 : vector<16x32xf32>
    %c0_61 = arith.constant 0 : index
    %c0_62 = arith.constant 0 : index
    %101 = vector.load %arg10[%c0_61, %c0_62] : memref<32x16xf32, #tpu.memory_space<vmem>>, vector<32x16xf32>
    %cst_63 = arith.constant dense<0.000000e+00> : vector<16x16xf32>
    %102 = tpu.matmul %100, %101, %cst_63 {dimension_numbers = #tpu.dot_dimension_numbers<[1], [0], [0], [1], [0, 0, 1, 1], [], []>} : vector<16x32xf32>, vector<32x16xf32>, vector<16x16xf32> -> vector<16x16xf32>
    %c0_64 = arith.constant 0 : index
    %c0_65 = arith.constant 0 : index
    %103 = vector.load %arg11[%c0_64, %c0_65] : memref<1x16xf32, #tpu.memory_space<vmem>>, vector<1x16xf32>
    %104 = vector.shape_cast %103 : vector<1x16xf32> to vector<1x16xf32>
    %105 = vector.broadcast %104 : vector<1x16xf32> to vector<20x16xf32>
    %c0_66 = arith.constant 0 : index
    %c0_67 = arith.constant 0 : index
    %106 = vector.load %arg18[%c0_66, %c0_67] : memref<20x16xf32, #tpu.memory_space<vmem>>, vector<20x16xf32>
    tpu.vector_store %arg18[%c0_66, %c0_67], %105 {strides = array<i32>} : memref<20x16xf32, #tpu.memory_space<vmem>>, vector<20x16xf32>,
    %107 = vector.extract_strided_slice %102 {offsets = [0, 0], sizes = [8, 16], strides = [1, 1]} : vector<16x16xf32> to vector<8x16xf32>
    %108 = vector.broadcast %103 : vector<1x16xf32> to vector<8x16xf32>
    %109 = arith.addf %107, %108 : vector<8x16xf32>
    %c1_68 = arith.constant 1 : index
    %c0_69 = arith.constant 0 : index
    %110 = vector.load %arg18[%c1_68, %c0_69] : memref<20x16xf32, #tpu.memory_space<vmem>>, vector<8x16xf32>
    tpu.vector_store %arg18[%c1_68, %c0_69], %109 {strides = array<i32>} : memref<20x16xf32, #tpu.memory_space<vmem>>, vector<8x16xf32>,
    %111 = vector.extract_strided_slice %102 {offsets = [8, 0], sizes = [8, 16], strides = [1, 1]} : vector<16x16xf32> to vector<8x16xf32>
    %112 = vector.broadcast %103 : vector<1x16xf32> to vector<8x16xf32>
    %113 = arith.addf %111, %112 : vector<8x16xf32>
    %c11 = arith.constant 11 : index
    %c0_70 = arith.constant 0 : index
    %114 = vector.load %arg18[%c11, %c0_70] : memref<20x16xf32, #tpu.memory_space<vmem>>, vector<8x16xf32>
    tpu.vector_store %arg18[%c11, %c0_70], %113 {strides = array<i32>} : memref<20x16xf32, #tpu.memory_space<vmem>>, vector<8x16xf32>,
    %c0_71 = arith.constant 0 : index
    %c0_72 = arith.constant 0 : index
    %115 = vector.load %arg18[%c0_71, %c0_72] : memref<20x16xf32, #tpu.memory_space<vmem>>, vector<20x16xf32>
    %c0_73 = arith.constant 0 : index
    %c0_74 = arith.constant 0 : index
    %116 = vector.load %arg12[%c0_73, %c0_74] : memref<32x16xf32, #tpu.memory_space<vmem>>, vector<32x16xf32>
    %117 = arith.mulf %115, %115 : vector<20x16xf32>
    %cst_75 = arith.constant dense<0.000000e+00> : vector<20xf32>
    %118 = vector.multi_reduction <add>, %117, %cst_75 [1] : vector<20x16xf32> to vector<20xf32>
    %119 = vector.shape_cast %118 : vector<20xf32> to vector<20x1xf32>
    %cst_76 = arith.constant dense<0.000000e+00> : vector<20x32xf32>
    %120 = tpu.matmul %115, %116, %cst_76 {dimension_numbers = #tpu.dot_dimension_numbers<[1], [1], [0], [0], [0, 0, 1, 0], [], []>} : vector<20x16xf32>, vector<32x16xf32>, vector<20x32xf32> -> vector<20x32xf32>
    %cst_77 = arith.constant 2.000000e+00 : f32
    %121 = vector.broadcast %cst_77 : f32 to vector<20x32xf32>
    %122 = arith.mulf %121, %120 : vector<20x32xf32>
    %123 = vector.broadcast %119 : vector<20x1xf32> to vector<20x32xf32>
    %124 = arith.subf %123, %122 : vector<20x32xf32>
    %c0_78 = arith.constant 0 : index
    %c0_79 = arith.constant 0 : index
    %125 = vector.load %arg13[%c0_78, %c0_79] : memref<1x32xf32, #tpu.memory_space<vmem>>, vector<1x32xf32>
    %126 = vector.broadcast %125 : vector<1x32xf32> to vector<20x32xf32>
    %127 = arith.addf %124, %126 : vector<20x32xf32>
    %cst_80 = arith.constant dense<0x7F800000> : vector<20xf32>
    %128 = vector.multi_reduction <minimumf>, %127, %cst_80 [1] : vector<20x32xf32> to vector<20xf32>
    %129 = vector.shape_cast %128 : vector<20xf32> to vector<20x1xf32>
    %130 = tpu.iota {dimensions = array<i32: 1>} : vector<20x32xi32>
    %131 = vector.broadcast %129 : vector<20x1xf32> to vector<20x32xf32>
    %132 = arith.cmpf ole, %127, %131 : vector<20x32xf32>
    %c32_i32 = arith.constant 32 : i32
    %133 = vector.broadcast %c32_i32 : i32 to vector<20x32xi32>
    %134 = arith.select %132, %130, %133 : vector<20x32xi1>, vector<20x32xi32>
    %cst_81 = arith.constant dense<2147483647> : vector<20xi32>
    %135 = vector.multi_reduction <minsi>, %134, %cst_81 [1] : vector<20x32xi32> to vector<20xi32>
    %136 = vector.shape_cast %135 : vector<20xi32> to vector<20x1xi32>
    %137 = vector.broadcast %136 : vector<20x1xi32> to vector<20x32xi32>
    %138 = arith.cmpi eq, %130, %137 : vector<20x32xi32>
    %139 = arith.extui %138 : vector<20x32xi1> to vector<20x32xi32>
    %140 = arith.sitofp %139 : vector<20x32xi32> to vector<20x32xf32>
    %cst_82 = arith.constant dense<0.000000e+00> : vector<20x16xf32>
    %141 = tpu.matmul %140, %116, %cst_82 {dimension_numbers = #tpu.dot_dimension_numbers<[1], [0], [0], [1], [0, 0, 1, 1], [], []>} : vector<20x32xf32>, vector<32x16xf32>, vector<20x16xf32> -> vector<20x16xf32>
    %c0_83 = arith.constant 0 : index
    %c0_84 = arith.constant 0 : index
    %142 = vector.load %arg14[%c0_83, %c0_84] : memref<20x16xf32, #tpu.memory_space<vmem>>, vector<20x16xf32>
    tpu.vector_store %arg14[%c0_83, %c0_84], %141 {strides = array<i32>} : memref<20x16xf32, #tpu.memory_space<vmem>>, vector<20x16xf32>,
    %c0_85 = arith.constant 0 : index
    %c0_86 = arith.constant 0 : index
    %143 = vector.load %arg15[%c0_85, %c0_86] : memref<20x1xi32, #tpu.memory_space<vmem>>, vector<20x1xi32>
    tpu.vector_store %arg15[%c0_85, %c0_86], %136 {strides = array<i32>} : memref<20x1xi32, #tpu.memory_space<vmem>>, vector<20x1xi32>,
    %cst_87 = arith.constant dense<0.000000e+00> : vector<32xf32>
    %144 = vector.multi_reduction <add>, %140, %cst_87 [0] : vector<20x32xf32> to vector<32xf32>
    %145 = vector.shape_cast %144 : vector<32xf32> to vector<1x32xf32>
    %cst_88 = arith.constant 5.000000e-02 : f32
    %146 = vector.broadcast %cst_88 : f32 to vector<1x32xf32>
    %147 = arith.mulf %145, %146 : vector<1x32xf32>
    %c0_89 = arith.constant 0 : index
    %c0_90 = arith.constant 0 : index
    %148 = vector.load %arg16[%c0_89, %c0_90] : memref<1x32xf32, #tpu.memory_space<vmem>>, vector<1x32xf32>
    tpu.vector_store %arg16[%c0_89, %c0_90], %147 {strides = array<i32>} : memref<1x32xf32, #tpu.memory_space<vmem>>, vector<1x32xf32>,
    %149 = arith.subf %141, %115 : vector<20x16xf32>
    %150 = arith.mulf %149, %149 : vector<20x16xf32>
    %cst_91 = arith.constant dense<0.000000e+00> : vector<16xf32>
    %151 = vector.multi_reduction <add>, %150, %cst_91 [0] : vector<20x16xf32> to vector<16xf32>
    %152 = vector.shape_cast %151 : vector<16xf32> to vector<1x16xf32>
    %cst_92 = arith.constant dense<0.000000e+00> : vector<1xf32>
    %153 = vector.multi_reduction <add>, %152, %cst_92 [1] : vector<1x16xf32> to vector<1xf32>
    %154 = vector.shape_cast %153 : vector<1xf32> to vector<1x1xf32>
    %cst_93 = arith.constant 3.125000e-03 : f32
    %155 = vector.broadcast %cst_93 : f32 to vector<1x1xf32>
    %156 = arith.mulf %154, %155 : vector<1x1xf32>
    %c0_94 = arith.constant 0 : index
    %c0_95 = arith.constant 0 : index
    %157 = vector.load %arg17[%c0_94, %c0_95] : memref<1x1xf32, #tpu.memory_space<vmem>>, vector<1x1xf32>
    tpu.vector_store %arg17[%c0_94, %c0_95], %156 {strides = array<i32>} : memref<1x1xf32, #tpu.memory_space<vmem>>, vector<1x1xf32>,
    return
  }
}

module attributes {stable_mosaic.version = 11 : i64} {
  func.func @_wavenet_decoder_kernel(%arg0: memref<40x16xf32, #tpu.memory_space<vmem>>, %arg1: memref<40x16xf32, #tpu.memory_space<vmem>>, %arg2: memref<40x2xf32, #tpu.memory_space<vmem>>, %arg3: memref<40x1xi32, #tpu.memory_space<vmem>>, %arg4: memref<2x96xf32, #tpu.memory_space<vmem>>, %arg5: memref<16x96xf32, #tpu.memory_space<vmem>>, %arg6: memref<3x32x32xf32, #tpu.memory_space<vmem>>, %arg7: memref<3x16x32xf32, #tpu.memory_space<vmem>>, %arg8: memref<3x1x32xf32, #tpu.memory_space<vmem>>, %arg9: memref<16x32xf32, #tpu.memory_space<vmem>>, %arg10: memref<1x32xf32, #tpu.memory_space<vmem>>, %arg11: memref<32x32xf32, #tpu.memory_space<vmem>>, %arg12: memref<1x32xf32, #tpu.memory_space<vmem>>, %arg13: memref<40x32xf32, #tpu.memory_space<vmem>>) attributes {dimension_semantics = [], scalar_prefetch = 0 : i64, scratch_operands = 0 : i64, tpu.core_type = #tpu.core_type<tc>} {
    %c0 = arith.constant 0 : index
    %c0_0 = arith.constant 0 : index
    %0 = vector.load %arg3[%c0, %c0_0] : memref<40x1xi32, #tpu.memory_space<vmem>>, vector<40x1xi32>
    %c0_1 = arith.constant 0 : index
    %c0_2 = arith.constant 0 : index
    %1 = vector.load %arg0[%c0_1, %c0_2] : memref<40x16xf32, #tpu.memory_space<vmem>>, vector<40x16xf32>
    %c0_3 = arith.constant 0 : index
    %c0_4 = arith.constant 0 : index
    %2 = vector.load %arg1[%c0_3, %c0_4] : memref<40x16xf32, #tpu.memory_space<vmem>>, vector<40x16xf32>
    %c0_5 = arith.constant 0 : index
    %c0_6 = arith.constant 0 : index
    %3 = vector.load %arg5[%c0_5, %c0_6] : memref<16x96xf32, #tpu.memory_space<vmem>>, vector<16x96xf32>
    %cst = arith.constant dense<0.000000e+00> : vector<40x96xf32>
    %4 = tpu.matmul %2, %3, %cst {dimension_numbers = #tpu.dot_dimension_numbers<[1], [0], [0], [1], [0, 0, 1, 1], [], []>} : vector<40x16xf32>, vector<16x96xf32>, vector<40x96xf32> -> vector<40x96xf32>
    %c0_7 = arith.constant 0 : index
    %c0_8 = arith.constant 0 : index
    %5 = vector.load %arg2[%c0_7, %c0_8] : memref<40x2xf32, #tpu.memory_space<vmem>>, vector<40x2xf32>
    %c0_9 = arith.constant 0 : index
    %c0_10 = arith.constant 0 : index
    %6 = vector.load %arg4[%c0_9, %c0_10] : memref<2x96xf32, #tpu.memory_space<vmem>>, vector<2x96xf32>
    %cst_11 = arith.constant dense<0.000000e+00> : vector<40x96xf32>
    %7 = tpu.matmul %5, %6, %cst_11 {dimension_numbers = #tpu.dot_dimension_numbers<[1], [0], [0], [1], [0, 0, 1, 1], [], []>} : vector<40x2xf32>, vector<2x96xf32>, vector<40x96xf32> -> vector<40x96xf32>
    %8 = arith.addf %4, %7 : vector<40x96xf32>
    %cst_12 = arith.constant 0.000000e+00 : f32
    %9 = vector.broadcast %cst_12 : f32 to vector<40x16xf32>
    %c1_i32 = arith.constant 1 : i32
    %10 = vector.broadcast %c1_i32 : i32 to vector<40x1xi32>
    %11 = arith.cmpi sge, %0, %10 : vector<40x1xi32>
    %c1_i32_13 = arith.constant 1 : i32
    %12 = tpu.dynamic_rotate %1 by %c1_i32_13 dim 0 : vector<40x16xf32>, i32 -> vector<40x16xf32>
    %cst_14 = arith.constant 0.000000e+00 : f32
    %13 = vector.shape_cast %11 : vector<40x1xi1> to vector<40x1xi1>
    %14 = vector.broadcast %13 : vector<40x1xi1> to vector<40x16xi1>
    %15 = vector.broadcast %cst_14 : f32 to vector<40x16xf32>
    %16 = arith.select %14, %12, %15 : vector<40x16xi1>, vector<40x16xf32>
    %17 = tpu.concatenate %1, %16 in 1 : vector<40x16xf32>, vector<40x16xf32> -> vector<40x32xf32>
    %c0_15 = arith.constant 0 : index
    %c0_16 = arith.constant 0 : index
    %c0_17 = arith.constant 0 : index
    %18 = vector.load %arg6[%c0_15, %c0_16, %c0_17] : memref<3x32x32xf32, #tpu.memory_space<vmem>>, vector<1x32x32xf32>
    %19 = vector.shape_cast %18 : vector<1x32x32xf32> to vector<32x32xf32>
    %cst_18 = arith.constant dense<0.000000e+00> : vector<40x32xf32>
    %20 = tpu.matmul %17, %19, %cst_18 {dimension_numbers = #tpu.dot_dimension_numbers<[1], [0], [0], [1], [0, 0, 1, 1], [], []>} : vector<40x32xf32>, vector<32x32xf32>, vector<40x32xf32> -> vector<40x32xf32>
    %21 = vector.extract_strided_slice %8 {offsets = [0, 0], sizes = [40, 32], strides = [1, 1]} : vector<40x96xf32> to vector<40x32xf32>
    %22 = arith.addf %20, %21 : vector<40x32xf32>
    %23 = vector.extract_strided_slice %22 {offsets = [0, 0], sizes = [40, 16], strides = [1, 1]} : vector<40x32xf32> to vector<40x16xf32>
    %24 = math.tanh %23 : vector<40x16xf32>
    %25 = vector.extract_strided_slice %22 {offsets = [0, 16], sizes = [40, 16], strides = [1, 1]} : vector<40x32xf32> to vector<40x16xf32>
    %26 = arith.negf %25 : vector<40x16xf32>
    %27 = math.exp %26 : vector<40x16xf32>
    %cst_19 = arith.constant 1.000000e+00 : f32
    %28 = vector.broadcast %cst_19 : f32 to vector<40x16xf32>
    %29 = arith.addf %28, %27 : vector<40x16xf32>
    %30 = arith.divf %28, %29 : vector<40x16xf32>
    %31 = arith.mulf %24, %30 : vector<40x16xf32>
    %c0_20 = arith.constant 0 : index
    %c0_21 = arith.constant 0 : index
    %c0_22 = arith.constant 0 : index
    %32 = vector.load %arg7[%c0_20, %c0_21, %c0_22] : memref<3x16x32xf32, #tpu.memory_space<vmem>>, vector<1x16x32xf32>
    %33 = vector.shape_cast %32 : vector<1x16x32xf32> to vector<16x32xf32>
    %cst_23 = arith.constant dense<0.000000e+00> : vector<40x32xf32>
    %34 = tpu.matmul %31, %33, %cst_23 {dimension_numbers = #tpu.dot_dimension_numbers<[1], [0], [0], [1], [0, 0, 1, 1], [], []>} : vector<40x16xf32>, vector<16x32xf32>, vector<40x32xf32> -> vector<40x32xf32>
    %c0_24 = arith.constant 0 : index
    %c0_25 = arith.constant 0 : index
    %c0_26 = arith.constant 0 : index
    %35 = vector.load %arg8[%c0_24, %c0_25, %c0_26] : memref<3x1x32xf32, #tpu.memory_space<vmem>>, vector<1x1x32xf32>
    %36 = vector.shape_cast %35 : vector<1x1x32xf32> to vector<1x32xf32>
    %37 = vector.broadcast %36 : vector<1x32xf32> to vector<40x32xf32>
    %38 = arith.addf %34, %37 : vector<40x32xf32>
    %39 = vector.extract_strided_slice %38 {offsets = [0, 0], sizes = [40, 16], strides = [1, 1]} : vector<40x32xf32> to vector<40x16xf32>
    %40 = arith.addf %1, %39 : vector<40x16xf32>
    %41 = vector.extract_strided_slice %38 {offsets = [0, 16], sizes = [40, 16], strides = [1, 1]} : vector<40x32xf32> to vector<40x16xf32>
    %42 = arith.addf %9, %41 : vector<40x16xf32>
    %c2_i32 = arith.constant 2 : i32
    %43 = vector.broadcast %c2_i32 : i32 to vector<40x1xi32>
    %44 = arith.cmpi sge, %0, %43 : vector<40x1xi32>
    %c2_i32_27 = arith.constant 2 : i32
    %45 = tpu.dynamic_rotate %40 by %c2_i32_27 dim 0 : vector<40x16xf32>, i32 -> vector<40x16xf32>
    %cst_28 = arith.constant 0.000000e+00 : f32
    %46 = vector.shape_cast %44 : vector<40x1xi1> to vector<40x1xi1>
    %47 = vector.broadcast %46 : vector<40x1xi1> to vector<40x16xi1>
    %48 = vector.broadcast %cst_28 : f32 to vector<40x16xf32>
    %49 = arith.select %47, %45, %48 : vector<40x16xi1>, vector<40x16xf32>
    %50 = tpu.concatenate %40, %49 in 1 : vector<40x16xf32>, vector<40x16xf32> -> vector<40x32xf32>
    %c1 = arith.constant 1 : index
    %c0_29 = arith.constant 0 : index
    %c0_30 = arith.constant 0 : index
    %51 = vector.load %arg6[%c1, %c0_29, %c0_30] : memref<3x32x32xf32, #tpu.memory_space<vmem>>, vector<1x32x32xf32>
    %52 = vector.shape_cast %51 : vector<1x32x32xf32> to vector<32x32xf32>
    %cst_31 = arith.constant dense<0.000000e+00> : vector<40x32xf32>
    %53 = tpu.matmul %50, %52, %cst_31 {dimension_numbers = #tpu.dot_dimension_numbers<[1], [0], [0], [1], [0, 0, 1, 1], [], []>} : vector<40x32xf32>, vector<32x32xf32>, vector<40x32xf32> -> vector<40x32xf32>
    %54 = vector.extract_strided_slice %8 {offsets = [0, 32], sizes = [40, 32], strides = [1, 1]} : vector<40x96xf32> to vector<40x32xf32>
    %55 = arith.addf %53, %54 : vector<40x32xf32>
    %56 = vector.extract_strided_slice %55 {offsets = [0, 0], sizes = [40, 16], strides = [1, 1]} : vector<40x32xf32> to vector<40x16xf32>
    %57 = math.tanh %56 : vector<40x16xf32>
    %58 = vector.extract_strided_slice %55 {offsets = [0, 16], sizes = [40, 16], strides = [1, 1]} : vector<40x32xf32> to vector<40x16xf32>
    %59 = arith.negf %58 : vector<40x16xf32>
    %60 = math.exp %59 : vector<40x16xf32>
    %cst_32 = arith.constant 1.000000e+00 : f32
    %61 = vector.broadcast %cst_32 : f32 to vector<40x16xf32>
    %62 = arith.addf %61, %60 : vector<40x16xf32>
    %63 = arith.divf %61, %62 : vector<40x16xf32>
    %64 = arith.mulf %57, %63 : vector<40x16xf32>
    %c1_33 = arith.constant 1 : index
    %c0_34 = arith.constant 0 : index
    %c0_35 = arith.constant 0 : index
    %65 = vector.load %arg7[%c1_33, %c0_34, %c0_35] : memref<3x16x32xf32, #tpu.memory_space<vmem>>, vector<1x16x32xf32>
    %66 = vector.shape_cast %65 : vector<1x16x32xf32> to vector<16x32xf32>
    %cst_36 = arith.constant dense<0.000000e+00> : vector<40x32xf32>
    %67 = tpu.matmul %64, %66, %cst_36 {dimension_numbers = #tpu.dot_dimension_numbers<[1], [0], [0], [1], [0, 0, 1, 1], [], []>} : vector<40x16xf32>, vector<16x32xf32>, vector<40x32xf32> -> vector<40x32xf32>
    %c1_37 = arith.constant 1 : index
    %c0_38 = arith.constant 0 : index
    %c0_39 = arith.constant 0 : index
    %68 = vector.load %arg8[%c1_37, %c0_38, %c0_39] : memref<3x1x32xf32, #tpu.memory_space<vmem>>, vector<1x1x32xf32>
    %69 = vector.shape_cast %68 : vector<1x1x32xf32> to vector<1x32xf32>
    %70 = vector.broadcast %69 : vector<1x32xf32> to vector<40x32xf32>
    %71 = arith.addf %67, %70 : vector<40x32xf32>
    %72 = vector.extract_strided_slice %71 {offsets = [0, 0], sizes = [40, 16], strides = [1, 1]} : vector<40x32xf32> to vector<40x16xf32>
    %73 = arith.addf %40, %72 : vector<40x16xf32>
    %74 = vector.extract_strided_slice %71 {offsets = [0, 16], sizes = [40, 16], strides = [1, 1]} : vector<40x32xf32> to vector<40x16xf32>
    %75 = arith.addf %42, %74 : vector<40x16xf32>
    %c4_i32 = arith.constant 4 : i32
    %76 = vector.broadcast %c4_i32 : i32 to vector<40x1xi32>
    %77 = arith.cmpi sge, %0, %76 : vector<40x1xi32>
    %c4_i32_40 = arith.constant 4 : i32
    %78 = tpu.dynamic_rotate %73 by %c4_i32_40 dim 0 : vector<40x16xf32>, i32 -> vector<40x16xf32>
    %cst_41 = arith.constant 0.000000e+00 : f32
    %79 = vector.shape_cast %77 : vector<40x1xi1> to vector<40x1xi1>
    %80 = vector.broadcast %79 : vector<40x1xi1> to vector<40x16xi1>
    %81 = vector.broadcast %cst_41 : f32 to vector<40x16xf32>
    %82 = arith.select %80, %78, %81 : vector<40x16xi1>, vector<40x16xf32>
    %83 = tpu.concatenate %73, %82 in 1 : vector<40x16xf32>, vector<40x16xf32> -> vector<40x32xf32>
    %c2 = arith.constant 2 : index
    %c0_42 = arith.constant 0 : index
    %c0_43 = arith.constant 0 : index
    %84 = vector.load %arg6[%c2, %c0_42, %c0_43] : memref<3x32x32xf32, #tpu.memory_space<vmem>>, vector<1x32x32xf32>
    %85 = vector.shape_cast %84 : vector<1x32x32xf32> to vector<32x32xf32>
    %cst_44 = arith.constant dense<0.000000e+00> : vector<40x32xf32>
    %86 = tpu.matmul %83, %85, %cst_44 {dimension_numbers = #tpu.dot_dimension_numbers<[1], [0], [0], [1], [0, 0, 1, 1], [], []>} : vector<40x32xf32>, vector<32x32xf32>, vector<40x32xf32> -> vector<40x32xf32>
    %87 = vector.extract_strided_slice %8 {offsets = [0, 64], sizes = [40, 32], strides = [1, 1]} : vector<40x96xf32> to vector<40x32xf32>
    %88 = arith.addf %86, %87 : vector<40x32xf32>
    %89 = vector.extract_strided_slice %88 {offsets = [0, 0], sizes = [40, 16], strides = [1, 1]} : vector<40x32xf32> to vector<40x16xf32>
    %90 = math.tanh %89 : vector<40x16xf32>
    %91 = vector.extract_strided_slice %88 {offsets = [0, 16], sizes = [40, 16], strides = [1, 1]} : vector<40x32xf32> to vector<40x16xf32>
    %92 = arith.negf %91 : vector<40x16xf32>
    %93 = math.exp %92 : vector<40x16xf32>
    %cst_45 = arith.constant 1.000000e+00 : f32
    %94 = vector.broadcast %cst_45 : f32 to vector<40x16xf32>
    %95 = arith.addf %94, %93 : vector<40x16xf32>
    %96 = arith.divf %94, %95 : vector<40x16xf32>
    %97 = arith.mulf %90, %96 : vector<40x16xf32>
    %c2_46 = arith.constant 2 : index
    %c0_47 = arith.constant 0 : index
    %c0_48 = arith.constant 0 : index
    %98 = vector.load %arg7[%c2_46, %c0_47, %c0_48] : memref<3x16x32xf32, #tpu.memory_space<vmem>>, vector<1x16x32xf32>
    %99 = vector.shape_cast %98 : vector<1x16x32xf32> to vector<16x32xf32>
    %cst_49 = arith.constant dense<0.000000e+00> : vector<40x32xf32>
    %100 = tpu.matmul %97, %99, %cst_49 {dimension_numbers = #tpu.dot_dimension_numbers<[1], [0], [0], [1], [0, 0, 1, 1], [], []>} : vector<40x16xf32>, vector<16x32xf32>, vector<40x32xf32> -> vector<40x32xf32>
    %c2_50 = arith.constant 2 : index
    %c0_51 = arith.constant 0 : index
    %c0_52 = arith.constant 0 : index
    %101 = vector.load %arg8[%c2_50, %c0_51, %c0_52] : memref<3x1x32xf32, #tpu.memory_space<vmem>>, vector<1x1x32xf32>
    %102 = vector.shape_cast %101 : vector<1x1x32xf32> to vector<1x32xf32>
    %103 = vector.broadcast %102 : vector<1x32xf32> to vector<40x32xf32>
    %104 = arith.addf %100, %103 : vector<40x32xf32>
    %105 = vector.extract_strided_slice %104 {offsets = [0, 16], sizes = [40, 16], strides = [1, 1]} : vector<40x32xf32> to vector<40x16xf32>
    %106 = arith.addf %75, %105 : vector<40x16xf32>
    %cst_53 = arith.constant 0.000000e+00 : f32
    %107 = vector.broadcast %cst_53 : f32 to vector<40x16xf32>
    %108 = arith.maximumf %106, %107 : vector<40x16xf32>
    %c0_54 = arith.constant 0 : index
    %c0_55 = arith.constant 0 : index
    %109 = vector.load %arg9[%c0_54, %c0_55] : memref<16x32xf32, #tpu.memory_space<vmem>>, vector<16x32xf32>
    %cst_56 = arith.constant dense<0.000000e+00> : vector<40x32xf32>
    %110 = tpu.matmul %108, %109, %cst_56 {dimension_numbers = #tpu.dot_dimension_numbers<[1], [0], [0], [1], [0, 0, 1, 1], [], []>} : vector<40x16xf32>, vector<16x32xf32>, vector<40x32xf32> -> vector<40x32xf32>
    %c0_57 = arith.constant 0 : index
    %c0_58 = arith.constant 0 : index
    %111 = vector.load %arg10[%c0_57, %c0_58] : memref<1x32xf32, #tpu.memory_space<vmem>>, vector<1x32xf32>
    %112 = vector.broadcast %111 : vector<1x32xf32> to vector<40x32xf32>
    %113 = arith.addf %110, %112 : vector<40x32xf32>
    %cst_59 = arith.constant 0.000000e+00 : f32
    %114 = vector.broadcast %cst_59 : f32 to vector<40x32xf32>
    %115 = arith.maximumf %113, %114 : vector<40x32xf32>
    %c0_60 = arith.constant 0 : index
    %c0_61 = arith.constant 0 : index
    %116 = vector.load %arg11[%c0_60, %c0_61] : memref<32x32xf32, #tpu.memory_space<vmem>>, vector<32x32xf32>
    %cst_62 = arith.constant dense<0.000000e+00> : vector<40x32xf32>
    %117 = tpu.matmul %115, %116, %cst_62 {dimension_numbers = #tpu.dot_dimension_numbers<[1], [0], [0], [1], [0, 0, 1, 1], [], []>} : vector<40x32xf32>, vector<32x32xf32>, vector<40x32xf32> -> vector<40x32xf32>
    %c0_63 = arith.constant 0 : index
    %c0_64 = arith.constant 0 : index
    %118 = vector.load %arg12[%c0_63, %c0_64] : memref<1x32xf32, #tpu.memory_space<vmem>>, vector<1x32xf32>
    %119 = vector.broadcast %118 : vector<1x32xf32> to vector<40x32xf32>
    %120 = arith.addf %117, %119 : vector<40x32xf32>
    %c0_65 = arith.constant 0 : index
    %c0_66 = arith.constant 0 : index
    %121 = vector.load %arg13[%c0_65, %c0_66] : memref<40x32xf32, #tpu.memory_space<vmem>>, vector<40x32xf32>
    tpu.vector_store %arg13[%c0_65, %c0_66], %120 {strides = array<i32>} : memref<40x32xf32, #tpu.memory_space<vmem>>, vector<40x32xf32>,
    return
  }
}

</mosaic_0001>

<llo_original>
// kernel: tile.0
$region0: #{tile.0}
  %s0 = inlined_call_operand.vmem [shape: s32[2,8], index: 0, kind: input, shape index: {}]
  %s1 = inlined_call_operand.vmem [shape: s32[16,1], index: 1, kind: output, shape index: {}]
  $region1: #{tile.0} parent=0
    #allocation0 [shape = 'u8[4096]{0}', space=vmem, size = 0x1000, scoped, tag = 'scoped mem for input reshape']
    %s3 = sshllo.u32 0, 2
    %v4 = vld [vmem:[%s0] sm:%s3]
    %5 = vst [vmem:[#allocation0] sm:%s3] %v4
    %v6 = vld [vmem:[#allocation0] sm:$0x3]
    %vm7 = vcmask 7168
    %8 = vst.msk [vmem:[%s1] ss:$8 sm:$0x3] %vm7, %v6
    %v9 = vld [vmem:[#allocation0] sm:$0x3]
    %10 = vrot.lane.b32.xlu0 %v9, 127
    %v11 = vpop.permute.xlu0 %10
    %vm12 = vcmask 7168
    %s13 = scalar_lea.vmem %s1, 1
    %14 = vst.msk [vmem:[%s13] ss:$8 sm:$0x3] %vm12, %v11
    %v15 = vld [vmem:[#allocation0] sm:$0x3]
    %16 = vrot.lane.b32.xlu0 %v15, 126
    %v17 = vpop.permute.xlu0 %16
    %vm18 = vcmask 7168
    %s19 = scalar_lea.vmem %s1, 2
    %20 = vst.msk [vmem:[%s19] ss:$8 sm:$0x3] %vm18, %v17
    %v21 = vld [vmem:[#allocation0] sm:$0x3]
    %22 = vrot.lane.b32.xlu0 %v21, 125
    %v23 = vpop.permute.xlu0 %22
    %vm24 = vcmask 7168
    %s25 = scalar_lea.vmem %s1, 3
    %26 = vst.msk [vmem:[%s25] ss:$8 sm:$0x3] %vm24, %v23
    %v27 = vld [vmem:[#allocation0] sm:$0x3]
    %28 = vrot.lane.b32.xlu0 %v27, 124
    %v29 = vpop.permute.xlu0 %28
    %vm30 = vcmask 7168
    %s31 = scalar_lea.vmem %s1, 4
    %32 = vst.msk [vmem:[%s31] ss:$8 sm:$0x3] %vm30, %v29
    %v33 = vld [vmem:[#allocation0] sm:$0x3]
    %34 = vrot.lane.b32.xlu0 %v33, 123
    %v35 = vpop.permute.xlu0 %34
    %vm36 = vcmask 7168
    %s37 = scalar_lea.vmem %s1, 5
    %38 = vst.msk [vmem:[%s37] ss:$8 sm:$0x3] %vm36, %v35
    %v39 = vld [vmem:[#allocation0] sm:$0x3]
    %40 = vrot.lane.b32.xlu0 %v39, 122
    %v41 = vpop.permute.xlu0 %40
    %vm42 = vcmask 7168
    %s43 = scalar_lea.vmem %s1, 6
    %44 = vst.msk [vmem:[%s43] ss:$8 sm:$0x3] %vm42, %v41
    %v45 = vld [vmem:[#allocation0] sm:$0x3]
    %46 = vrot.lane.b32.xlu0 %v45, 121
    %v47 = vpop.permute.xlu0 %46
    %vm48 = vcmask 7168
    %s49 = scalar_lea.vmem %s1, 7
    %50 = vst.msk [vmem:[%s49] ss:$8 sm:$0x3] %vm48, %v47

// kernel: tile.1
$region0: #{tile.1}
  %s0 = inlined_call_operand.vmem [shape: s32[2,20], index: 0, kind: input, shape index: {}]
  %s1 = inlined_call_operand.vmem [shape: s32[40,1], index: 1, kind: output, shape index: {}]
  $region1: #{tile.1} parent=0
    #allocation0 [shape = 'u8[4096]{0}', space=vmem, size = 0x1000, scoped, tag = 'scoped mem for input reshape']
    %s3 = sshllo.u32 0, 2
    %v4 = vld [vmem:[%s0] sm:%s3]
    %5 = vst [vmem:[#allocation0] sm:%s3] %v4
    %v6 = vld [vmem:[#allocation0] sm:$0x3]
    %vm7 = vcmask 7168
    %8 = vst.msk [vmem:[%s1] ss:$20 sm:$0x3] %vm7, %v6
    %v9 = vld [vmem:[#allocation0] sm:$0x3]
    %10 = vrot.lane.b32.xlu0 %v9, 127
    %v11 = vpop.permute.xlu0 %10
    %vm12 = vcmask 7168
    %s13 = scalar_lea.vmem %s1, 1
    %14 = vst.msk [vmem:[%s13] ss:$20 sm:$0x3] %vm12, %v11
    %v15 = vld [vmem:[#allocation0] sm:$0x3]
    %16 = vrot.lane.b32.xlu0 %v15, 126
    %v17 = vpop.permute.xlu0 %16
    %vm18 = vcmask 7168
    %s19 = scalar_lea.vmem %s1, 2
    %20 = vst.msk [vmem:[%s19] ss:$20 sm:$0x3] %vm18, %v17
    %v21 = vld [vmem:[#allocation0] sm:$0x3]
    %22 = vrot.lane.b32.xlu0 %v21, 125
    %v23 = vpop.permute.xlu0 %22
    %vm24 = vcmask 7168
    %s25 = scalar_lea.vmem %s1, 3
    %26 = vst.msk [vmem:[%s25] ss:$20 sm:$0x3] %vm24, %v23
    %v27 = vld [vmem:[#allocation0] sm:$0x3]
    %28 = vrot.lane.b32.xlu0 %v27, 124
    %v29 = vpop.permute.xlu0 %28
    %vm30 = vcmask 7168
    %s31 = scalar_lea.vmem %s1, 4
    %32 = vst.msk [vmem:[%s31] ss:$20 sm:$0x3] %vm30, %v29
    %v33 = vld [vmem:[#allocation0] sm:$0x3]
    %34 = vrot.lane.b32.xlu0 %v33, 123
    %v35 = vpop.permute.xlu0 %34
    %vm36 = vcmask 7168
    %s37 = scalar_lea.vmem %s1, 5
    %38 = vst.msk [vmem:[%s37] ss:$20 sm:$0x3] %vm36, %v35
    %v39 = vld [vmem:[#allocation0] sm:$0x3]
    %40 = vrot.lane.b32.xlu0 %v39, 122
    %v41 = vpop.permute.xlu0 %40
    %vm42 = vcmask 7168
    %s43 = scalar_lea.vmem %s1, 6
    %44 = vst.msk [vmem:[%s43] ss:$20 sm:$0x3] %vm42, %v41
    %v45 = vld [vmem:[#allocation0] sm:$0x3]
    %46 = vrot.lane.b32.xlu0 %v45, 121
    %v47 = vpop.permute.xlu0 %46
    %vm48 = vcmask 7168
    %s49 = scalar_lea.vmem %s1, 7
    %50 = vst.msk [vmem:[%s49] ss:$20 sm:$0x3] %vm48, %v47
    %v51 = vld [vmem:[#allocation0] sm:$0x3]
    %52 = vrot.lane.b32.xlu0 %v51, 120
    %v53 = vpop.permute.xlu0 %52
    %vm54 = vcmask 7168
    %s55 = scalar_lea.vmem %s1, 8
    %56 = vst.msk [vmem:[%s55] ss:$20 sm:$0x3] %vm54, %v53
    %v57 = vld [vmem:[#allocation0] sm:$0x3]
    %58 = vrot.lane.b32.xlu0 %v57, 119
    %v59 = vpop.permute.xlu0 %58
    %vm60 = vcmask 7168
    %s61 = scalar_lea.vmem %s1, 9
    %62 = vst.msk [vmem:[%s61] ss:$20 sm:$0x3] %vm60, %v59
    %v63 = vld [vmem:[#allocation0] sm:$0x3]
    %64 = vrot.lane.b32.xlu0 %v63, 118
    %v65 = vpop.permute.xlu0 %64
    %vm66 = vcmask 7168
    %s67 = scalar_lea.vmem %s1, 10
    %68 = vst.msk [vmem:[%s67] ss:$20 sm:$0x3] %vm66, %v65
    %v69 = vld [vmem:[#allocation0] sm:$0x3]
    %70 = vrot.lane.b32.xlu0 %v69, 117
    %v71 = vpop.permute.xlu0 %70
    %vm72 = vcmask 7168
    %s73 = scalar_lea.vmem %s1, 11
    %74 = vst.msk [vmem:[%s73] ss:$20 sm:$0x3] %vm72, %v71
    %s75 = scalar_lea.vmem [#allocation0], 1
    %s76 = smov 3
    %v77 = vld [vmem:[%s75] ss:$-1 sm:%s76]
    %78 = vrot.lane.b32.xlu0 %v77, 116
    %v79 = vpop.permute.xlu0 %78
    %vm80 = vcmask 7168
    %s81 = scalar_lea.vmem %s1, 32
    %82 = vst.msk [vmem:[%s81] ss:$-20 sm:$0x3] %vm80, %v79
    %s83 = scalar_lea.vmem [#allocation0], 1
    %s84 = smov 3
    %v85 = vld [vmem:[%s83] ss:$-1 sm:%s84]
    %86 = vrot.lane.b32.xlu0 %v85, 115
    %v87 = vpop.permute.xlu0 %86
    %vm88 = vcmask 7168
    %s89 = scalar_lea.vmem %s1, 33
    %90 = vst.msk [vmem:[%s89] ss:$-20 sm:$0x3] %vm88, %v87
    %s91 = scalar_lea.vmem [#allocation0], 1
    %s92 = smov 3
    %v93 = vld [vmem:[%s91] ss:$-1 sm:%s92]
    %94 = vrot.lane.b32.xlu0 %v93, 114
    %v95 = vpop.permute.xlu0 %94
    %vm96 = vcmask 7168
    %s97 = scalar_lea.vmem %s1, 34
    %98 = vst.msk [vmem:[%s97] ss:$-20 sm:$0x3] %vm96, %v95
    %s99 = scalar_lea.vmem [#allocation0], 1
    %s100 = smov 3
    %v101 = vld [vmem:[%s99] ss:$-1 sm:%s100]
    %102 = vrot.lane.b32.xlu0 %v101, 113
    %v103 = vpop.permute.xlu0 %102
    %vm104 = vcmask 7168
    %s105 = scalar_lea.vmem %s1, 35
    %106 = vst.msk [vmem:[%s105] ss:$-20 sm:$0x3] %vm104, %v103
    %s107 = scalar_lea.vmem [#allocation0], 1
    %s108 = smov 3
    %v109 = vld [vmem:[%s107] ss:$-1 sm:%s108]
    %110 = vrot.lane.b32.xlu0 %v109, 112
    %v111 = vpop.permute.xlu0 %110
    %vm112 = vcmask 7168
    %s113 = scalar_lea.vmem %s1, 36
    %114 = vst.msk [vmem:[%s113] ss:$-20 sm:$0x3] %vm112, %v111
    %s115 = scalar_lea.vmem [#allocation0], 1
    %s116 = smov 3
    %v117 = vld [vmem:[%s115] ss:$-1 sm:%s116]
    %118 = vrot.lane.b32.xlu0 %v117, 111
    %v119 = vpop.permute.xlu0 %118
    %vm120 = vcmask 7168
    %s121 = scalar_lea.vmem %s1, 37
    %122 = vst.msk [vmem:[%s121] ss:$-20 sm:$0x3] %vm120, %v119
    %s123 = scalar_lea.vmem [#allocation0], 1
    %s124 = smov 3
    %v125 = vld [vmem:[%s123] ss:$-1 sm:%s124]
    %126 = vrot.lane.b32.xlu0 %v125, 110
    %v127 = vpop.permute.xlu0 %126
    %vm128 = vcmask 7168
    %s129 = scalar_lea.vmem %s1, 38
    %130 = vst.msk [vmem:[%s129] ss:$-20 sm:$0x3] %vm128, %v127
    %s131 = scalar_lea.vmem [#allocation0], 1
    %s132 = smov 3
    %v133 = vld [vmem:[%s131] ss:$-1 sm:%s132]
    %134 = vrot.lane.b32.xlu0 %v133, 109
    %v135 = vpop.permute.xlu0 %134
    %vm136 = vcmask 7168
    %s137 = scalar_lea.vmem %s1, 39
    %138 = vst.msk [vmem:[%s137] ss:$-20 sm:$0x3] %vm136, %v135

// kernel: _lambda_.2
$region0: #{_lambda_.2}
  #allocation0 [shape = 'u32[]', space=smem, size = 0x4, offset = 0x4, fixed_abs, tag = 'smem constant byte address 0x4 - core index']
  #allocation1 [shape = 'u32[144,128]{1,0:T(1,128)}', space=vmem, size = 0x12000, scoped, tag = 'internal scratch']
  #allocation2 [shape = 'f32[20,16]{1,0:T(8,128)}', space=vmem, size = 0x3000, scoped, tag = 'scratch operand']
  %s0 = inlined_call_operand.vmem [shape: f32[16,16], index: 0, kind: input, shape index: {}]
  %s1 = inlined_call_operand.vmem [shape: s32[16,1], index: 1, kind: input, shape index: {}]
  %s2 = inlined_call_operand.hbm [shape: f32[16,32], index: 2, kind: input, shape index: {}]
  %s3 = inlined_call_operand.vmem [shape: f32[1,32], index: 3, kind: input, shape index: {}, may-alias: {3,5}]
  %s4 = inlined_call_operand.vmem [shape: f32[96,32], index: 4, kind: input, shape index: {}]
  %s5 = inlined_call_operand.vmem [shape: f32[1,32], index: 5, kind: input, shape index: {}, may-alias: {3,5}]
  %s6 = inlined_call_operand.vmem [shape: f32[2,96,8], index: 6, kind: input, shape index: {}]
  %s7 = inlined_call_operand.vmem [shape: f32[2,1,8], index: 7, kind: input, shape index: {}]
  %s8 = inlined_call_operand.hbm [shape: f32[2,8,32], index: 8, kind: input, shape index: {}]
  %s9 = inlined_call_operand.vmem [shape: f32[2,1,32], index: 9, kind: input, shape index: {}]
  %s10 = inlined_call_operand.vmem [shape: f32[32,16], index: 10, kind: input, shape index: {}]
  %s11 = inlined_call_operand.vmem [shape: f32[1,16], index: 11, kind: input, shape index: {}]
  %s12 = inlined_call_operand.vmem [shape: f32[32,16], index: 12, kind: input, shape index: {}]
  %s13 = inlined_call_operand.vmem [shape: f32[1,32], index: 13, kind: input, shape index: {}]
  %s14 = inlined_call_operand.vmem [shape: f32[20,16], index: 14, kind: output, shape index: {0}]
  %s15 = inlined_call_operand.vmem [shape: s32[20,1], index: 15, kind: output, shape index: {1}]
  %s16 = inlined_call_operand.vmem [shape: f32[1,32], index: 16, kind: output, shape index: {2}]
  %s17 = inlined_call_operand.hbm [shape: f32[1,1], index: 17, kind: output, shape index: {3}]
  %18 = xla_tuple %s14, %s15, %s16, %s17
  %s19 = sld [smem:[#allocation0]]
  $region98: #{_lambda_.2} parent=0
    _
  %s21 = ssub.s32 1, %s19
  %s22 = scalar_select 0, %s21, %s19
  $region1: #{_lambda_.2} parent=0
    #allocation3 [shape = 'u8[8192]{0}', space=vmem, size = 0x2000, scoped, tag = 'input window, operand 2, single buffered']
    #allocation4 [shape = 's32[1]{0}', space=sflag, size = 0x4, scoped, tag = 'scoped memory for _lambda_.2']
    #allocation5 [shape = 's32[1]{0}', space=sflag, size = 0x4, scoped, tag = 'scoped memory for _lambda_.2']
    #allocation6 [shape = 'u8[8192]{0}', space=vmem, size = 0x2000, scoped, tag = 'input window, operand 8, single buffered']
    #allocation7 [shape = 's32[1]{0}', space=sflag, size = 0x4, scoped, tag = 'scoped memory for _lambda_.2']
    #allocation8 [shape = 'u8[512]{0}', space=vmem, size = 0x400, scoped, tag = 'output window, operand 3, single buffered']
    %23 = vsyncpa [#allocation4], 0
    %24 = vsyncpa [#allocation7], 0
    %25 = vsyncpa [#allocation5], 0
    // Predicated region
    $region2: #{_lambda_.2} parent=1 // pred_check
      _
    $region3: #{_lambda_.2} parent=1 // pred_check_branch
      %27 = sbr.rel (0) target = $region5
    $region4: #{_lambda_.2} parent=1 // pred_region
      _
    $region5: #{_lambda_.2} parent=1 // pred_fallthru
      _
    // Predicated region
    $region6: #{_lambda_.2} parent=1 // pred_check
      _
    $region7: #{_lambda_.2} parent=1 // pred_check_branch
      %29 = sbr.rel (0) target = $region9
    $region8: #{_lambda_.2} parent=1 // pred_region
      _
    $region9: #{_lambda_.2} parent=1 // pred_fallthru
      _
    // Predicated region
    $region10: #{_lambda_.2} parent=1 // pred_check
      _
    $region11: #{_lambda_.2} parent=1 // pred_check_branch
      %31 = sbr.rel (0) target = $region13
    $region12: #{_lambda_.2} parent=1 // pred_region
      %s33 = ssub.s32 256, 256
      %34 = vsyncadd [#allocation4], %s33
      %s35 = sshll.u32 [#allocation3], 4
      %s36 = int_to_ptr.vmem [resolvable:$true] %s35
      %41 = dma.hbm_to_vmem [thread:$0]  %s2, 256, %s36, [#allocation4], 128, 128, 8
    $region13: #{_lambda_.2} parent=1 // pred_fallthru
      _
    // Predicated region
    $region14: #{_lambda_.2} parent=1 // pred_check
      _
    $region15: #{_lambda_.2} parent=1 // pred_check_branch
      %43 = sbr.rel (0) target = $region17
    $region16: #{_lambda_.2} parent=1 // pred_region
      _
    $region17: #{_lambda_.2} parent=1 // pred_fallthru
      _
    // Predicated region
    $region18: #{_lambda_.2} parent=1 // pred_check
      _
    $region19: #{_lambda_.2} parent=1 // pred_check_branch
      %45 = sbr.rel (0) target = $region21
    $region20: #{_lambda_.2} parent=1 // pred_region
      _
    $region21: #{_lambda_.2} parent=1 // pred_fallthru
      _
    // Predicated region
    $region22: #{_lambda_.2} parent=1 // pred_check
      _
    $region23: #{_lambda_.2} parent=1 // pred_check_branch
      %47 = sbr.rel (0) target = $region25
    $region24: #{_lambda_.2} parent=1 // pred_region
      _
    $region25: #{_lambda_.2} parent=1 // pred_fallthru
      _
    // Predicated region
    $region26: #{_lambda_.2} parent=1 // pred_check
      _
    $region27: #{_lambda_.2} parent=1 // pred_check_branch
      %49 = sbr.rel (0) target = $region29
    $region28: #{_lambda_.2} parent=1 // pred_region
      _
    $region29: #{_lambda_.2} parent=1 // pred_fallthru
      _
    // Predicated region
    $region30: #{_lambda_.2} parent=1 // pred_check
      _
    $region31: #{_lambda_.2} parent=1 // pred_check_branch
      %51 = sbr.rel (0) target = $region33
    $region32: #{_lambda_.2} parent=1 // pred_region
      _
    $region33: #{_lambda_.2} parent=1 // pred_fallthru
      _
    // Predicated region
    $region34: #{_lambda_.2} parent=1 // pred_check
      _
    $region35: #{_lambda_.2} parent=1 // pred_check_branch
      %53 = sbr.rel (0) target = $region37
    $region36: #{_lambda_.2} parent=1 // pred_region
      %s55 = ssub.s32 256, 256
      %56 = vsyncadd [#allocation7], %s55
      %s57 = sshll.u32 [#allocation6], 4
      %s58 = int_to_ptr.vmem [resolvable:$true] %s57
      %63 = dma.hbm_to_vmem [thread:$0]  %s8, 256, %s58, [#allocation7], 128, 128, 8
    $region37: #{_lambda_.2} parent=1 // pred_fallthru
      _
    // Predicated region
    $region38: #{_lambda_.2} parent=1 // pred_check
      _
    $region39: #{_lambda_.2} parent=1 // pred_check_branch
      %65 = sbr.rel (0) target = $region41
    $region40: #{_lambda_.2} parent=1 // pred_region
      _
    $region41: #{_lambda_.2} parent=1 // pred_fallthru
      _
    // Predicated region
    $region42: #{_lambda_.2} parent=1 // pred_check
      _
    $region43: #{_lambda_.2} parent=1 // pred_check_branch
      %67 = sbr.rel (0) target = $region45
    $region44: #{_lambda_.2} parent=1 // pred_region
      _
    $region45: #{_lambda_.2} parent=1 // pred_fallthru
      _
    // Predicated region
    $region46: #{_lambda_.2} parent=1 // pred_check
      _
    $region47: #{_lambda_.2} parent=1 // pred_check_branch
      %69 = sbr.rel (0) target = $region49
    $region48: #{_lambda_.2} parent=1 // pred_region
      _
    $region49: #{_lambda_.2} parent=1 // pred_fallthru
      _
    // Predicated region
    $region50: #{_lambda_.2} parent=1 // pred_check
      _
    $region51: #{_lambda_.2} parent=1 // pred_check_branch
      %71 = sbr.rel (0) target = $region53
    $region52: #{_lambda_.2} parent=1 // pred_region
      _
    $region53: #{_lambda_.2} parent=1 // pred_fallthru
      _
    // Predicated region
    $region54: #{_lambda_.2} parent=1 // pred_check
      _
    $region55: #{_lambda_.2} parent=1 // pred_check_branch
      %73 = sbr.rel (0) target = $region57
    $region56: #{_lambda_.2} parent=1 // pred_region
      _
    $region57: #{_lambda_.2} parent=1 // pred_fallthru
      _
    // Predicated region
    $region58: #{_lambda_.2} parent=1 // pred_check
      _
    $region59: #{_lambda_.2} parent=1 // pred_check_branch
      %75 = sbr.rel (0) target = $region61
    $region60: #{_lambda_.2} parent=1 // pred_region
      %76 = dma.done [#allocation4], 256
    $region61: #{_lambda_.2} parent=1 // pred_fallthru
      _
    // Predicated region
    $region62: #{_lambda_.2} parent=1 // pred_check
      _
    $region63: #{_lambda_.2} parent=1 // pred_check_branch
      %78 = sbr.rel (0) target = $region65
    $region64: #{_lambda_.2} parent=1 // pred_region
      %79 = dma.done [#allocation7], 256
    $region65: #{_lambda_.2} parent=1 // pred_fallthru
      _
    %v80 = vld [vmem:[%s1] sm:$0xff]
    %v81 = vld [vmem:[%s1 + $0x8] sm:$0xff]
    %v82 = vld [vmem:[%s0] sm:$0xff]
    %v83 = vld [vmem:[%s0 + $0x8] sm:$0xff]
    %v84 = vld [vmem:[#allocation3] sm:$0xff]
    %v85 = vld [vmem:[#allocation3 + $0x8] sm:$0xff]
    %v86 = vld [vmem:[%s3] sm:$0x1]
    %v88 = vlaneseq
    %v89 = vshrl.u32 %v88, 7
    %v90 = vsub.s32 0, %v89
    %v91 = vrot.slane %v86, %v90
    %vm93 = vcmask 130048
    %v95 = vsel %vm93, %v82, 0
    %v98 = vsel %vm93, %v83, 0
    %100 = vmatprep.subr.mxu0 0.0
    %101 = vmatpush1.msra.mxu0 %v84
    %102 = vmatprep.subr.mxu0 0.0
    %103 = vmatpush1.msra.mxu0 %v85
    %104 = vmatprep.subr.mxu0 0.0
    %105 = vmatpush1.msra.mxu0 0.0
    %106 = vmatprep.subr.mxu0 0.0
    %107 = vmatpush1.msra.mxu0 0.0
    %108 = vmatprep.subr.mxu0 0.0
    %109 = vmatpush1.msra.mxu0 0.0
    %110 = vmatprep.subr.mxu0 0.0
    %111 = vmatpush1.msra.mxu0 0.0
    %112 = vmatprep.subr.mxu0 0.0
    %113 = vmatpush1.msra.mxu0 0.0
    %114 = vmatprep.subr.mxu0 0.0
    %115 = vmatpush1.msra.mxu0 0.0
    %116 = vmatprep.subr.mxu0 0.0
    %117 = vmatpush1.msra.mxu0 0.0
    %118 = vmatprep.subr.mxu0 0.0
    %119 = vmatpush1.msra.mxu0 0.0
    %120 = vmatprep.subr.mxu0 0.0
    %121 = vmatpush1.msra.mxu0 0.0
    %122 = vmatprep.subr.mxu0 0.0
    %123 = vmatpush1.msra.mxu0 0.0
    %124 = vmatprep.subr.mxu0 0.0
    %125 = vmatpush1.msra.mxu0 0.0
    %126 = vmatprep.subr.mxu0 0.0
    %127 = vmatpush1.msra.mxu0 0.0
    %128 = vmatprep.subr.mxu0 0.0
    %129 = vmatpush1.msra.mxu0 0.0
    %130 = vmatprep.subr.mxu0 0.0
    %131 = vmatpush1.msra.mxu0 0.0
    %132 = vmatprep.subr.mxu0 0.0
    %133 = vmatpush1.msra.mxu0 0.0
    %134 = vmatprep.subr.mxu0 0.0
    %135 = vmatpush1.msra.mxu0 0.0
    %136 = vmatprep.subr.mxu0 0.0
    %137 = vmatpush1.msra.mxu0 0.0
    %138 = vmatprep.subr.mxu0 0.0
    %139 = vmatpush1.msra.mxu0 0.0
    %140 = vmatprep.subr.mxu0 0.0
    %141 = vmatpush1.msra.mxu0 0.0
    %142 = vmatprep.subr.mxu0 0.0
    %143 = vmatpush1.msra.mxu0 0.0
    %144 = vmatprep.subr.mxu0 0.0
    %145 = vmatpush1.msra.mxu0 0.0
    %146 = vmatprep.subr.mxu0 0.0
    %147 = vmatpush1.msra.mxu0 0.0
    %148 = vmatprep.subr.mxu0 0.0
    %149 = vmatpush1.msra.mxu0 0.0
    %150 = vmatprep.subr.mxu0 0.0
    %151 = vmatpush1.msra.mxu0 0.0
    %152 = vmatprep.subr.mxu0 0.0
    %153 = vmatpush1.msra.mxu0 0.0
    %154 = vmatprep.subr.mxu0 0.0
    %155 = vmatpush1.msra.mxu0 0.0
    %156 = vmatprep.subr.mxu0 0.0
    %157 = vmatpush1.msra.mxu0 0.0
    %158 = vmatprep.subr.mxu0 0.0
    %159 = vmatpush1.msra.mxu0 0.0
    %160 = vmatprep.subr.mxu0 0.0
    %161 = vmatpush1.msra.mxu0 0.0
    %162 = vmatprep.subr.mxu0 0.0
    %163 = vmatpush1.msra.mxu0 0.0
    %164 = vmatprep.mubr.f32.mxu0 0.0
    %165 = vmatmul.mubr.f32.gmra.mrb[0].mxu0 %v95
    %v166 = vpop.f32.mrb[0].mxu0
    %v167 = vadd.f32 %v91, %v166
    %v168 = vpop.f32.mrb[0].mxu0
    %169 = vmatprep.mubr.f32.mxu0 0.0
    %170 = vmatmul.mubr.f32.gmra.mrb[0].mxu0 %v98
    %v171 = vpop.f32.mrb[0].mxu0
    %v172 = vadd.f32 %v91, %v171
    %v173 = vpop.f32.mrb[0].mxu0
    %174 = vdwg.mxu0
    %v175 = vmax.f32 %v167, 0.0
    %v176 = vmax.f32 %v172, 0.0
    %v177 = vld [vmem:[%s4] sm:$0xff]
    %v178 = vld [vmem:[%s4 + $0x8] sm:$0xff]
    %v179 = vld [vmem:[%s4 + $0x10] sm:$0xff]
    %v180 = vld [vmem:[%s4 + $0x18] sm:$0xff]
    %v181 = vld [vmem:[%s4 + $0x20] sm:$0xff]
    %v182 = vld [vmem:[%s4 + $0x28] sm:$0xff]
    %v183 = vld [vmem:[%s4 + $0x30] sm:$0xff]
    %v184 = vld [vmem:[%s4 + $0x38] sm:$0xff]
    %v185 = vld [vmem:[%s4 + $0x40] sm:$0xff]
    %v186 = vld [vmem:[%s4 + $0x48] sm:$0xff]
    %v187 = vld [vmem:[%s4 + $0x50] sm:$0xff]
    %v188 = vld [vmem:[%s4 + $0x58] sm:$0xff]
    %v189 = vld [vmem:[%s5] sm:$0x1]
    %vm190 = vcmp.ge.s32.totalorder %v80, 1
    %vm191 = vcmp.ge.s32.totalorder %v81, 1
    %v192 = vrot.slane %v175, 7
    %v193 = vrot.slane %v176, 7
    %v194 = vlaneseq
    %v195 = vshrl.u32 %v194, 7
    %vm196 = vcmp.lt.s32.totalorder %v195, 1
    %v197 = vsel %vm196, %v192, %v193
    %v198 = vsel %vm196, %v193, %v192
    %v199 = vsel %vm190, 1, 0
    %v200 = vsel %vm191, 1, 0
    %201 = vset.pattern.permute.xlu0 0
    %202 = vperm.xlu0 %201, %v199
    %v203 = vpop.permute.xlu0 %202
    %204 = vset.pattern.permute.xlu0 0
    %205 = vperm.xlu0 %204, %v200
    %v206 = vpop.permute.xlu0 %205
    %vm207 = vcmp.eq.s32.totalorder %v203, 1
    %vm208 = vcmp.eq.s32.totalorder %v206, 1
    %v209 = vsel %vm207, %v198, 0.0
    %v210 = vsel %vm208, %v197, 0.0
    %vm211 = vcmp.le.s32.totalorder %v80, 6
    %vm212 = vcmp.le.s32.totalorder %v81, 6
    %v213 = vrot.slane %v175, 1
    %v214 = vrot.slane %v176, 1
    %vm215 = vcmp.lt.s32.totalorder %v195, 7
    %v216 = vsel %vm215, %v213, %v214
    %v217 = vsel %vm215, %v214, %v213
    %v218 = vsel %vm211, 1, 0
    %v219 = vsel %vm212, 1, 0
    %220 = vset.pattern.permute.xlu0 0
    %221 = vperm.xlu0 %220, %v218
    %v222 = vpop.permute.xlu0 %221
    %223 = vset.pattern.permute.xlu0 0
    %224 = vperm.xlu0 %223, %v219
    %v225 = vpop.permute.xlu0 %224
    %vm226 = vcmp.eq.s32.totalorder %v222, 1
    %vm227 = vcmp.eq.s32.totalorder %v225, 1
    %v228 = vsel %vm226, %v216, 0.0
    %v229 = vsel %vm227, %v217, 0.0
    %232 = vrot.lane.b32.xlu0 %v175, 32
    %v233 = vpop.permute.xlu0 %232
    %234 = vrot.lane.b32.xlu0 %v176, 32
    %v235 = vpop.permute.xlu0 %234
    %240 = vrot.lane.b32.xlu0 %v228, 64
    %v241 = vpop.permute.xlu0 %240
    %242 = vrot.lane.b32.xlu0 %v229, 64
    %v243 = vpop.permute.xlu0 %242
    %vm246 = vcmask 261120
    %v247 = vsel %vm246, %v209, %v233
    %v248 = vsel %vm246, %v210, %v235
    %vm249 = vcmask 523264
    %v250 = vsel %vm249, %v247, %v241
    %v251 = vsel %vm249, %v248, %v243
    %v253 = vlaneseq
    %v254 = vshrl.u32 %v253, 7
    %v255 = vsub.s32 0, %v254
    %v256 = vrot.slane %v189, %v255
    %vm258 = vcmask 785408
    %v260 = vsel %vm258, %v250, 0
    %v263 = vsel %vm258, %v251, 0
    %265 = vmatprep.subr.mxu0 0.0
    %266 = vmatpush1.msra.mxu0 %v177
    %267 = vmatprep.subr.mxu0 0.0
    %268 = vmatpush1.msra.mxu0 %v178
    %269 = vmatprep.subr.mxu0 0.0
    %270 = vmatpush1.msra.mxu0 %v179
    %271 = vmatprep.subr.mxu0 0.0
    %272 = vmatpush1.msra.mxu0 %v180
    %273 = vmatprep.subr.mxu0 0.0
    %274 = vmatpush1.msra.mxu0 %v181
    %275 = vmatprep.subr.mxu0 0.0
    %276 = vmatpush1.msra.mxu0 %v182
    %277 = vmatprep.subr.mxu0 0.0
    %278 = vmatpush1.msra.mxu0 %v183
    %279 = vmatprep.subr.mxu0 0.0
    %280 = vmatpush1.msra.mxu0 %v184
    %281 = vmatprep.subr.mxu0 0.0
    %282 = vmatpush1.msra.mxu0 %v185
    %283 = vmatprep.subr.mxu0 0.0
    %284 = vmatpush1.msra.mxu0 %v186
    %285 = vmatprep.subr.mxu0 0.0
    %286 = vmatpush1.msra.mxu0 %v187
    %287 = vmatprep.subr.mxu0 0.0
    %288 = vmatpush1.msra.mxu0 %v188
    %289 = vmatprep.subr.mxu0 0.0
    %290 = vmatpush1.msra.mxu0 0.0
    %291 = vmatprep.subr.mxu0 0.0
    %292 = vmatpush1.msra.mxu0 0.0
    %293 = vmatprep.subr.mxu0 0.0
    %294 = vmatpush1.msra.mxu0 0.0
    %295 = vmatprep.subr.mxu0 0.0
    %296 = vmatpush1.msra.mxu0 0.0
    %297 = vmatprep.subr.mxu0 0.0
    %298 = vmatpush1.msra.mxu0 0.0
    %299 = vmatprep.subr.mxu0 0.0
    %300 = vmatpush1.msra.mxu0 0.0
    %301 = vmatprep.subr.mxu0 0.0
    %302 = vmatpush1.msra.mxu0 0.0
    %303 = vmatprep.subr.mxu0 0.0
    %304 = vmatpush1.msra.mxu0 0.0
    %305 = vmatprep.subr.mxu0 0.0
    %306 = vmatpush1.msra.mxu0 0.0
    %307 = vmatprep.subr.mxu0 0.0
    %308 = vmatpush1.msra.mxu0 0.0
    %309 = vmatprep.subr.mxu0 0.0
    %310 = vmatpush1.msra.mxu0 0.0
    %311 = vmatprep.subr.mxu0 0.0
    %312 = vmatpush1.msra.mxu0 0.0
    %313 = vmatprep.subr.mxu0 0.0
    %314 = vmatpush1.msra.mxu0 0.0
    %315 = vmatprep.subr.mxu0 0.0
    %316 = vmatpush1.msra.mxu0 0.0
    %317 = vmatprep.subr.mxu0 0.0
    %318 = vmatpush1.msra.mxu0 0.0
    %319 = vmatprep.subr.mxu0 0.0
    %320 = vmatpush1.msra.mxu0 0.0
    %321 = vmatprep.subr.mxu0 0.0
    %322 = vmatpush1.msra.mxu0 0.0
    %323 = vmatprep.subr.mxu0 0.0
    %324 = vmatpush1.msra.mxu0 0.0
    %325 = vmatprep.subr.mxu0 0.0
    %326 = vmatpush1.msra.mxu0 0.0
    %327 = vmatprep.subr.mxu0 0.0
    %328 = vmatpush1.msra.mxu0 0.0
    %329 = vmatprep.mubr.f32.mxu0 0.0
    %330 = vmatmul.mubr.f32.gmra.mrb[0].mxu0 %v260
    %v331 = vpop.f32.mrb[0].mxu0
    %v332 = vadd.f32 %v256, %v331
    %v333 = vpop.f32.mrb[0].mxu0
    %334 = vmatprep.mubr.f32.mxu0 0.0
    %335 = vmatmul.mubr.f32.gmra.mrb[0].mxu0 %v263
    %v336 = vpop.f32.mrb[0].mxu0
    %v337 = vadd.f32 %v256, %v336
    %v338 = vpop.f32.mrb[0].mxu0
    %339 = vdwg.mxu0
    %v340 = vmax.f32 %v332, 0.0
    %v341 = vmax.f32 %v337, 0.0
    %v342 = vmax.f32 %v340, 0.0
    %v343 = vmax.f32 %v341, 0.0
    %v344 = vld [vmem:[%s6] sm:$0xff]
    %v345 = vld [vmem:[%s6 + $0x8] sm:$0xff]
    %v346 = vld [vmem:[%s6 + $0x10] sm:$0xff]
    %v347 = vld [vmem:[%s6 + $0x18] sm:$0xff]
    %v348 = vld [vmem:[%s6 + $0x20] sm:$0xff]
    %v349 = vld [vmem:[%s6 + $0x28] sm:$0xff]
    %v350 = vld [vmem:[%s6 + $0x30] sm:$0xff]
    %v351 = vld [vmem:[%s6 + $0x38] sm:$0xff]
    %v352 = vld [vmem:[%s6 + $0x40] sm:$0xff]
    %v353 = vld [vmem:[%s6 + $0x48] sm:$0xff]
    %v354 = vld [vmem:[%s6 + $0x50] sm:$0xff]
    %v355 = vld [vmem:[%s6 + $0x58] sm:$0xff]
    %v356 = vld [vmem:[%s7] sm:$0x1]
    %v357 = vrot.slane %v342, 7
    %v358 = vrot.slane %v343, 7
    %v359 = vsel %vm196, %v357, %v358
    %v360 = vsel %vm196, %v358, %v357
    %v361 = vsel %vm207, %v360, 0.0
    %v362 = vsel %vm208, %v359, 0.0
    %v363 = vrot.slane %v342, 1
    %v364 = vrot.slane %v343, 1
    %v365 = vsel %vm215, %v363, %v364
    %v366 = vsel %vm215, %v364, %v363
    %v367 = vsel %vm226, %v365, 0.0
    %v368 = vsel %vm227, %v366, 0.0
    %371 = vrot.lane.b32.xlu0 %v342, 32
    %v372 = vpop.permute.xlu0 %371
    %373 = vrot.lane.b32.xlu0 %v343, 32
    %v374 = vpop.permute.xlu0 %373
    %379 = vrot.lane.b32.xlu0 %v367, 64
    %v380 = vpop.permute.xlu0 %379
    %381 = vrot.lane.b32.xlu0 %v368, 64
    %v382 = vpop.permute.xlu0 %381
    %v385 = vsel %vm246, %v361, %v372
    %v386 = vsel %vm246, %v362, %v374
    %v387 = vsel %vm249, %v385, %v380
    %v388 = vsel %vm249, %v386, %v382
    %v390 = vlaneseq
    %v391 = vshrl.u32 %v390, 7
    %v392 = vsub.s32 0, %v391
    %v393 = vrot.slane %v356, %v392
    %v396 = vsel %vm258, %v387, 0
    %v399 = vsel %vm258, %v388, 0
    %401 = vmatprep.subr.mxu0 0.0
    %402 = vmatpush1.msra.mxu0 %v344
    %403 = vmatprep.subr.mxu0 0.0
    %404 = vmatpush1.msra.mxu0 %v345
    %405 = vmatprep.subr.mxu0 0.0
    %406 = vmatpush1.msra.mxu0 %v346
    %407 = vmatprep.subr.mxu0 0.0
    %408 = vmatpush1.msra.mxu0 %v347
    %409 = vmatprep.subr.mxu0 0.0
    %410 = vmatpush1.msra.mxu0 %v348
    %411 = vmatprep.subr.mxu0 0.0
    %412 = vmatpush1.msra.mxu0 %v349
    %413 = vmatprep.subr.mxu0 0.0
    %414 = vmatpush1.msra.mxu0 %v350
    %415 = vmatprep.subr.mxu0 0.0
    %416 = vmatpush1.msra.mxu0 %v351
    %417 = vmatprep.subr.mxu0 0.0
    %418 = vmatpush1.msra.mxu0 %v352
    %419 = vmatprep.subr.mxu0 0.0
    %420 = vmatpush1.msra.mxu0 %v353
    %421 = vmatprep.subr.mxu0 0.0
    %422 = vmatpush1.msra.mxu0 %v354
    %423 = vmatprep.subr.mxu0 0.0
    %424 = vmatpush1.msra.mxu0 %v355
    %425 = vmatprep.subr.mxu0 0.0
    %426 = vmatpush1.msra.mxu0 0.0
    %427 = vmatprep.subr.mxu0 0.0
    %428 = vmatpush1.msra.mxu0 0.0
    %429 = vmatprep.subr.mxu0 0.0
    %430 = vmatpush1.msra.mxu0 0.0
    %431 = vmatprep.subr.mxu0 0.0
    %432 = vmatpush1.msra.mxu0 0.0
    %433 = vmatprep.subr.mxu0 0.0
    %434 = vmatpush1.msra.mxu0 0.0
    %435 = vmatprep.subr.mxu0 0.0
    %436 = vmatpush1.msra.mxu0 0.0
    %437 = vmatprep.subr.mxu0 0.0
    %438 = vmatpush1.msra.mxu0 0.0
    %439 = vmatprep.subr.mxu0 0.0
    %440 = vmatpush1.msra.mxu0 0.0
    %441 = vmatprep.subr.mxu0 0.0
    %442 = vmatpush1.msra.mxu0 0.0
    %443 = vmatprep.subr.mxu0 0.0
    %444 = vmatpush1.msra.mxu0 0.0
    %445 = vmatprep.subr.mxu0 0.0
    %446 = vmatpush1.msra.mxu0 0.0
    %447 = vmatprep.subr.mxu0 0.0
    %448 = vmatpush1.msra.mxu0 0.0
    %449 = vmatprep.subr.mxu0 0.0
    %450 = vmatpush1.msra.mxu0 0.0
    %451 = vmatprep.subr.mxu0 0.0
    %452 = vmatpush1.msra.mxu0 0.0
    %453 = vmatprep.subr.mxu0 0.0
    %454 = vmatpush1.msra.mxu0 0.0
    %455 = vmatprep.subr.mxu0 0.0
    %456 = vmatpush1.msra.mxu0 0.0
    %457 = vmatprep.subr.mxu0 0.0
    %458 = vmatpush1.msra.mxu0 0.0
    %459 = vmatprep.subr.mxu0 0.0
    %460 = vmatpush1.msra.mxu0 0.0
    %461 = vmatprep.subr.mxu0 0.0
    %462 = vmatpush1.msra.mxu0 0.0
    %463 = vmatprep.subr.mxu0 0.0
    %464 = vmatpush1.msra.mxu0 0.0
    %465 = vmatprep.mubr.f32.mxu0 0.0
    %466 = vmatmul.mubr.f32.gmra.mrb[0].mxu0 %v396
    %v467 = vpop.f32.mrb[0].mxu0
    %v468 = vadd.f32 %v393, %v467
    %v469 = vpop.f32.mrb[0].mxu0
    %470 = vmatprep.mubr.f32.mxu0 0.0
    %471 = vmatmul.mubr.f32.gmra.mrb[0].mxu0 %v399
    %v472 = vpop.f32.mrb[0].mxu0
    %v473 = vadd.f32 %v393, %v472
    %v474 = vpop.f32.mrb[0].mxu0
    %475 = vdwg.mxu0
    %v476 = vmax.f32 %v468, 0.0
    %v477 = vmax.f32 %v473, 0.0
    %v478 = vld [vmem:[#allocation6] sm:$0xff]
    %v479 = vld [vmem:[%s9] sm:$0x1]
    %v481 = vlaneseq
    %v482 = vshrl.u32 %v481, 7
    %v483 = vsub.s32 0, %v482
    %v484 = vrot.slane %v479, %v483
    %vm486 = vcmask 64512
    %v488 = vsel %vm486, %v476, 0
    %v491 = vsel %vm486, %v477, 0
    %493 = vmatprep.subr.mxu0 0.0
    %494 = vmatpush1.msra.mxu0 %v478
    %495 = vmatprep.subr.mxu0 0.0
    %496 = vmatpush1.msra.mxu0 0.0
    %497 = vmatprep.subr.mxu0 0.0
    %498 = vmatpush1.msra.mxu0 0.0
    %499 = vmatprep.subr.mxu0 0.0
    %500 = vmatpush1.msra.mxu0 0.0
    %501 = vmatprep.subr.mxu0 0.0
    %502 = vmatpush1.msra.mxu0 0.0
    %503 = vmatprep.subr.mxu0 0.0
    %504 = vmatpush1.msra.mxu0 0.0
    %505 = vmatprep.subr.mxu0 0.0
    %506 = vmatpush1.msra.mxu0 0.0
    %507 = vmatprep.subr.mxu0 0.0
    %508 = vmatpush1.msra.mxu0 0.0
    %509 = vmatprep.subr.mxu0 0.0
    %510 = vmatpush1.msra.mxu0 0.0
    %511 = vmatprep.subr.mxu0 0.0
    %512 = vmatpush1.msra.mxu0 0.0
    %513 = vmatprep.subr.mxu0 0.0
    %514 = vmatpush1.msra.mxu0 0.0
    %515 = vmatprep.subr.mxu0 0.0
    %516 = vmatpush1.msra.mxu0 0.0
    %517 = vmatprep.subr.mxu0 0.0
    %518 = vmatpush1.msra.mxu0 0.0
    %519 = vmatprep.subr.mxu0 0.0
    %520 = vmatpush1.msra.mxu0 0.0
    %521 = vmatprep.subr.mxu0 0.0
    %522 = vmatpush1.msra.mxu0 0.0
    %523 = vmatprep.subr.mxu0 0.0
    %524 = vmatpush1.msra.mxu0 0.0
    %525 = vmatprep.subr.mxu0 0.0
    %526 = vmatpush1.msra.mxu0 0.0
    %527 = vmatprep.subr.mxu0 0.0
    %528 = vmatpush1.msra.mxu0 0.0
    %529 = vmatprep.subr.mxu0 0.0
    %530 = vmatpush1.msra.mxu0 0.0
    %531 = vmatprep.subr.mxu0 0.0
    %532 = vmatpush1.msra.mxu0 0.0
    %533 = vmatprep.subr.mxu0 0.0
    %534 = vmatpush1.msra.mxu0 0.0
    %535 = vmatprep.subr.mxu0 0.0
    %536 = vmatpush1.msra.mxu0 0.0
    %537 = vmatprep.subr.mxu0 0.0
    %538 = vmatpush1.msra.mxu0 0.0
    %539 = vmatprep.subr.mxu0 0.0
    %540 = vmatpush1.msra.mxu0 0.0
    %541 = vmatprep.subr.mxu0 0.0
    %542 = vmatpush1.msra.mxu0 0.0
    %543 = vmatprep.subr.mxu0 0.0
    %544 = vmatpush1.msra.mxu0 0.0
    %545 = vmatprep.subr.mxu0 0.0
    %546 = vmatpush1.msra.mxu0 0.0
    %547 = vmatprep.subr.mxu0 0.0
    %548 = vmatpush1.msra.mxu0 0.0
    %549 = vmatprep.subr.mxu0 0.0
    %550 = vmatpush1.msra.mxu0 0.0
    %551 = vmatprep.subr.mxu0 0.0
    %552 = vmatpush1.msra.mxu0 0.0
    %553 = vmatprep.subr.mxu0 0.0
    %554 = vmatpush1.msra.mxu0 0.0
    %555 = vmatprep.subr.mxu0 0.0
    %556 = vmatpush1.msra.mxu0 0.0
    %557 = vmatprep.mubr.f32.mxu0 0.0
    %558 = vmatmul.mubr.f32.gmra.mrb[0].mxu0 %v488
    %v559 = vpop.f32.mrb[0].mxu0
    %v560 = vadd.f32 %v484, %v559
    %v561 = vpop.f32.mrb[0].mxu0
    %562 = vmatprep.mubr.f32.mxu0 0.0
    %563 = vmatmul.mubr.f32.gmra.mrb[0].mxu0 %v491
    %v564 = vpop.f32.mrb[0].mxu0
    %v565 = vadd.f32 %v484, %v564
    %v566 = vpop.f32.mrb[0].mxu0
    %567 = vdwg.mxu0
    %v568 = vadd.f32 %v340, %v560
    %v569 = vadd.f32 %v341, %v565
    %v570 = vmax.f32 %v568, 0.0
    %v571 = vmax.f32 %v569, 0.0
    %s572 = scalar_lea.vmem %s6, 96
    %v573 = vld [vmem:[%s572] sm:$0xff]
    %v574 = vld [vmem:[%s572 + $0x8] sm:$0xff]
    %v575 = vld [vmem:[%s572 + $0x10] sm:$0xff]
    %v576 = vld [vmem:[%s572 + $0x18] sm:$0xff]
    %v577 = vld [vmem:[%s572 + $0x20] sm:$0xff]
    %v578 = vld [vmem:[%s572 + $0x28] sm:$0xff]
    %v579 = vld [vmem:[%s572 + $0x30] sm:$0xff]
    %v580 = vld [vmem:[%s572 + $0x38] sm:$0xff]
    %v581 = vld [vmem:[%s572 + $0x40] sm:$0xff]
    %v582 = vld [vmem:[%s572 + $0x48] sm:$0xff]
    %v583 = vld [vmem:[%s572 + $0x50] sm:$0xff]
    %v584 = vld [vmem:[%s572 + $0x58] sm:$0xff]
    %s585 = scalar_lea.vmem %s7, 1
    %v586 = vld [vmem:[%s585] sm:$0x1]
    %v587 = vrot.slane %v570, 7
    %v588 = vrot.slane %v571, 7
    %v589 = vsel %vm196, %v587, %v588
    %v590 = vsel %vm196, %v588, %v587
    %v591 = vsel %vm207, %v590, 0.0
    %v592 = vsel %vm208, %v589, 0.0
    %v593 = vrot.slane %v570, 1
    %v594 = vrot.slane %v571, 1
    %v595 = vsel %vm215, %v593, %v594
    %v596 = vsel %vm215, %v594, %v593
    %v597 = vsel %vm226, %v595, 0.0
    %v598 = vsel %vm227, %v596, 0.0
    %601 = vrot.lane.b32.xlu0 %v570, 32
    %v602 = vpop.permute.xlu0 %601
    %603 = vrot.lane.b32.xlu0 %v571, 32
    %v604 = vpop.permute.xlu0 %603
    %609 = vrot.lane.b32.xlu0 %v597, 64
    %v610 = vpop.permute.xlu0 %609
    %611 = vrot.lane.b32.xlu0 %v598, 64
    %v612 = vpop.permute.xlu0 %611
    %v615 = vsel %vm246, %v591, %v602
    %v616 = vsel %vm246, %v592, %v604
    %v617 = vsel %vm249, %v615, %v610
    %v618 = vsel %vm249, %v616, %v612
    %v620 = vlaneseq
    %v621 = vshrl.u32 %v620, 7
    %v622 = vsub.s32 0, %v621
    %v623 = vrot.slane %v586, %v622
    %v626 = vsel %vm258, %v617, 0
    %v629 = vsel %vm258, %v618, 0
    %631 = vmatprep.subr.mxu0 0.0
    %632 = vmatpush1.msra.mxu0 %v573
    %633 = vmatprep.subr.mxu0 0.0
    %634 = vmatpush1.msra.mxu0 %v574
    %635 = vmatprep.subr.mxu0 0.0
    %636 = vmatpush1.msra.mxu0 %v575
    %637 = vmatprep.subr.mxu0 0.0
    %638 = vmatpush1.msra.mxu0 %v576
    %639 = vmatprep.subr.mxu0 0.0
    %640 = vmatpush1.msra.mxu0 %v577
    %641 = vmatprep.subr.mxu0 0.0
    %642 = vmatpush1.msra.mxu0 %v578
    %643 = vmatprep.subr.mxu0 0.0
    %644 = vmatpush1.msra.mxu0 %v579
    %645 = vmatprep.subr.mxu0 0.0
    %646 = vmatpush1.msra.mxu0 %v580
    %647 = vmatprep.subr.mxu0 0.0
    %648 = vmatpush1.msra.mxu0 %v581
    %649 = vmatprep.subr.mxu0 0.0
    %650 = vmatpush1.msra.mxu0 %v582
    %651 = vmatprep.subr.mxu0 0.0
    %652 = vmatpush1.msra.mxu0 %v583
    %653 = vmatprep.subr.mxu0 0.0
    %654 = vmatpush1.msra.mxu0 %v584
    %655 = vmatprep.subr.mxu0 0.0
    %656 = vmatpush1.msra.mxu0 0.0
    %657 = vmatprep.subr.mxu0 0.0
    %658 = vmatpush1.msra.mxu0 0.0
    %659 = vmatprep.subr.mxu0 0.0
    %660 = vmatpush1.msra.mxu0 0.0
    %661 = vmatprep.subr.mxu0 0.0
    %662 = vmatpush1.msra.mxu0 0.0
    %663 = vmatprep.subr.mxu0 0.0
    %664 = vmatpush1.msra.mxu0 0.0
    %665 = vmatprep.subr.mxu0 0.0
    %666 = vmatpush1.msra.mxu0 0.0
    %667 = vmatprep.subr.mxu0 0.0
    %668 = vmatpush1.msra.mxu0 0.0
    %669 = vmatprep.subr.mxu0 0.0
    %670 = vmatpush1.msra.mxu0 0.0
    %671 = vmatprep.subr.mxu0 0.0
    %672 = vmatpush1.msra.mxu0 0.0
    %673 = vmatprep.subr.mxu0 0.0
    %674 = vmatpush1.msra.mxu0 0.0
    %675 = vmatprep.subr.mxu0 0.0
    %676 = vmatpush1.msra.mxu0 0.0
    %677 = vmatprep.subr.mxu0 0.0
    %678 = vmatpush1.msra.mxu0 0.0
    %679 = vmatprep.subr.mxu0 0.0
    %680 = vmatpush1.msra.mxu0 0.0
    %681 = vmatprep.subr.mxu0 0.0
    %682 = vmatpush1.msra.mxu0 0.0
    %683 = vmatprep.subr.mxu0 0.0
    %684 = vmatpush1.msra.mxu0 0.0
    %685 = vmatprep.subr.mxu0 0.0
    %686 = vmatpush1.msra.mxu0 0.0
    %687 = vmatprep.subr.mxu0 0.0
    %688 = vmatpush1.msra.mxu0 0.0
    %689 = vmatprep.subr.mxu0 0.0
    %690 = vmatpush1.msra.mxu0 0.0
    %691 = vmatprep.subr.mxu0 0.0
    %692 = vmatpush1.msra.mxu0 0.0
    %693 = vmatprep.subr.mxu0 0.0
    %694 = vmatpush1.msra.mxu0 0.0
    %695 = vmatprep.mubr.f32.mxu0 0.0
    %696 = vmatmul.mubr.f32.gmra.mrb[0].mxu0 %v626
    %v697 = vpop.f32.mrb[0].mxu0
    %v698 = vadd.f32 %v623, %v697
    %v699 = vpop.f32.mrb[0].mxu0
    %700 = vmatprep.mubr.f32.mxu0 0.0
    %701 = vmatmul.mubr.f32.gmra.mrb[0].mxu0 %v629
    %v702 = vpop.f32.mrb[0].mxu0
    %v703 = vadd.f32 %v623, %v702
    %v704 = vpop.f32.mrb[0].mxu0
    %705 = vdwg.mxu0
    %v706 = vmax.f32 %v698, 0.0
    %v707 = vmax.f32 %v703, 0.0
    %s708 = scalar_lea.vmem [#allocation6], 8
    %v709 = vld [vmem:[%s708] sm:$0xff]
    %s710 = scalar_lea.vmem %s9, 1
    %v711 = vld [vmem:[%s710] sm:$0x1]
    %v713 = vlaneseq
    %v714 = vshrl.u32 %v713, 7
    %v715 = vsub.s32 0, %v714
    %v716 = vrot.slane %v711, %v715
    %v719 = vsel %vm486, %v706, 0
    %v722 = vsel %vm486, %v707, 0
    %724 = vmatprep.subr.mxu0 0.0
    %725 = vmatpush1.msra.mxu0 %v709
    %726 = vmatprep.subr.mxu0 0.0
    %727 = vmatpush1.msra.mxu0 0.0
    %728 = vmatprep.subr.mxu0 0.0
    %729 = vmatpush1.msra.mxu0 0.0
    %730 = vmatprep.subr.mxu0 0.0
    %731 = vmatpush1.msra.mxu0 0.0
    %732 = vmatprep.subr.mxu0 0.0
    %733 = vmatpush1.msra.mxu0 0.0
    %734 = vmatprep.subr.mxu0 0.0
    %735 = vmatpush1.msra.mxu0 0.0
    %736 = vmatprep.subr.mxu0 0.0
    %737 = vmatpush1.msra.mxu0 0.0
    %738 = vmatprep.subr.mxu0 0.0
    %739 = vmatpush1.msra.mxu0 0.0
    %740 = vmatprep.subr.mxu0 0.0
    %741 = vmatpush1.msra.mxu0 0.0
    %742 = vmatprep.subr.mxu0 0.0
    %743 = vmatpush1.msra.mxu0 0.0
    %744 = vmatprep.subr.mxu0 0.0
    %745 = vmatpush1.msra.mxu0 0.0
    %746 = vmatprep.subr.mxu0 0.0
    %747 = vmatpush1.msra.mxu0 0.0
    %748 = vmatprep.subr.mxu0 0.0
    %749 = vmatpush1.msra.mxu0 0.0
    %750 = vmatprep.subr.mxu0 0.0
    %751 = vmatpush1.msra.mxu0 0.0
    %752 = vmatprep.subr.mxu0 0.0
    %753 = vmatpush1.msra.mxu0 0.0
    %754 = vmatprep.subr.mxu0 0.0
    %755 = vmatpush1.msra.mxu0 0.0
    %756 = vmatprep.subr.mxu0 0.0
    %757 = vmatpush1.msra.mxu0 0.0
    %758 = vmatprep.subr.mxu0 0.0
    %759 = vmatpush1.msra.mxu0 0.0
    %760 = vmatprep.subr.mxu0 0.0
    %761 = vmatpush1.msra.mxu0 0.0
    %762 = vmatprep.subr.mxu0 0.0
    %763 = vmatpush1.msra.mxu0 0.0
    %764 = vmatprep.subr.mxu0 0.0
    %765 = vmatpush1.msra.mxu0 0.0
    %766 = vmatprep.subr.mxu0 0.0
    %767 = vmatpush1.msra.mxu0 0.0
    %768 = vmatprep.subr.mxu0 0.0
    %769 = vmatpush1.msra.mxu0 0.0
    %770 = vmatprep.subr.mxu0 0.0
    %771 = vmatpush1.msra.mxu0 0.0
    %772 = vmatprep.subr.mxu0 0.0
    %773 = vmatpush1.msra.mxu0 0.0
    %774 = vmatprep.subr.mxu0 0.0
    %775 = vmatpush1.msra.mxu0 0.0
    %776 = vmatprep.subr.mxu0 0.0
    %777 = vmatpush1.msra.mxu0 0.0
    %778 = vmatprep.subr.mxu0 0.0
    %779 = vmatpush1.msra.mxu0 0.0
    %780 = vmatprep.subr.mxu0 0.0
    %781 = vmatpush1.msra.mxu0 0.0
    %782 = vmatprep.subr.mxu0 0.0
    %783 = vmatpush1.msra.mxu0 0.0
    %784 = vmatprep.subr.mxu0 0.0
    %785 = vmatpush1.msra.mxu0 0.0
    %786 = vmatprep.subr.mxu0 0.0
    %787 = vmatpush1.msra.mxu0 0.0
    %788 = vmatprep.mubr.f32.mxu0 0.0
    %789 = vmatmul.mubr.f32.gmra.mrb[0].mxu0 %v719
    %v790 = vpop.f32.mrb[0].mxu0
    %v791 = vadd.f32 %v716, %v790
    %v792 = vpop.f32.mrb[0].mxu0
    %793 = vmatprep.mubr.f32.mxu0 0.0
    %794 = vmatmul.mubr.f32.gmra.mrb[0].mxu0 %v722
    %v795 = vpop.f32.mrb[0].mxu0
    %v796 = vadd.f32 %v716, %v795
    %v797 = vpop.f32.mrb[0].mxu0
    %798 = vdwg.mxu0
    %v799 = vadd.f32 %v568, %v791
    %v800 = vadd.f32 %v569, %v796
    %v801 = vmax.f32 %v799, 0.0
    %v802 = vmax.f32 %v800, 0.0
    %v803 = vld [vmem:[%s10] sm:$0xff]
    %v804 = vld [vmem:[%s10 + $0x8] sm:$0xff]
    %v805 = vld [vmem:[%s10 + $0x10] sm:$0xff]
    %v806 = vld [vmem:[%s10 + $0x18] sm:$0xff]
    %v808 = vsel %vm246, %v801, 0
    %v811 = vsel %vm246, %v802, 0
    %813 = vmatprep.subr.mxu0 0.0
    %814 = vmatpush1.msra.mxu0 %v803
    %815 = vmatprep.subr.mxu0 0.0
    %816 = vmatpush1.msra.mxu0 %v804
    %817 = vmatprep.subr.mxu0 0.0
    %818 = vmatpush1.msra.mxu0 %v805
    %819 = vmatprep.subr.mxu0 0.0
    %820 = vmatpush1.msra.mxu0 %v806
    %821 = vmatprep.subr.mxu0 0.0
    %822 = vmatpush1.msra.mxu0 0.0
    %823 = vmatprep.subr.mxu0 0.0
    %824 = vmatpush1.msra.mxu0 0.0
    %825 = vmatprep.subr.mxu0 0.0
    %826 = vmatpush1.msra.mxu0 0.0
    %827 = vmatprep.subr.mxu0 0.0
    %828 = vmatpush1.msra.mxu0 0.0
    %829 = vmatprep.subr.mxu0 0.0
    %830 = vmatpush1.msra.mxu0 0.0
    %831 = vmatprep.subr.mxu0 0.0
    %832 = vmatpush1.msra.mxu0 0.0
    %833 = vmatprep.subr.mxu0 0.0
    %834 = vmatpush1.msra.mxu0 0.0
    %835 = vmatprep.subr.mxu0 0.0
    %836 = vmatpush1.msra.mxu0 0.0
    %837 = vmatprep.subr.mxu0 0.0
    %838 = vmatpush1.msra.mxu0 0.0
    %839 = vmatprep.subr.mxu0 0.0
    %840 = vmatpush1.msra.mxu0 0.0
    %841 = vmatprep.subr.mxu0 0.0
    %842 = vmatpush1.msra.mxu0 0.0
    %843 = vmatprep.subr.mxu0 0.0
    %844 = vmatpush1.msra.mxu0 0.0
    %845 = vmatprep.subr.mxu0 0.0
    %846 = vmatpush1.msra.mxu0 0.0
    %847 = vmatprep.subr.mxu0 0.0
    %848 = vmatpush1.msra.mxu0 0.0
    %849 = vmatprep.subr.mxu0 0.0
    %850 = vmatpush1.msra.mxu0 0.0
    %851 = vmatprep.subr.mxu0 0.0
    %852 = vmatpush1.msra.mxu0 0.0
    %853 = vmatprep.subr.mxu0 0.0
    %854 = vmatpush1.msra.mxu0 0.0
    %855 = vmatprep.subr.mxu0 0.0
    %856 = vmatpush1.msra.mxu0 0.0
    %857 = vmatprep.subr.mxu0 0.0
    %858 = vmatpush1.msra.mxu0 0.0
    %859 = vmatprep.subr.mxu0 0.0
    %860 = vmatpush1.msra.mxu0 0.0
    %861 = vmatprep.subr.mxu0 0.0
    %862 = vmatpush1.msra.mxu0 0.0
    %863 = vmatprep.subr.mxu0 0.0
    %864 = vmatpush1.msra.mxu0 0.0
    %865 = vmatprep.subr.mxu0 0.0
    %866 = vmatpush1.msra.mxu0 0.0
    %867 = vmatprep.subr.mxu0 0.0
    %868 = vmatpush1.msra.mxu0 0.0
    %869 = vmatprep.subr.mxu0 0.0
    %870 = vmatpush1.msra.mxu0 0.0
    %871 = vmatprep.subr.mxu0 0.0
    %872 = vmatpush1.msra.mxu0 0.0
    %873 = vmatprep.subr.mxu0 0.0
    %874 = vmatpush1.msra.mxu0 0.0
    %875 = vmatprep.subr.mxu0 0.0
    %876 = vmatpush1.msra.mxu0 0.0
    %877 = vmatprep.mubr.f32.mxu0 0.0
    %878 = vmatmul.mubr.f32.gmra.mrb[0].mxu0 %v808
    %v879 = vpop.f32.mrb[0].mxu0
    %v880 = vadd.f32 0.0, %v879
    %v881 = vpop.f32.mrb[0].mxu0
    %882 = vmatprep.mubr.f32.mxu0 0.0
    %883 = vmatmul.mubr.f32.gmra.mrb[0].mxu0 %v811
    %v884 = vpop.f32.mrb[0].mxu0
    %v885 = vadd.f32 0.0, %v884
    %v886 = vpop.f32.mrb[0].mxu0
    %887 = vdwg.mxu0
    %v888 = vld [vmem:[%s11] sm:$0x1]
    %v890 = vlaneseq
    %v891 = vshrl.u32 %v890, 7
    %v892 = vsub.s32 0, %v891
    %v893 = vrot.slane %v888, %v892
    %895 = vst.msk [vmem:[#allocation2] sm:$0xff] %vm93, %v893
    %896 = vst.msk [vmem:[#allocation2 + $0x8] sm:$0xff] %vm93, %v893
    %vm897 = vcmask 125952
    %898 = vst.msk [vmem:[#allocation2 + $0x10] sm:$0xf] %vm897, %v893
    %v899 = vadd.f32 %v880, %v893
    %900 = vst.msk [vmem:[#allocation2 + $0x1] sm:$0xff] %vm93, %v899
    %v901 = vadd.f32 %v885, %v893
    %902 = vst.msk [vmem:[#allocation2 + $0xb] sm:$0xff] %vm93, %v901
    %v903 = vld [vmem:[#allocation2] sm:$0xff]
    %v904 = vld [vmem:[#allocation2 + $0x8] sm:$0xff]
    %v905 = vld [vmem:[#allocation2 + $0x10] sm:$0xf]
    %v906 = vld [vmem:[%s12] sm:$0xff]
    %v907 = vld [vmem:[%s12 + $0x8] sm:$0xff]
    %v908 = vld [vmem:[%s12 + $0x10] sm:$0xff]
    %v909 = vld [vmem:[%s12 + $0x18] sm:$0xff]
    %v910 = vmul.f32 %v903, %v903
    %v911 = vmul.f32 %v904, %v904
    %v912 = vmul.f32 %v905, %v905
    %v913 = vsel %vm93, %v910, 0.0
    %914 = vadd.xlane.f32.xlu0 %v913
    %v915 = vpop.xlane.xlu0 %914
    %v916 = vsel %vm93, %v911, 0.0
    %917 = vadd.xlane.f32.xlu0 %v916
    %v918 = vpop.xlane.xlu0 %917
    %v919 = vsel %vm897, %v912, 0.0
    %920 = vadd.xlane.f32.xlu0 %v919
    %v921 = vpop.xlane.xlu0 %920
    %v923 = vsel %vm93, %v903, 0
    %v926 = vsel %vm93, %v904, 0
    %v929 = vsel %vm93, %v905, 0
    %v932 = vsel %vm93, %v906, 0
    %v935 = vsel %vm93, %v907, 0
    %v938 = vsel %vm93, %v908, 0
    %v941 = vsel %vm93, %v909, 0
    %943 = vmatprep.subr.mxu0 0.0
    %944 = vmatpush1.xpose.msra.mxu0 %v932
    %945 = vmatprep.subr.mxu0 0.0
    %946 = vmatpush1.xpose.msra.mxu0 %v935
    %947 = vmatprep.subr.mxu0 0.0
    %948 = vmatpush1.xpose.msra.mxu0 %v938
    %949 = vmatprep.subr.mxu0 0.0
    %950 = vmatpush1.xpose.msra.mxu0 %v941
    %951 = vmatprep.subr.mxu0 0.0
    %952 = vmatpush1.xpose.msra.mxu0 0.0
    %953 = vmatprep.subr.mxu0 0.0
    %954 = vmatpush1.xpose.msra.mxu0 0.0
    %955 = vmatprep.subr.mxu0 0.0
    %956 = vmatpush1.xpose.msra.mxu0 0.0
    %957 = vmatprep.subr.mxu0 0.0
    %958 = vmatpush1.xpose.msra.mxu0 0.0
    %959 = vmatprep.subr.mxu0 0.0
    %960 = vmatpush1.xpose.msra.mxu0 0.0
    %961 = vmatprep.subr.mxu0 0.0
    %962 = vmatpush1.xpose.msra.mxu0 0.0
    %963 = vmatprep.subr.mxu0 0.0
    %964 = vmatpush1.xpose.msra.mxu0 0.0
    %965 = vmatprep.subr.mxu0 0.0
    %966 = vmatpush1.xpose.msra.mxu0 0.0
    %967 = vmatprep.subr.mxu0 0.0
    %968 = vmatpush1.xpose.msra.mxu0 0.0
    %969 = vmatprep.subr.mxu0 0.0
    %970 = vmatpush1.xpose.msra.mxu0 0.0
    %971 = vmatprep.subr.mxu0 0.0
    %972 = vmatpush1.xpose.msra.mxu0 0.0
    %973 = vmatprep.subr.mxu0 0.0
    %974 = vmatpush1.xpose.msra.mxu0 0.0
    %975 = vmatprep.subr.mxu0 0.0
    %976 = vmatpush1.xpose.msra.mxu0 0.0
    %977 = vmatprep.subr.mxu0 0.0
    %978 = vmatpush1.xpose.msra.mxu0 0.0
    %979 = vmatprep.subr.mxu0 0.0
    %980 = vmatpush1.xpose.msra.mxu0 0.0
    %981 = vmatprep.subr.mxu0 0.0
    %982 = vmatpush1.xpose.msra.mxu0 0.0
    %983 = vmatprep.subr.mxu0 0.0
    %984 = vmatpush1.xpose.msra.mxu0 0.0
    %985 = vmatprep.subr.mxu0 0.0
    %986 = vmatpush1.xpose.msra.mxu0 0.0
    %987 = vmatprep.subr.mxu0 0.0
    %988 = vmatpush1.xpose.msra.mxu0 0.0
    %989 = vmatprep.subr.mxu0 0.0
    %990 = vmatpush1.xpose.msra.mxu0 0.0
    %991 = vmatprep.subr.mxu0 0.0
    %992 = vmatpush1.xpose.msra.mxu0 0.0
    %993 = vmatprep.subr.mxu0 0.0
    %994 = vmatpush1.xpose.msra.mxu0 0.0
    %995 = vmatprep.subr.mxu0 0.0
    %996 = vmatpush1.xpose.msra.mxu0 0.0
    %997 = vmatprep.subr.mxu0 0.0
    %998 = vmatpush1.xpose.msra.mxu0 0.0
    %999 = vmatprep.subr.mxu0 0.0
    %1000 = vmatpush1.xpose.msra.mxu0 0.0
    %1001 = vmatprep.subr.mxu0 0.0
    %1002 = vmatpush1.xpose.msra.mxu0 0.0
    %1003 = vmatprep.subr.mxu0 0.0
    %1004 = vmatpush1.xpose.msra.mxu0 0.0
    %1005 = vmatprep.subr.mxu0 0.0
    %1006 = vmatpush1.xpose.msra.mxu0 0.0
    %1007 = vmatprep.mubr.f32.mxu0 0.0
    %1008 = vmatmul.mubr.f32.gmra.mrb[0].mxu0 %v923
    %v1009 = vpop.f32.mrb[0].mxu0
    %v1010 = vadd.f32 0.0, %v1009
    %v1011 = vpop.f32.mrb[0].mxu0
    %1012 = vmatprep.mubr.f32.mxu0 0.0
    %1013 = vmatmul.mubr.f32.gmra.mrb[0].mxu0 %v926
    %v1014 = vpop.f32.mrb[0].mxu0
    %v1015 = vadd.f32 0.0, %v1014
    %v1016 = vpop.f32.mrb[0].mxu0
    %1017 = vmatprep.mubr.f32.mxu0 0.0
    %1018 = vmatmul.mubr.f32.gmra.mrb[0].mxu0 %v929
    %v1019 = vpop.f32.mrb[0].mxu0
    %v1020 = vadd.f32 0.0, %v1019
    %v1021 = vpop.f32.mrb[0].mxu0
    %1022 = vdwg.mxu0
    %v1023 = vmul.f32 %v1010, 2.0
    %v1024 = vmul.f32 %v1015, 2.0
    %v1025 = vmul.f32 %v1020, 2.0
    %v1026 = vsub.f32 %v915, %v1023
    %v1027 = vsub.f32 %v918, %v1024
    %v1028 = vsub.f32 %v921, %v1025
    %v1029 = vld [vmem:[%s13] sm:$0x1]
    %v1031 = vlaneseq
    %v1032 = vshrl.u32 %v1031, 7
    %v1033 = vsub.s32 0, %v1032
    %v1034 = vrot.slane %v1029, %v1033
    %v1036 = vadd.f32 %v1026, %v1034
    %v1037 = vadd.f32 %v1027, %v1034
    %v1038 = vadd.f32 %v1028, %v1034
    %v1039 = vsel %vm246, %v1036, inf
    %1040 = vmin.xlane.f32.xlu0 %v1039
    %v1041 = vpop.xlane.xlu0 %1040
    %v1042 = vsel %vm246, %v1037, inf
    %1043 = vmin.xlane.f32.xlu0 %v1042
    %v1044 = vpop.xlane.xlu0 %1043
    %vm1045 = vcmask 257024
    %v1046 = vsel %vm1045, %v1038, inf
    %1047 = vmin.xlane.f32.xlu0 %v1046
    %v1048 = vpop.xlane.xlu0 %1047
    %v1049 = vlaneseq
    %v1050 = vand.u32 %v1049, 127
    %vm1051 = vcmp.le.f32.partialorder %v1036, %v1041
    %vm1052 = vcmp.le.f32.partialorder %v1037, %v1044
    %vm1053 = vcmp.le.f32.partialorder %v1038, %v1048
    %v1054 = vsel %vm1051, %v1050, 32
    %v1055 = vsel %vm1052, %v1050, 32
    %v1056 = vsel %vm1053, %v1050, 32
    %v1057 = vsel %vm246, %v1054, 2147483647
    %v1058 = vand.u32 %v1057, 65535
    %v1059 = vshra.s32 %v1057, 16
    %v1060 = vcvt.s32.f32 %v1058
    %v1061 = vcvt.s32.f32 %v1059
    %1062 = vmin.xlane.f32.xlu0 %v1061
    %v1063 = vpop.xlane.xlu0 %1062
    %vm1064 = vcmp.eq.f32.partialorder %v1061, %v1063
    %v1065 = vsel %vm1064, %v1060, inf
    %1066 = vmin.xlane.f32.xlu0 %v1065
    %v1067 = vpop.xlane.xlu0 %1066
    %v1068 = vcvt.f32.s32 %v1067
    %v1069 = vcvt.f32.s32 %v1063
    %v1070 = vshll.u32 %v1069, 16
    %v1071 = vadd.s32 %v1070, %v1068
    %v1072 = vsel %vm246, %v1055, 2147483647
    %v1073 = vand.u32 %v1072, 65535
    %v1074 = vshra.s32 %v1072, 16
    %v1075 = vcvt.s32.f32 %v1073
    %v1076 = vcvt.s32.f32 %v1074
    %1077 = vmin.xlane.f32.xlu0 %v1076
    %v1078 = vpop.xlane.xlu0 %1077
    %vm1079 = vcmp.eq.f32.partialorder %v1076, %v1078
    %v1080 = vsel %vm1079, %v1075, inf
    %1081 = vmin.xlane.f32.xlu0 %v1080
    %v1082 = vpop.xlane.xlu0 %1081
    %v1083 = vcvt.f32.s32 %v1082
    %v1084 = vcvt.f32.s32 %v1078
    %v1085 = vshll.u32 %v1084, 16
    %v1086 = vadd.s32 %v1085, %v1083
    %v1087 = vsel %vm1045, %v1056, 2147483647
    %v1088 = vand.u32 %v1087, 65535
    %v1089 = vshra.s32 %v1087, 16
    %v1090 = vcvt.s32.f32 %v1088
    %v1091 = vcvt.s32.f32 %v1089
    %1092 = vmin.xlane.f32.xlu0 %v1091
    %v1093 = vpop.xlane.xlu0 %1092
    %vm1094 = vcmp.eq.f32.partialorder %v1091, %v1093
    %v1095 = vsel %vm1094, %v1090, inf
    %1096 = vmin.xlane.f32.xlu0 %v1095
    %v1097 = vpop.xlane.xlu0 %1096
    %v1098 = vcvt.f32.s32 %v1097
    %v1099 = vcvt.f32.s32 %v1093
    %v1100 = vshll.u32 %v1099, 16
    %v1101 = vadd.s32 %v1100, %v1098
    %vm1102 = vcmp.eq.s32.totalorder %v1050, %v1071
    %vm1103 = vcmp.eq.s32.totalorder %v1050, %v1086
    %vm1104 = vcmp.eq.s32.totalorder %v1050, %v1101
    %v1105 = vsel %vm1102, 1, 0
    %v1106 = vsel %vm1103, 1, 0
    %v1107 = vsel %vm1104, 1, 0
    %v1108 = vcvt.s32.f32 %v1105
    %v1109 = vcvt.s32.f32 %v1106
    %v1110 = vcvt.s32.f32 %v1107
    %v1112 = vsel %vm246, %v1108, 0
    %v1115 = vsel %vm246, %v1109, 0
    %v1118 = vsel %vm246, %v1110, 0
    %1120 = vmatprep.subr.mxu0 0.0
    %1121 = vmatpush1.msra.mxu0 %v906
    %1122 = vmatprep.subr.mxu0 0.0
    %1123 = vmatpush1.msra.mxu0 %v907
    %1124 = vmatprep.subr.mxu0 0.0
    %1125 = vmatpush1.msra.mxu0 %v908
    %1126 = vmatprep.subr.mxu0 0.0
    %1127 = vmatpush1.msra.mxu0 %v909
    %1128 = vmatprep.subr.mxu0 0.0
    %1129 = vmatpush1.msra.mxu0 0.0
    %1130 = vmatprep.subr.mxu0 0.0
    %1131 = vmatpush1.msra.mxu0 0.0
    %1132 = vmatprep.subr.mxu0 0.0
    %1133 = vmatpush1.msra.mxu0 0.0
    %1134 = vmatprep.subr.mxu0 0.0
    %1135 = vmatpush1.msra.mxu0 0.0
    %1136 = vmatprep.subr.mxu0 0.0
    %1137 = vmatpush1.msra.mxu0 0.0
    %1138 = vmatprep.subr.mxu0 0.0
    %1139 = vmatpush1.msra.mxu0 0.0
    %1140 = vmatprep.subr.mxu0 0.0
    %1141 = vmatpush1.msra.mxu0 0.0
    %1142 = vmatprep.subr.mxu0 0.0
    %1143 = vmatpush1.msra.mxu0 0.0
    %1144 = vmatprep.subr.mxu0 0.0
    %1145 = vmatpush1.msra.mxu0 0.0
    %1146 = vmatprep.subr.mxu0 0.0
    %1147 = vmatpush1.msra.mxu0 0.0
    %1148 = vmatprep.subr.mxu0 0.0
    %1149 = vmatpush1.msra.mxu0 0.0
    %1150 = vmatprep.subr.mxu0 0.0
    %1151 = vmatpush1.msra.mxu0 0.0
    %1152 = vmatprep.subr.mxu0 0.0
    %1153 = vmatpush1.msra.mxu0 0.0
    %1154 = vmatprep.subr.mxu0 0.0
    %1155 = vmatpush1.msra.mxu0 0.0
    %1156 = vmatprep.subr.mxu0 0.0
    %1157 = vmatpush1.msra.mxu0 0.0
    %1158 = vmatprep.subr.mxu0 0.0
    %1159 = vmatpush1.msra.mxu0 0.0
    %1160 = vmatprep.subr.mxu0 0.0
    %1161 = vmatpush1.msra.mxu0 0.0
    %1162 = vmatprep.subr.mxu0 0.0
    %1163 = vmatpush1.msra.mxu0 0.0
    %1164 = vmatprep.subr.mxu0 0.0
    %1165 = vmatpush1.msra.mxu0 0.0
    %1166 = vmatprep.subr.mxu0 0.0
    %1167 = vmatpush1.msra.mxu0 0.0
    %1168 = vmatprep.subr.mxu0 0.0
    %1169 = vmatpush1.msra.mxu0 0.0
    %1170 = vmatprep.subr.mxu0 0.0
    %1171 = vmatpush1.msra.mxu0 0.0
    %1172 = vmatprep.subr.mxu0 0.0
    %1173 = vmatpush1.msra.mxu0 0.0
    %1174 = vmatprep.subr.mxu0 0.0
    %1175 = vmatpush1.msra.mxu0 0.0
    %1176 = vmatprep.subr.mxu0 0.0
    %1177 = vmatpush1.msra.mxu0 0.0
    %1178 = vmatprep.subr.mxu0 0.0
    %1179 = vmatpush1.msra.mxu0 0.0
    %1180 = vmatprep.subr.mxu0 0.0
    %1181 = vmatpush1.msra.mxu0 0.0
    %1182 = vmatprep.subr.mxu0 0.0
    %1183 = vmatpush1.msra.mxu0 0.0
    %1184 = vmatprep.mubr.f32.mxu0 0.0
    %1185 = vmatmul.mubr.f32.gmra.mrb[0].mxu0 %v1112
    %v1186 = vpop.f32.mrb[0].mxu0
    %v1187 = vadd.f32 0.0, %v1186
    %v1188 = vpop.f32.mrb[0].mxu0
    %1189 = vmatprep.mubr.f32.mxu0 0.0
    %1190 = vmatmul.mubr.f32.gmra.mrb[0].mxu0 %v1115
    %v1191 = vpop.f32.mrb[0].mxu0
    %v1192 = vadd.f32 0.0, %v1191
    %v1193 = vpop.f32.mrb[0].mxu0
    %1194 = vmatprep.mubr.f32.mxu0 0.0
    %1195 = vmatmul.mubr.f32.gmra.mrb[0].mxu0 %v1118
    %v1196 = vpop.f32.mrb[0].mxu0
    %v1197 = vadd.f32 0.0, %v1196
    %v1198 = vpop.f32.mrb[0].mxu0
    %1199 = vdwg.mxu0
    %1200 = vst.msk [vmem:[%s14] sm:$0xff] %vm93, %v1187
    %1201 = vst.msk [vmem:[%s14 + $0x8] sm:$0xff] %vm93, %v1192
    %1202 = vst.msk [vmem:[%s14 + $0x10] sm:$0xf] %vm897, %v1197
    %vm1203 = vcmask 7168
    %1204 = vst.msk [vmem:[%s15] sm:$0xff] %vm1203, %v1071
    %1205 = vst.msk [vmem:[%s15 + $0x8] sm:$0xff] %vm1203, %v1086
    %vm1206 = vcmask 3072
    %1207 = vst.msk [vmem:[%s15 + $0x10] sm:$0xf] %vm1206, %v1101
    %v1208 = vsel %vm246, %v1108, 0.0
    %v1209 = vsel %vm246, %v1109, 0.0
    %v1210 = vadd.f32 %v1208, %v1209
    %v1211 = vsel %vm1045, %v1110, 0.0
    %v1212 = vadd.f32 %v1210, %v1211
    %v1213 = vrot.slane %v1212, 4
    %v1214 = vadd.f32 %v1212, %v1213
    %v1215 = vrot.slane %v1214, 2
    %v1216 = vadd.f32 %v1214, %v1215
    %v1217 = vrot.slane %v1216, 1
    %v1218 = vadd.f32 %v1216, %v1217
    %v1219 = vmul.f32 %v1218, 0.05
    %vm1220 = vcmask 253952
    %1221 = vst.msk [vmem:[%s16] sm:$0x1] %vm1220, %v1219
    %v1222 = vsub.f32 %v1187, %v903
    %v1223 = vsub.f32 %v1192, %v904
    %v1224 = vsub.f32 %v1197, %v905
    %v1225 = vmul.f32 %v1222, %v1222
    %v1226 = vmul.f32 %v1223, %v1223
    %v1227 = vmul.f32 %v1224, %v1224
    %v1228 = vsel %vm93, %v1225, 0.0
    %v1229 = vsel %vm93, %v1226, 0.0
    %v1230 = vadd.f32 %v1228, %v1229
    %v1231 = vsel %vm897, %v1227, 0.0
    %v1232 = vadd.f32 %v1230, %v1231
    %v1233 = vrot.slane %v1232, 4
    %v1234 = vadd.f32 %v1232, %v1233
    %v1235 = vrot.slane %v1234, 2
    %v1236 = vadd.f32 %v1234, %v1235
    %v1237 = vrot.slane %v1236, 1
    %v1238 = vadd.f32 %v1236, %v1237
    %v1239 = vsel %vm93, %v1238, 0.0
    %1240 = vadd.xlane.f32.xlu0 %v1239
    %v1241 = vpop.xlane.xlu0 %1240
    %v1242 = vmul.f32 %v1241, 0.003125
    %vm1243 = vcmask 0
    %1244 = vst.msk [vmem:[#allocation8] sm:$0x1] %vm1243, %v1242
    // Predicated region
    $region66: #{_lambda_.2} parent=1 // pred_check
      _
    $region67: #{_lambda_.2} parent=1 // pred_check_branch
      %1246 = sbr.rel (0) target = $region69
    $region68: #{_lambda_.2} parent=1 // pred_region
      _
    $region69: #{_lambda_.2} parent=1 // pred_fallthru
      _
    // Predicated region
    $region70: #{_lambda_.2} parent=1 // pred_check
      _
    $region71: #{_lambda_.2} parent=1 // pred_check_branch
      %1248 = sbr.rel (0) target = $region73
    $region72: #{_lambda_.2} parent=1 // pred_region
      _
    $region73: #{_lambda_.2} parent=1 // pred_fallthru
      _
    // Predicated region
    $region74: #{_lambda_.2} parent=1 // pred_check
      _
    $region75: #{_lambda_.2} parent=1 // pred_check_branch
      %1250 = sbr.rel (0) target = $region77
    $region76: #{_lambda_.2} parent=1 // pred_region
      _
    $region77: #{_lambda_.2} parent=1 // pred_fallthru
      _
    // Predicated region
    $region78: #{_lambda_.2} parent=1 // pred_check
      _
    $region79: #{_lambda_.2} parent=1 // pred_check_branch
      %1252 = sbr.rel (0) target = $region81
    $region80: #{_lambda_.2} parent=1 // pred_region
      %s1254 = ssub.s32 16, 16
      %1255 = vsyncadd [#allocation5], %s1254
      %s1257 = sshll.u32 [#allocation8], 4
      %s1258 = int_to_ptr.vmem [resolvable:$true] %s1257
      %1260 = dma.vmem_to_hbm [thread:$0]  %s1258, 16, %s17, [#allocation5]
    $region81: #{_lambda_.2} parent=1 // pred_fallthru
      _
    // Predicated region
    $region82: #{_lambda_.2} parent=1 // pred_check
      _
    $region83: #{_lambda_.2} parent=1 // pred_check_branch
      %1262 = sbr.rel (0) target = $region85
    $region84: #{_lambda_.2} parent=1 // pred_region
      _
    $region85: #{_lambda_.2} parent=1 // pred_fallthru
      _
    // Predicated region
    $region86: #{_lambda_.2} parent=1 // pred_check
      _
    $region87: #{_lambda_.2} parent=1 // pred_check_branch
      %1264 = sbr.rel (0) target = $region89
    $region88: #{_lambda_.2} parent=1 // pred_region
      _
    $region89: #{_lambda_.2} parent=1 // pred_fallthru
      _
    // Predicated region
    $region90: #{_lambda_.2} parent=1 // pred_check
      _
    $region91: #{_lambda_.2} parent=1 // pred_check_branch
      %1266 = sbr.rel (0) target = $region93
    $region92: #{_lambda_.2} parent=1 // pred_region
      _
    $region93: #{_lambda_.2} parent=1 // pred_fallthru
      _
    // Predicated region
    $region94: #{_lambda_.2} parent=1 // pred_check
      _
    $region95: #{_lambda_.2} parent=1 // pred_check_branch
      %1268 = sbr.rel (0) target = $region97
    $region96: #{_lambda_.2} parent=1 // pred_region
      %1269 = dma.done [#allocation5], 16
    $region97: #{_lambda_.2} parent=1 // pred_fallthru
      _
    %1270 = vsyncpa [#allocation4], 1
    %1271 = vsyncpa [#allocation7], 1
    %1272 = vsyncpa [#allocation5], 1

// kernel: _lambda_.3
$region0: #{_lambda_.3}
  #allocation0 [shape = 'u32[]', space=smem, size = 0x4, offset = 0x4, fixed_abs, tag = 'smem constant byte address 0x4 - core index']
  #allocation1 [shape = 'u32[144,128]{1,0:T(1,128)}', space=vmem, size = 0x12000, scoped, tag = 'internal scratch']
  %s0 = inlined_call_operand.vmem [shape: f32[40,16], index: 0, kind: input, shape index: {}]
  %s1 = inlined_call_operand.vmem [shape: f32[40,16], index: 1, kind: input, shape index: {}]
  %s2 = inlined_call_operand.vmem [shape: f32[40,2], index: 2, kind: input, shape index: {}]
  %s3 = inlined_call_operand.vmem [shape: s32[40,1], index: 3, kind: input, shape index: {}]
  %s4 = inlined_call_operand.vmem [shape: f32[2,96], index: 4, kind: input, shape index: {}]
  %s5 = inlined_call_operand.vmem [shape: f32[16,96], index: 5, kind: input, shape index: {}]
  %s6 = inlined_call_operand.vmem [shape: f32[3,32,32], index: 6, kind: input, shape index: {}]
  %s7 = inlined_call_operand.vmem [shape: f32[3,16,32], index: 7, kind: input, shape index: {}]
  %s8 = inlined_call_operand.vmem [shape: f32[3,1,32], index: 8, kind: input, shape index: {}]
  %s9 = inlined_call_operand.vmem [shape: f32[16,32], index: 9, kind: input, shape index: {}]
  %s10 = inlined_call_operand.vmem [shape: f32[1,32], index: 10, kind: input, shape index: {}, may-alias: {10,12}]
  %s11 = inlined_call_operand.vmem [shape: f32[32,32], index: 11, kind: input, shape index: {}]
  %s12 = inlined_call_operand.vmem [shape: f32[1,32], index: 12, kind: input, shape index: {}, may-alias: {10,12}]
  %s13 = inlined_call_operand.vmem [shape: f32[40,32], index: 13, kind: output, shape index: {}]
  %s14 = sld [smem:[#allocation0]]
  $region62: #{_lambda_.3} parent=0
    _
  %s16 = ssub.s32 1, %s14
  %s17 = scalar_select 0, %s16, %s14
  // Predicated region
  $region2: #{_lambda_.3} parent=0 // pred_check
    _
  $region3: #{_lambda_.3} parent=0 // pred_check_branch
    %19 = sbr.rel (0) target = $region5
  $region4: #{_lambda_.3} parent=0 // pred_region
    _
  $region5: #{_lambda_.3} parent=0 // pred_fallthru
    _
  // Predicated region
  $region6: #{_lambda_.3} parent=0 // pred_check
    _
  $region7: #{_lambda_.3} parent=0 // pred_check_branch
    %21 = sbr.rel (0) target = $region9
  $region8: #{_lambda_.3} parent=0 // pred_region
    _
  $region9: #{_lambda_.3} parent=0 // pred_fallthru
    _
  // Predicated region
  $region10: #{_lambda_.3} parent=0 // pred_check
    _
  $region11: #{_lambda_.3} parent=0 // pred_check_branch
    %23 = sbr.rel (0) target = $region13
  $region12: #{_lambda_.3} parent=0 // pred_region
    _
  $region13: #{_lambda_.3} parent=0 // pred_fallthru
    _
  // Predicated region
  $region14: #{_lambda_.3} parent=0 // pred_check
    _
  $region15: #{_lambda_.3} parent=0 // pred_check_branch
    %25 = sbr.rel (0) target = $region17
  $region16: #{_lambda_.3} parent=0 // pred_region
    _
  $region17: #{_lambda_.3} parent=0 // pred_fallthru
    _
  // Predicated region
  $region18: #{_lambda_.3} parent=0 // pred_check
    _
  $region19: #{_lambda_.3} parent=0 // pred_check_branch
    %27 = sbr.rel (0) target = $region21
  $region20: #{_lambda_.3} parent=0 // pred_region
    _
  $region21: #{_lambda_.3} parent=0 // pred_fallthru
    _
  // Predicated region
  $region22: #{_lambda_.3} parent=0 // pred_check
    _
  $region23: #{_lambda_.3} parent=0 // pred_check_branch
    %29 = sbr.rel (0) target = $region25
  $region24: #{_lambda_.3} parent=0 // pred_region
    _
  $region25: #{_lambda_.3} parent=0 // pred_fallthru
    _
  // Predicated region
  $region26: #{_lambda_.3} parent=0 // pred_check
    _
  $region27: #{_lambda_.3} parent=0 // pred_check_branch
    %31 = sbr.rel (0) target = $region29
  $region28: #{_lambda_.3} parent=0 // pred_region
    _
  $region29: #{_lambda_.3} parent=0 // pred_fallthru
    _
  // Predicated region
  $region30: #{_lambda_.3} parent=0 // pred_check
    _
  $region31: #{_lambda_.3} parent=0 // pred_check_branch
    %33 = sbr.rel (0) target = $region33
  $region32: #{_lambda_.3} parent=0 // pred_region
    _
  $region33: #{_lambda_.3} parent=0 // pred_fallthru
    _
  // Predicated region
  $region34: #{_lambda_.3} parent=0 // pred_check
    _
  $region35: #{_lambda_.3} parent=0 // pred_check_branch
    %35 = sbr.rel (0) target = $region37
  $region36: #{_lambda_.3} parent=0 // pred_region
    _
  $region37: #{_lambda_.3} parent=0 // pred_fallthru
    _
  // Predicated region
  $region38: #{_lambda_.3} parent=0 // pred_check
    _
  $region39: #{_lambda_.3} parent=0 // pred_check_branch
    %37 = sbr.rel (0) target = $region41
  $region40: #{_lambda_.3} parent=0 // pred_region
    _
  $region41: #{_lambda_.3} parent=0 // pred_fallthru
    _
  // Predicated region
  $region42: #{_lambda_.3} parent=0 // pred_check
    _
  $region43: #{_lambda_.3} parent=0 // pred_check_branch
    %39 = sbr.rel (0) target = $region45
  $region44: #{_lambda_.3} parent=0 // pred_region
    _
  $region45: #{_lambda_.3} parent=0 // pred_fallthru
    _
  // Predicated region
  $region46: #{_lambda_.3} parent=0 // pred_check
    _
  $region47: #{_lambda_.3} parent=0 // pred_check_branch
    %41 = sbr.rel (0) target = $region49
  $region48: #{_lambda_.3} parent=0 // pred_region
    _
  $region49: #{_lambda_.3} parent=0 // pred_fallthru
    _
  // Predicated region
  $region50: #{_lambda_.3} parent=0 // pred_check
    _
  $region51: #{_lambda_.3} parent=0 // pred_check_branch
    %43 = sbr.rel (0) target = $region53
  $region52: #{_lambda_.3} parent=0 // pred_region
    _
  $region53: #{_lambda_.3} parent=0 // pred_fallthru
    _
  %v44 = vld [vmem:[%s3] sm:$0xff]
  %v45 = vld [vmem:[%s3 + $0x8] sm:$0xff]
  %v46 = vld [vmem:[%s3 + $0x10] sm:$0xff]
  %v47 = vld [vmem:[%s3 + $0x18] sm:$0xff]
  %v48 = vld [vmem:[%s3 + $0x20] sm:$0xff]
  %v49 = vld [vmem:[%s0] sm:$0xff]
  %v50 = vld [vmem:[%s0 + $0x8] sm:$0xff]
  %v51 = vld [vmem:[%s0 + $0x10] sm:$0xff]
  %v52 = vld [vmem:[%s0 + $0x18] sm:$0xff]
  %v53 = vld [vmem:[%s0 + $0x20] sm:$0xff]
  %v54 = vld [vmem:[%s1] sm:$0xff]
  %v55 = vld [vmem:[%s1 + $0x8] sm:$0xff]
  %v56 = vld [vmem:[%s1 + $0x10] sm:$0xff]
  %v57 = vld [vmem:[%s1 + $0x18] sm:$0xff]
  %v58 = vld [vmem:[%s1 + $0x20] sm:$0xff]
  %v59 = vld [vmem:[%s5] sm:$0xff]
  %v60 = vld [vmem:[%s5 + $0x8] sm:$0xff]
  %v61 = vld [vmem:[%s2] sm:$0xff]
  %v62 = vld [vmem:[%s2 + $0x8] sm:$0xff]
  %v63 = vld [vmem:[%s2 + $0x10] sm:$0xff]
  %v64 = vld [vmem:[%s2 + $0x18] sm:$0xff]
  %v65 = vld [vmem:[%s2 + $0x20] sm:$0xff]
  %v66 = vld [vmem:[%s4] sm:$0x3]
  %vm67 = vcmask 15360
  %v69 = vsel %vm67, %v61, 0
  %v72 = vsel %vm67, %v62, 0
  %v75 = vsel %vm67, %v63, 0
  %v78 = vsel %vm67, %v64, 0
  %v81 = vsel %vm67, %v65, 0
  %vm83 = vcmask 1041408
  %v85 = vsel %vm83, %v66, 0
  %87 = vmatprep.subr.mxu0 0.0
  %88 = vmatpush1.msra.mxu0 %v85
  %89 = vmatprep.subr.mxu0 0.0
  %90 = vmatpush1.msra.mxu0 0.0
  %91 = vmatprep.subr.mxu0 0.0
  %92 = vmatpush1.msra.mxu0 0.0
  %93 = vmatprep.subr.mxu0 0.0
  %94 = vmatpush1.msra.mxu0 0.0
  %95 = vmatprep.subr.mxu0 0.0
  %96 = vmatpush1.msra.mxu0 0.0
  %97 = vmatprep.subr.mxu0 0.0
  %98 = vmatpush1.msra.mxu0 0.0
  %99 = vmatprep.subr.mxu0 0.0
  %100 = vmatpush1.msra.mxu0 0.0
  %101 = vmatprep.subr.mxu0 0.0
  %102 = vmatpush1.msra.mxu0 0.0
  %103 = vmatprep.subr.mxu0 0.0
  %104 = vmatpush1.msra.mxu0 0.0
  %105 = vmatprep.subr.mxu0 0.0
  %106 = vmatpush1.msra.mxu0 0.0
  %107 = vmatprep.subr.mxu0 0.0
  %108 = vmatpush1.msra.mxu0 0.0
  %109 = vmatprep.subr.mxu0 0.0
  %110 = vmatpush1.msra.mxu0 0.0
  %111 = vmatprep.subr.mxu0 0.0
  %112 = vmatpush1.msra.mxu0 0.0
  %113 = vmatprep.subr.mxu0 0.0
  %114 = vmatpush1.msra.mxu0 0.0
  %115 = vmatprep.subr.mxu0 0.0
  %116 = vmatpush1.msra.mxu0 0.0
  %117 = vmatprep.subr.mxu0 0.0
  %118 = vmatpush1.msra.mxu0 0.0
  %119 = vmatprep.subr.mxu0 0.0
  %120 = vmatpush1.msra.mxu0 0.0
  %121 = vmatprep.subr.mxu0 0.0
  %122 = vmatpush1.msra.mxu0 0.0
  %123 = vmatprep.subr.mxu0 0.0
  %124 = vmatpush1.msra.mxu0 0.0
  %125 = vmatprep.subr.mxu0 0.0
  %126 = vmatpush1.msra.mxu0 0.0
  %127 = vmatprep.subr.mxu0 0.0
  %128 = vmatpush1.msra.mxu0 0.0
  %129 = vmatprep.subr.mxu0 0.0
  %130 = vmatpush1.msra.mxu0 0.0
  %131 = vmatprep.subr.mxu0 0.0
  %132 = vmatpush1.msra.mxu0 0.0
  %133 = vmatprep.subr.mxu0 0.0
  %134 = vmatpush1.msra.mxu0 0.0
  %135 = vmatprep.subr.mxu0 0.0
  %136 = vmatpush1.msra.mxu0 0.0
  %137 = vmatprep.subr.mxu0 0.0
  %138 = vmatpush1.msra.mxu0 0.0
  %139 = vmatprep.subr.mxu0 0.0
  %140 = vmatpush1.msra.mxu0 0.0
  %141 = vmatprep.subr.mxu0 0.0
  %142 = vmatpush1.msra.mxu0 0.0
  %143 = vmatprep.subr.mxu0 0.0
  %144 = vmatpush1.msra.mxu0 0.0
  %145 = vmatprep.subr.mxu0 0.0
  %146 = vmatpush1.msra.mxu0 0.0
  %147 = vmatprep.subr.mxu0 0.0
  %148 = vmatpush1.msra.mxu0 0.0
  %149 = vmatprep.subr.mxu0 0.0
  %150 = vmatpush1.msra.mxu0 0.0
  %151 = vmatprep.mubr.f32.mxu0 0.0
  %152 = vmatmul.mubr.f32.gmra.mrb[0].mxu0 %v69
  %v153 = vpop.f32.mrb[0].mxu0
  %v154 = vadd.f32 0.0, %v153
  %v155 = vpop.f32.mrb[0].mxu0
  %156 = vmatprep.mubr.f32.mxu0 0.0
  %157 = vmatmul.mubr.f32.gmra.mrb[0].mxu0 %v72
  %v158 = vpop.f32.mrb[0].mxu0
  %v159 = vadd.f32 0.0, %v158
  %v160 = vpop.f32.mrb[0].mxu0
  %161 = vmatprep.mubr.f32.mxu0 0.0
  %162 = vmatmul.mubr.f32.gmra.mrb[0].mxu0 %v75
  %v163 = vpop.f32.mrb[0].mxu0
  %v164 = vadd.f32 0.0, %v163
  %v165 = vpop.f32.mrb[0].mxu0
  %166 = vmatprep.mubr.f32.mxu0 0.0
  %167 = vmatmul.mubr.f32.gmra.mrb[0].mxu0 %v78
  %v168 = vpop.f32.mrb[0].mxu0
  %v169 = vadd.f32 0.0, %v168
  %v170 = vpop.f32.mrb[0].mxu0
  %171 = vmatprep.mubr.f32.mxu0 0.0
  %172 = vmatmul.mubr.f32.gmra.mrb[0].mxu0 %v81
  %v173 = vpop.f32.mrb[0].mxu0
  %v174 = vadd.f32 0.0, %v173
  %v175 = vpop.f32.mrb[0].mxu0
  %176 = vdwg.mxu0
  %vm177 = vcmask 130048
  %v179 = vsel %vm177, %v54, 0
  %v182 = vsel %vm177, %v55, 0
  %v185 = vsel %vm177, %v56, 0
  %v188 = vsel %vm177, %v57, 0
  %v191 = vsel %vm177, %v58, 0
  %193 = vmatprep.subr.mxu0 0.0
  %194 = vmatpush1.msra.mxu0 %v59
  %195 = vmatprep.subr.mxu0 0.0
  %196 = vmatpush1.msra.mxu0 %v60
  %197 = vmatprep.subr.mxu0 0.0
  %198 = vmatpush1.msra.mxu0 0.0
  %199 = vmatprep.subr.mxu0 0.0
  %200 = vmatpush1.msra.mxu0 0.0
  %201 = vmatprep.subr.mxu0 0.0
  %202 = vmatpush1.msra.mxu0 0.0
  %203 = vmatprep.subr.mxu0 0.0
  %204 = vmatpush1.msra.mxu0 0.0
  %205 = vmatprep.subr.mxu0 0.0
  %206 = vmatpush1.msra.mxu0 0.0
  %207 = vmatprep.subr.mxu0 0.0
  %208 = vmatpush1.msra.mxu0 0.0
  %209 = vmatprep.subr.mxu0 0.0
  %210 = vmatpush1.msra.mxu0 0.0
  %211 = vmatprep.subr.mxu0 0.0
  %212 = vmatpush1.msra.mxu0 0.0
  %213 = vmatprep.subr.mxu0 0.0
  %214 = vmatpush1.msra.mxu0 0.0
  %215 = vmatprep.subr.mxu0 0.0
  %216 = vmatpush1.msra.mxu0 0.0
  %217 = vmatprep.subr.mxu0 0.0
  %218 = vmatpush1.msra.mxu0 0.0
  %219 = vmatprep.subr.mxu0 0.0
  %220 = vmatpush1.msra.mxu0 0.0
  %221 = vmatprep.subr.mxu0 0.0
  %222 = vmatpush1.msra.mxu0 0.0
  %223 = vmatprep.subr.mxu0 0.0
  %224 = vmatpush1.msra.mxu0 0.0
  %225 = vmatprep.subr.mxu0 0.0
  %226 = vmatpush1.msra.mxu0 0.0
  %227 = vmatprep.subr.mxu0 0.0
  %228 = vmatpush1.msra.mxu0 0.0
  %229 = vmatprep.subr.mxu0 0.0
  %230 = vmatpush1.msra.mxu0 0.0
  %231 = vmatprep.subr.mxu0 0.0
  %232 = vmatpush1.msra.mxu0 0.0
  %233 = vmatprep.subr.mxu0 0.0
  %234 = vmatpush1.msra.mxu0 0.0
  %235 = vmatprep.subr.mxu0 0.0
  %236 = vmatpush1.msra.mxu0 0.0
  %237 = vmatprep.subr.mxu0 0.0
  %238 = vmatpush1.msra.mxu0 0.0
  %239 = vmatprep.subr.mxu0 0.0
  %240 = vmatpush1.msra.mxu0 0.0
  %241 = vmatprep.subr.mxu0 0.0
  %242 = vmatpush1.msra.mxu0 0.0
  %243 = vmatprep.subr.mxu0 0.0
  %244 = vmatpush1.msra.mxu0 0.0
  %245 = vmatprep.subr.mxu0 0.0
  %246 = vmatpush1.msra.mxu0 0.0
  %247 = vmatprep.subr.mxu0 0.0
  %248 = vmatpush1.msra.mxu0 0.0
  %249 = vmatprep.subr.mxu0 0.0
  %250 = vmatpush1.msra.mxu0 0.0
  %251 = vmatprep.subr.mxu0 0.0
  %252 = vmatpush1.msra.mxu0 0.0
  %253 = vmatprep.subr.mxu0 0.0
  %254 = vmatpush1.msra.mxu0 0.0
  %255 = vmatprep.subr.mxu0 0.0
  %256 = vmatpush1.msra.mxu0 0.0
  %257 = vmatprep.mubr.f32.mxu0 0.0
  %258 = vmatmul.mubr.f32.gmra.mrb[0].mxu0 %v179
  %v259 = vpop.f32.mrb[0].mxu0
  %v260 = vadd.f32 %v154, %v259
  %v261 = vpop.f32.mrb[0].mxu0
  %262 = vmatprep.mubr.f32.mxu0 0.0
  %263 = vmatmul.mubr.f32.gmra.mrb[0].mxu0 %v182
  %v264 = vpop.f32.mrb[0].mxu0
  %v265 = vadd.f32 %v159, %v264
  %v266 = vpop.f32.mrb[0].mxu0
  %267 = vmatprep.mubr.f32.mxu0 0.0
  %268 = vmatmul.mubr.f32.gmra.mrb[0].mxu0 %v185
  %v269 = vpop.f32.mrb[0].mxu0
  %v270 = vadd.f32 %v164, %v269
  %v271 = vpop.f32.mrb[0].mxu0
  %272 = vmatprep.mubr.f32.mxu0 0.0
  %273 = vmatmul.mubr.f32.gmra.mrb[0].mxu0 %v188
  %v274 = vpop.f32.mrb[0].mxu0
  %v275 = vadd.f32 %v169, %v274
  %v276 = vpop.f32.mrb[0].mxu0
  %277 = vmatprep.mubr.f32.mxu0 0.0
  %278 = vmatmul.mubr.f32.gmra.mrb[0].mxu0 %v191
  %v279 = vpop.f32.mrb[0].mxu0
  %v280 = vadd.f32 %v174, %v279
  %v281 = vpop.f32.mrb[0].mxu0
  %282 = vdwg.mxu0
  %vm283 = vcmp.ge.s32.totalorder %v44, 1
  %vm284 = vcmp.ge.s32.totalorder %v45, 1
  %vm285 = vcmp.ge.s32.totalorder %v46, 1
  %vm286 = vcmp.ge.s32.totalorder %v47, 1
  %vm287 = vcmp.ge.s32.totalorder %v48, 1
  %v288 = vrot.slane %v49, 7
  %v289 = vrot.slane %v50, 7
  %v290 = vrot.slane %v51, 7
  %v291 = vrot.slane %v52, 7
  %v292 = vrot.slane %v53, 7
  %v293 = vlaneseq
  %v294 = vshrl.u32 %v293, 7
  %vm295 = vcmp.lt.s32.totalorder %v294, 1
  %v296 = vsel %vm295, %v291, %v292
  %v297 = vsel %vm295, %v290, %v291
  %v298 = vsel %vm295, %v289, %v290
  %v299 = vsel %vm295, %v288, %v289
  %v300 = vsel %vm295, %v292, %v288
  %v301 = vsel %vm283, 1, 0
  %v302 = vsel %vm284, 1, 0
  %v303 = vsel %vm285, 1, 0
  %v304 = vsel %vm286, 1, 0
  %v305 = vsel %vm287, 1, 0
  %306 = vset.pattern.permute.xlu0 0
  %307 = vperm.xlu0 %306, %v301
  %v308 = vpop.permute.xlu0 %307
  %309 = vset.pattern.permute.xlu0 0
  %310 = vperm.xlu0 %309, %v302
  %v311 = vpop.permute.xlu0 %310
  %312 = vset.pattern.permute.xlu0 0
  %313 = vperm.xlu0 %312, %v303
  %v314 = vpop.permute.xlu0 %313
  %315 = vset.pattern.permute.xlu0 0
  %316 = vperm.xlu0 %315, %v304
  %v317 = vpop.permute.xlu0 %316
  %318 = vset.pattern.permute.xlu0 0
  %319 = vperm.xlu0 %318, %v305
  %v320 = vpop.permute.xlu0 %319
  %vm321 = vcmp.eq.s32.totalorder %v308, 1
  %vm322 = vcmp.eq.s32.totalorder %v311, 1
  %vm323 = vcmp.eq.s32.totalorder %v314, 1
  %vm324 = vcmp.eq.s32.totalorder %v317, 1
  %vm325 = vcmp.eq.s32.totalorder %v320, 1
  %v326 = vsel %vm321, %v300, 0.0
  %v327 = vsel %vm322, %v299, 0.0
  %v328 = vsel %vm323, %v298, 0.0
  %v329 = vsel %vm324, %v297, 0.0
  %v330 = vsel %vm325, %v296, 0.0
  %336 = vrot.lane.b32.xlu0 %v326, 16
  %v337 = vpop.permute.xlu0 %336
  %338 = vrot.lane.b32.xlu0 %v327, 16
  %v339 = vpop.permute.xlu0 %338
  %340 = vrot.lane.b32.xlu0 %v328, 16
  %v341 = vpop.permute.xlu0 %340
  %342 = vrot.lane.b32.xlu0 %v329, 16
  %v343 = vpop.permute.xlu0 %342
  %344 = vrot.lane.b32.xlu0 %v330, 16
  %v345 = vpop.permute.xlu0 %344
  %v351 = vsel %vm177, %v49, %v337
  %v352 = vsel %vm177, %v50, %v339
  %v353 = vsel %vm177, %v51, %v341
  %v354 = vsel %vm177, %v52, %v343
  %v355 = vsel %vm177, %v53, %v345
  %v356 = vld [vmem:[%s6] sm:$0xff]
  %v357 = vld [vmem:[%s6 + $0x8] sm:$0xff]
  %v358 = vld [vmem:[%s6 + $0x10] sm:$0xff]
  %v359 = vld [vmem:[%s6 + $0x18] sm:$0xff]
  %vm360 = vcmask 261120
  %v362 = vsel %vm360, %v351, 0
  %v365 = vsel %vm360, %v352, 0
  %v368 = vsel %vm360, %v353, 0
  %v371 = vsel %vm360, %v354, 0
  %v374 = vsel %vm360, %v355, 0
  %376 = vmatprep.subr.mxu0 0.0
  %377 = vmatpush1.msra.mxu0 %v356
  %378 = vmatprep.subr.mxu0 0.0
  %379 = vmatpush1.msra.mxu0 %v357
  %380 = vmatprep.subr.mxu0 0.0
  %381 = vmatpush1.msra.mxu0 %v358
  %382 = vmatprep.subr.mxu0 0.0
  %383 = vmatpush1.msra.mxu0 %v359
  %384 = vmatprep.subr.mxu0 0.0
  %385 = vmatpush1.msra.mxu0 0.0
  %386 = vmatprep.subr.mxu0 0.0
  %387 = vmatpush1.msra.mxu0 0.0
  %388 = vmatprep.subr.mxu0 0.0
  %389 = vmatpush1.msra.mxu0 0.0
  %390 = vmatprep.subr.mxu0 0.0
  %391 = vmatpush1.msra.mxu0 0.0
  %392 = vmatprep.subr.mxu0 0.0
  %393 = vmatpush1.msra.mxu0 0.0
  %394 = vmatprep.subr.mxu0 0.0
  %395 = vmatpush1.msra.mxu0 0.0
  %396 = vmatprep.subr.mxu0 0.0
  %397 = vmatpush1.msra.mxu0 0.0
  %398 = vmatprep.subr.mxu0 0.0
  %399 = vmatpush1.msra.mxu0 0.0
  %400 = vmatprep.subr.mxu0 0.0
  %401 = vmatpush1.msra.mxu0 0.0
  %402 = vmatprep.subr.mxu0 0.0
  %403 = vmatpush1.msra.mxu0 0.0
  %404 = vmatprep.subr.mxu0 0.0
  %405 = vmatpush1.msra.mxu0 0.0
  %406 = vmatprep.subr.mxu0 0.0
  %407 = vmatpush1.msra.mxu0 0.0
  %408 = vmatprep.subr.mxu0 0.0
  %409 = vmatpush1.msra.mxu0 0.0
  %410 = vmatprep.subr.mxu0 0.0
  %411 = vmatpush1.msra.mxu0 0.0
  %412 = vmatprep.subr.mxu0 0.0
  %413 = vmatpush1.msra.mxu0 0.0
  %414 = vmatprep.subr.mxu0 0.0
  %415 = vmatpush1.msra.mxu0 0.0
  %416 = vmatprep.subr.mxu0 0.0
  %417 = vmatpush1.msra.mxu0 0.0
  %418 = vmatprep.subr.mxu0 0.0
  %419 = vmatpush1.msra.mxu0 0.0
  %420 = vmatprep.subr.mxu0 0.0
  %421 = vmatpush1.msra.mxu0 0.0
  %422 = vmatprep.subr.mxu0 0.0
  %423 = vmatpush1.msra.mxu0 0.0
  %424 = vmatprep.subr.mxu0 0.0
  %425 = vmatpush1.msra.mxu0 0.0
  %426 = vmatprep.subr.mxu0 0.0
  %427 = vmatpush1.msra.mxu0 0.0
  %428 = vmatprep.subr.mxu0 0.0
  %429 = vmatpush1.msra.mxu0 0.0
  %430 = vmatprep.subr.mxu0 0.0
  %431 = vmatpush1.msra.mxu0 0.0
  %432 = vmatprep.subr.mxu0 0.0
  %433 = vmatpush1.msra.mxu0 0.0
  %434 = vmatprep.subr.mxu0 0.0
  %435 = vmatpush1.msra.mxu0 0.0
  %436 = vmatprep.subr.mxu0 0.0
  %437 = vmatpush1.msra.mxu0 0.0
  %438 = vmatprep.subr.mxu0 0.0
  %439 = vmatpush1.msra.mxu0 0.0
  %440 = vmatprep.mubr.f32.mxu0 0.0
  %441 = vmatmul.mubr.f32.gmra.mrb[0].mxu0 %v362
  %v442 = vpop.f32.mrb[0].mxu0
  %v443 = vadd.f32 %v260, %v442
  %v444 = vpop.f32.mrb[0].mxu0
  %445 = vmatprep.mubr.f32.mxu0 0.0
  %446 = vmatmul.mubr.f32.gmra.mrb[0].mxu0 %v365
  %v447 = vpop.f32.mrb[0].mxu0
  %v448 = vadd.f32 %v265, %v447
  %v449 = vpop.f32.mrb[0].mxu0
  %450 = vmatprep.mubr.f32.mxu0 0.0
  %451 = vmatmul.mubr.f32.gmra.mrb[0].mxu0 %v368
  %v452 = vpop.f32.mrb[0].mxu0
  %v453 = vadd.f32 %v270, %v452
  %v454 = vpop.f32.mrb[0].mxu0
  %455 = vmatprep.mubr.f32.mxu0 0.0
  %456 = vmatmul.mubr.f32.gmra.mrb[0].mxu0 %v371
  %v457 = vpop.f32.mrb[0].mxu0
  %v458 = vadd.f32 %v275, %v457
  %v459 = vpop.f32.mrb[0].mxu0
  %460 = vmatprep.mubr.f32.mxu0 0.0
  %461 = vmatmul.mubr.f32.gmra.mrb[0].mxu0 %v374
  %v462 = vpop.f32.mrb[0].mxu0
  %v463 = vadd.f32 %v280, %v462
  %v464 = vpop.f32.mrb[0].mxu0
  %465 = vdwg.mxu0
  %v466 = vtanh.pop %v443
  %v467 = vtanh.pop %v448
  %v468 = vtanh.pop %v453
  %v469 = vtanh.pop %v458
  %v470 = vtanh.pop %v463
  %v471 = vxor.u32 %v443, 2147483648
  %v472 = vxor.u32 %v448, 2147483648
  %v473 = vxor.u32 %v453, 2147483648
  %v474 = vxor.u32 %v458, 2147483648
  %v475 = vxor.u32 %v463, 2147483648
  %v476 = vmul.f32 %v471, 1.442695
  %v477 = vpow.pop %v476
  %v478 = vmul.f32 %v472, 1.442695
  %v479 = vpow.pop %v478
  %v480 = vmul.f32 %v473, 1.442695
  %v481 = vpow.pop %v480
  %v482 = vmul.f32 %v474, 1.442695
  %v483 = vpow.pop %v482
  %v484 = vmul.f32 %v475, 1.442695
  %v485 = vpow.pop %v484
  %v486 = vadd.f32 %v477, 1.0
  %v487 = vadd.f32 %v479, 1.0
  %v488 = vadd.f32 %v481, 1.0
  %v489 = vadd.f32 %v483, 1.0
  %v490 = vadd.f32 %v485, 1.0
  %v491 = vrcp.pop %v486
  %v492 = vmul.f32 1.0, %v491
  %v493 = vrcp.pop %v487
  %v494 = vmul.f32 1.0, %v493
  %v495 = vrcp.pop %v488
  %v496 = vmul.f32 1.0, %v495
  %v497 = vrcp.pop %v489
  %v498 = vmul.f32 1.0, %v497
  %v499 = vrcp.pop %v490
  %v500 = vmul.f32 1.0, %v499
  %506 = vrot.lane.b32.xlu0 %v492, 112
  %v507 = vpop.permute.xlu0 %506
  %508 = vrot.lane.b32.xlu0 %v494, 112
  %v509 = vpop.permute.xlu0 %508
  %510 = vrot.lane.b32.xlu0 %v496, 112
  %v511 = vpop.permute.xlu0 %510
  %512 = vrot.lane.b32.xlu0 %v498, 112
  %v513 = vpop.permute.xlu0 %512
  %514 = vrot.lane.b32.xlu0 %v500, 112
  %v515 = vpop.permute.xlu0 %514
  %v521 = vmul.f32 %v466, %v507
  %v522 = vmul.f32 %v467, %v509
  %v523 = vmul.f32 %v468, %v511
  %v524 = vmul.f32 %v469, %v513
  %v525 = vmul.f32 %v470, %v515
  %v526 = vld [vmem:[%s7] sm:$0xff]
  %v527 = vld [vmem:[%s7 + $0x8] sm:$0xff]
  %v528 = vld [vmem:[%s8] sm:$0x1]
  %v530 = vlaneseq
  %v531 = vshrl.u32 %v530, 7
  %v532 = vsub.s32 0, %v531
  %v533 = vrot.slane %v528, %v532
  %v536 = vsel %vm177, %v521, 0
  %v539 = vsel %vm177, %v522, 0
  %v542 = vsel %vm177, %v523, 0
  %v545 = vsel %vm177, %v524, 0
  %v548 = vsel %vm177, %v525, 0
  %550 = vmatprep.subr.mxu0 0.0
  %551 = vmatpush1.msra.mxu0 %v526
  %552 = vmatprep.subr.mxu0 0.0
  %553 = vmatpush1.msra.mxu0 %v527
  %554 = vmatprep.subr.mxu0 0.0
  %555 = vmatpush1.msra.mxu0 0.0
  %556 = vmatprep.subr.mxu0 0.0
  %557 = vmatpush1.msra.mxu0 0.0
  %558 = vmatprep.subr.mxu0 0.0
  %559 = vmatpush1.msra.mxu0 0.0
  %560 = vmatprep.subr.mxu0 0.0
  %561 = vmatpush1.msra.mxu0 0.0
  %562 = vmatprep.subr.mxu0 0.0
  %563 = vmatpush1.msra.mxu0 0.0
  %564 = vmatprep.subr.mxu0 0.0
  %565 = vmatpush1.msra.mxu0 0.0
  %566 = vmatprep.subr.mxu0 0.0
  %567 = vmatpush1.msra.mxu0 0.0
  %568 = vmatprep.subr.mxu0 0.0
  %569 = vmatpush1.msra.mxu0 0.0
  %570 = vmatprep.subr.mxu0 0.0
  %571 = vmatpush1.msra.mxu0 0.0
  %572 = vmatprep.subr.mxu0 0.0
  %573 = vmatpush1.msra.mxu0 0.0
  %574 = vmatprep.subr.mxu0 0.0
  %575 = vmatpush1.msra.mxu0 0.0
  %576 = vmatprep.subr.mxu0 0.0
  %577 = vmatpush1.msra.mxu0 0.0
  %578 = vmatprep.subr.mxu0 0.0
  %579 = vmatpush1.msra.mxu0 0.0
  %580 = vmatprep.subr.mxu0 0.0
  %581 = vmatpush1.msra.mxu0 0.0
  %582 = vmatprep.subr.mxu0 0.0
  %583 = vmatpush1.msra.mxu0 0.0
  %584 = vmatprep.subr.mxu0 0.0
  %585 = vmatpush1.msra.mxu0 0.0
  %586 = vmatprep.subr.mxu0 0.0
  %587 = vmatpush1.msra.mxu0 0.0
  %588 = vmatprep.subr.mxu0 0.0
  %589 = vmatpush1.msra.mxu0 0.0
  %590 = vmatprep.subr.mxu0 0.0
  %591 = vmatpush1.msra.mxu0 0.0
  %592 = vmatprep.subr.mxu0 0.0
  %593 = vmatpush1.msra.mxu0 0.0
  %594 = vmatprep.subr.mxu0 0.0
  %595 = vmatpush1.msra.mxu0 0.0
  %596 = vmatprep.subr.mxu0 0.0
  %597 = vmatpush1.msra.mxu0 0.0
  %598 = vmatprep.subr.mxu0 0.0
  %599 = vmatpush1.msra.mxu0 0.0
  %600 = vmatprep.subr.mxu0 0.0
  %601 = vmatpush1.msra.mxu0 0.0
  %602 = vmatprep.subr.mxu0 0.0
  %603 = vmatpush1.msra.mxu0 0.0
  %604 = vmatprep.subr.mxu0 0.0
  %605 = vmatpush1.msra.mxu0 0.0
  %606 = vmatprep.subr.mxu0 0.0
  %607 = vmatpush1.msra.mxu0 0.0
  %608 = vmatprep.subr.mxu0 0.0
  %609 = vmatpush1.msra.mxu0 0.0
  %610 = vmatprep.subr.mxu0 0.0
  %611 = vmatpush1.msra.mxu0 0.0
  %612 = vmatprep.subr.mxu0 0.0
  %613 = vmatpush1.msra.mxu0 0.0
  %614 = vmatprep.mubr.f32.mxu0 0.0
  %615 = vmatmul.mubr.f32.gmra.mrb[0].mxu0 %v536
  %v616 = vpop.f32.mrb[0].mxu0
  %v617 = vadd.f32 %v533, %v616
  %v618 = vpop.f32.mrb[0].mxu0
  %619 = vmatprep.mubr.f32.mxu0 0.0
  %620 = vmatmul.mubr.f32.gmra.mrb[0].mxu0 %v539
  %v621 = vpop.f32.mrb[0].mxu0
  %v622 = vadd.f32 %v533, %v621
  %v623 = vpop.f32.mrb[0].mxu0
  %624 = vmatprep.mubr.f32.mxu0 0.0
  %625 = vmatmul.mubr.f32.gmra.mrb[0].mxu0 %v542
  %v626 = vpop.f32.mrb[0].mxu0
  %v627 = vadd.f32 %v533, %v626
  %v628 = vpop.f32.mrb[0].mxu0
  %629 = vmatprep.mubr.f32.mxu0 0.0
  %630 = vmatmul.mubr.f32.gmra.mrb[0].mxu0 %v545
  %v631 = vpop.f32.mrb[0].mxu0
  %v632 = vadd.f32 %v533, %v631
  %v633 = vpop.f32.mrb[0].mxu0
  %634 = vmatprep.mubr.f32.mxu0 0.0
  %635 = vmatmul.mubr.f32.gmra.mrb[0].mxu0 %v548
  %v636 = vpop.f32.mrb[0].mxu0
  %v637 = vadd.f32 %v533, %v636
  %v638 = vpop.f32.mrb[0].mxu0
  %639 = vdwg.mxu0
  %v640 = vadd.f32 %v49, %v617
  %v641 = vadd.f32 %v50, %v622
  %v642 = vadd.f32 %v51, %v627
  %v643 = vadd.f32 %v52, %v632
  %v644 = vadd.f32 %v53, %v637
  %v645 = vadd.f32 %v617, 0.0
  %v646 = vadd.f32 %v622, 0.0
  %v647 = vadd.f32 %v627, 0.0
  %v648 = vadd.f32 %v632, 0.0
  %v649 = vadd.f32 %v637, 0.0
  %vm650 = vcmp.ge.s32.totalorder %v44, 2
  %vm651 = vcmp.ge.s32.totalorder %v45, 2
  %vm652 = vcmp.ge.s32.totalorder %v46, 2
  %vm653 = vcmp.ge.s32.totalorder %v47, 2
  %vm654 = vcmp.ge.s32.totalorder %v48, 2
  %v655 = vrot.slane %v640, 6
  %v656 = vrot.slane %v641, 6
  %v657 = vrot.slane %v642, 6
  %v658 = vrot.slane %v643, 6
  %v659 = vrot.slane %v644, 6
  %vm660 = vcmp.lt.s32.totalorder %v294, 2
  %v661 = vsel %vm660, %v658, %v659
  %v662 = vsel %vm660, %v657, %v658
  %v663 = vsel %vm660, %v656, %v657
  %v664 = vsel %vm660, %v655, %v656
  %v665 = vsel %vm660, %v659, %v655
  %v666 = vsel %vm650, 1, 0
  %v667 = vsel %vm651, 1, 0
  %v668 = vsel %vm652, 1, 0
  %v669 = vsel %vm653, 1, 0
  %v670 = vsel %vm654, 1, 0
  %671 = vset.pattern.permute.xlu0 0
  %672 = vperm.xlu0 %671, %v666
  %v673 = vpop.permute.xlu0 %672
  %674 = vset.pattern.permute.xlu0 0
  %675 = vperm.xlu0 %674, %v667
  %v676 = vpop.permute.xlu0 %675
  %677 = vset.pattern.permute.xlu0 0
  %678 = vperm.xlu0 %677, %v668
  %v679 = vpop.permute.xlu0 %678
  %680 = vset.pattern.permute.xlu0 0
  %681 = vperm.xlu0 %680, %v669
  %v682 = vpop.permute.xlu0 %681
  %683 = vset.pattern.permute.xlu0 0
  %684 = vperm.xlu0 %683, %v670
  %v685 = vpop.permute.xlu0 %684
  %vm686 = vcmp.eq.s32.totalorder %v673, 1
  %vm687 = vcmp.eq.s32.totalorder %v676, 1
  %vm688 = vcmp.eq.s32.totalorder %v679, 1
  %vm689 = vcmp.eq.s32.totalorder %v682, 1
  %vm690 = vcmp.eq.s32.totalorder %v685, 1
  %v691 = vsel %vm686, %v665, 0.0
  %v692 = vsel %vm687, %v664, 0.0
  %v693 = vsel %vm688, %v663, 0.0
  %v694 = vsel %vm689, %v662, 0.0
  %v695 = vsel %vm690, %v661, 0.0
  %701 = vrot.lane.b32.xlu0 %v691, 16
  %v702 = vpop.permute.xlu0 %701
  %703 = vrot.lane.b32.xlu0 %v692, 16
  %v704 = vpop.permute.xlu0 %703
  %705 = vrot.lane.b32.xlu0 %v693, 16
  %v706 = vpop.permute.xlu0 %705
  %707 = vrot.lane.b32.xlu0 %v694, 16
  %v708 = vpop.permute.xlu0 %707
  %709 = vrot.lane.b32.xlu0 %v695, 16
  %v710 = vpop.permute.xlu0 %709
  %v716 = vsel %vm177, %v640, %v702
  %v717 = vsel %vm177, %v641, %v704
  %v718 = vsel %vm177, %v642, %v706
  %v719 = vsel %vm177, %v643, %v708
  %v720 = vsel %vm177, %v644, %v710
  %s721 = scalar_lea.vmem %s6, 32
  %v722 = vld [vmem:[%s721] sm:$0xff]
  %v723 = vld [vmem:[%s721 + $0x8] sm:$0xff]
  %v724 = vld [vmem:[%s721 + $0x10] sm:$0xff]
  %v725 = vld [vmem:[%s721 + $0x18] sm:$0xff]
  %731 = vrot.lane.b32.xlu0 %v260, 96
  %v732 = vpop.permute.xlu0 %731
  %733 = vrot.lane.b32.xlu0 %v265, 96
  %v734 = vpop.permute.xlu0 %733
  %735 = vrot.lane.b32.xlu0 %v270, 96
  %v736 = vpop.permute.xlu0 %735
  %737 = vrot.lane.b32.xlu0 %v275, 96
  %v738 = vpop.permute.xlu0 %737
  %739 = vrot.lane.b32.xlu0 %v280, 96
  %v740 = vpop.permute.xlu0 %739
  %v747 = vsel %vm360, %v716, 0
  %v750 = vsel %vm360, %v717, 0
  %v753 = vsel %vm360, %v718, 0
  %v756 = vsel %vm360, %v719, 0
  %v759 = vsel %vm360, %v720, 0
  %761 = vmatprep.subr.mxu0 0.0
  %762 = vmatpush1.msra.mxu0 %v722
  %763 = vmatprep.subr.mxu0 0.0
  %764 = vmatpush1.msra.mxu0 %v723
  %765 = vmatprep.subr.mxu0 0.0
  %766 = vmatpush1.msra.mxu0 %v724
  %767 = vmatprep.subr.mxu0 0.0
  %768 = vmatpush1.msra.mxu0 %v725
  %769 = vmatprep.subr.mxu0 0.0
  %770 = vmatpush1.msra.mxu0 0.0
  %771 = vmatprep.subr.mxu0 0.0
  %772 = vmatpush1.msra.mxu0 0.0
  %773 = vmatprep.subr.mxu0 0.0
  %774 = vmatpush1.msra.mxu0 0.0
  %775 = vmatprep.subr.mxu0 0.0
  %776 = vmatpush1.msra.mxu0 0.0
  %777 = vmatprep.subr.mxu0 0.0
  %778 = vmatpush1.msra.mxu0 0.0
  %779 = vmatprep.subr.mxu0 0.0
  %780 = vmatpush1.msra.mxu0 0.0
  %781 = vmatprep.subr.mxu0 0.0
  %782 = vmatpush1.msra.mxu0 0.0
  %783 = vmatprep.subr.mxu0 0.0
  %784 = vmatpush1.msra.mxu0 0.0
  %785 = vmatprep.subr.mxu0 0.0
  %786 = vmatpush1.msra.mxu0 0.0
  %787 = vmatprep.subr.mxu0 0.0
  %788 = vmatpush1.msra.mxu0 0.0
  %789 = vmatprep.subr.mxu0 0.0
  %790 = vmatpush1.msra.mxu0 0.0
  %791 = vmatprep.subr.mxu0 0.0
  %792 = vmatpush1.msra.mxu0 0.0
  %793 = vmatprep.subr.mxu0 0.0
  %794 = vmatpush1.msra.mxu0 0.0
  %795 = vmatprep.subr.mxu0 0.0
  %796 = vmatpush1.msra.mxu0 0.0
  %797 = vmatprep.subr.mxu0 0.0
  %798 = vmatpush1.msra.mxu0 0.0
  %799 = vmatprep.subr.mxu0 0.0
  %800 = vmatpush1.msra.mxu0 0.0
  %801 = vmatprep.subr.mxu0 0.0
  %802 = vmatpush1.msra.mxu0 0.0
  %803 = vmatprep.subr.mxu0 0.0
  %804 = vmatpush1.msra.mxu0 0.0
  %805 = vmatprep.subr.mxu0 0.0
  %806 = vmatpush1.msra.mxu0 0.0
  %807 = vmatprep.subr.mxu0 0.0
  %808 = vmatpush1.msra.mxu0 0.0
  %809 = vmatprep.subr.mxu0 0.0
  %810 = vmatpush1.msra.mxu0 0.0
  %811 = vmatprep.subr.mxu0 0.0
  %812 = vmatpush1.msra.mxu0 0.0
  %813 = vmatprep.subr.mxu0 0.0
  %814 = vmatpush1.msra.mxu0 0.0
  %815 = vmatprep.subr.mxu0 0.0
  %816 = vmatpush1.msra.mxu0 0.0
  %817 = vmatprep.subr.mxu0 0.0
  %818 = vmatpush1.msra.mxu0 0.0
  %819 = vmatprep.subr.mxu0 0.0
  %820 = vmatpush1.msra.mxu0 0.0
  %821 = vmatprep.subr.mxu0 0.0
  %822 = vmatpush1.msra.mxu0 0.0
  %823 = vmatprep.subr.mxu0 0.0
  %824 = vmatpush1.msra.mxu0 0.0
  %825 = vmatprep.mubr.f32.mxu0 0.0
  %826 = vmatmul.mubr.f32.gmra.mrb[0].mxu0 %v747
  %v827 = vpop.f32.mrb[0].mxu0
  %v828 = vadd.f32 %v732, %v827
  %v829 = vpop.f32.mrb[0].mxu0
  %830 = vmatprep.mubr.f32.mxu0 0.0
  %831 = vmatmul.mubr.f32.gmra.mrb[0].mxu0 %v750
  %v832 = vpop.f32.mrb[0].mxu0
  %v833 = vadd.f32 %v734, %v832
  %v834 = vpop.f32.mrb[0].mxu0
  %835 = vmatprep.mubr.f32.mxu0 0.0
  %836 = vmatmul.mubr.f32.gmra.mrb[0].mxu0 %v753
  %v837 = vpop.f32.mrb[0].mxu0
  %v838 = vadd.f32 %v736, %v837
  %v839 = vpop.f32.mrb[0].mxu0
  %840 = vmatprep.mubr.f32.mxu0 0.0
  %841 = vmatmul.mubr.f32.gmra.mrb[0].mxu0 %v756
  %v842 = vpop.f32.mrb[0].mxu0
  %v843 = vadd.f32 %v738, %v842
  %v844 = vpop.f32.mrb[0].mxu0
  %845 = vmatprep.mubr.f32.mxu0 0.0
  %846 = vmatmul.mubr.f32.gmra.mrb[0].mxu0 %v759
  %v847 = vpop.f32.mrb[0].mxu0
  %v848 = vadd.f32 %v740, %v847
  %v849 = vpop.f32.mrb[0].mxu0
  %850 = vdwg.mxu0
  %v851 = vtanh.pop %v828
  %v852 = vtanh.pop %v833
  %v853 = vtanh.pop %v838
  %v854 = vtanh.pop %v843
  %v855 = vtanh.pop %v848
  %v856 = vxor.u32 %v828, 2147483648
  %v857 = vxor.u32 %v833, 2147483648
  %v858 = vxor.u32 %v838, 2147483648
  %v859 = vxor.u32 %v843, 2147483648
  %v860 = vxor.u32 %v848, 2147483648
  %v861 = vmul.f32 %v856, 1.442695
  %v862 = vpow.pop %v861
  %v863 = vmul.f32 %v857, 1.442695
  %v864 = vpow.pop %v863
  %v865 = vmul.f32 %v858, 1.442695
  %v866 = vpow.pop %v865
  %v867 = vmul.f32 %v859, 1.442695
  %v868 = vpow.pop %v867
  %v869 = vmul.f32 %v860, 1.442695
  %v870 = vpow.pop %v869
  %v871 = vadd.f32 %v862, 1.0
  %v872 = vadd.f32 %v864, 1.0
  %v873 = vadd.f32 %v866, 1.0
  %v874 = vadd.f32 %v868, 1.0
  %v875 = vadd.f32 %v870, 1.0
  %v876 = vrcp.pop %v871
  %v877 = vmul.f32 1.0, %v876
  %v878 = vrcp.pop %v872
  %v879 = vmul.f32 1.0, %v878
  %v880 = vrcp.pop %v873
  %v881 = vmul.f32 1.0, %v880
  %v882 = vrcp.pop %v874
  %v883 = vmul.f32 1.0, %v882
  %v884 = vrcp.pop %v875
  %v885 = vmul.f32 1.0, %v884
  %891 = vrot.lane.b32.xlu0 %v877, 112
  %v892 = vpop.permute.xlu0 %891
  %893 = vrot.lane.b32.xlu0 %v879, 112
  %v894 = vpop.permute.xlu0 %893
  %895 = vrot.lane.b32.xlu0 %v881, 112
  %v896 = vpop.permute.xlu0 %895
  %897 = vrot.lane.b32.xlu0 %v883, 112
  %v898 = vpop.permute.xlu0 %897
  %899 = vrot.lane.b32.xlu0 %v885, 112
  %v900 = vpop.permute.xlu0 %899
  %v906 = vmul.f32 %v851, %v892
  %v907 = vmul.f32 %v852, %v894
  %v908 = vmul.f32 %v853, %v896
  %v909 = vmul.f32 %v854, %v898
  %v910 = vmul.f32 %v855, %v900
  %s911 = scalar_lea.vmem %s7, 16
  %v912 = vld [vmem:[%s911] sm:$0xff]
  %v913 = vld [vmem:[%s911 + $0x8] sm:$0xff]
  %s914 = scalar_lea.vmem %s8, 1
  %v915 = vld [vmem:[%s914] sm:$0x1]
  %v917 = vlaneseq
  %v918 = vshrl.u32 %v917, 7
  %v919 = vsub.s32 0, %v918
  %v920 = vrot.slane %v915, %v919
  %v923 = vsel %vm177, %v906, 0
  %v926 = vsel %vm177, %v907, 0
  %v929 = vsel %vm177, %v908, 0
  %v932 = vsel %vm177, %v909, 0
  %v935 = vsel %vm177, %v910, 0
  %937 = vmatprep.subr.mxu0 0.0
  %938 = vmatpush1.msra.mxu0 %v912
  %939 = vmatprep.subr.mxu0 0.0
  %940 = vmatpush1.msra.mxu0 %v913
  %941 = vmatprep.subr.mxu0 0.0
  %942 = vmatpush1.msra.mxu0 0.0
  %943 = vmatprep.subr.mxu0 0.0
  %944 = vmatpush1.msra.mxu0 0.0
  %945 = vmatprep.subr.mxu0 0.0
  %946 = vmatpush1.msra.mxu0 0.0
  %947 = vmatprep.subr.mxu0 0.0
  %948 = vmatpush1.msra.mxu0 0.0
  %949 = vmatprep.subr.mxu0 0.0
  %950 = vmatpush1.msra.mxu0 0.0
  %951 = vmatprep.subr.mxu0 0.0
  %952 = vmatpush1.msra.mxu0 0.0
  %953 = vmatprep.subr.mxu0 0.0
  %954 = vmatpush1.msra.mxu0 0.0
  %955 = vmatprep.subr.mxu0 0.0
  %956 = vmatpush1.msra.mxu0 0.0
  %957 = vmatprep.subr.mxu0 0.0
  %958 = vmatpush1.msra.mxu0 0.0
  %959 = vmatprep.subr.mxu0 0.0
  %960 = vmatpush1.msra.mxu0 0.0
  %961 = vmatprep.subr.mxu0 0.0
  %962 = vmatpush1.msra.mxu0 0.0
  %963 = vmatprep.subr.mxu0 0.0
  %964 = vmatpush1.msra.mxu0 0.0
  %965 = vmatprep.subr.mxu0 0.0
  %966 = vmatpush1.msra.mxu0 0.0
  %967 = vmatprep.subr.mxu0 0.0
  %968 = vmatpush1.msra.mxu0 0.0
  %969 = vmatprep.subr.mxu0 0.0
  %970 = vmatpush1.msra.mxu0 0.0
  %971 = vmatprep.subr.mxu0 0.0
  %972 = vmatpush1.msra.mxu0 0.0
  %973 = vmatprep.subr.mxu0 0.0
  %974 = vmatpush1.msra.mxu0 0.0
  %975 = vmatprep.subr.mxu0 0.0
  %976 = vmatpush1.msra.mxu0 0.0
  %977 = vmatprep.subr.mxu0 0.0
  %978 = vmatpush1.msra.mxu0 0.0
  %979 = vmatprep.subr.mxu0 0.0
  %980 = vmatpush1.msra.mxu0 0.0
  %981 = vmatprep.subr.mxu0 0.0
  %982 = vmatpush1.msra.mxu0 0.0
  %983 = vmatprep.subr.mxu0 0.0
  %984 = vmatpush1.msra.mxu0 0.0
  %985 = vmatprep.subr.mxu0 0.0
  %986 = vmatpush1.msra.mxu0 0.0
  %987 = vmatprep.subr.mxu0 0.0
  %988 = vmatpush1.msra.mxu0 0.0
  %989 = vmatprep.subr.mxu0 0.0
  %990 = vmatpush1.msra.mxu0 0.0
  %991 = vmatprep.subr.mxu0 0.0
  %992 = vmatpush1.msra.mxu0 0.0
  %993 = vmatprep.subr.mxu0 0.0
  %994 = vmatpush1.msra.mxu0 0.0
  %995 = vmatprep.subr.mxu0 0.0
  %996 = vmatpush1.msra.mxu0 0.0
  %997 = vmatprep.subr.mxu0 0.0
  %998 = vmatpush1.msra.mxu0 0.0
  %999 = vmatprep.subr.mxu0 0.0
  %1000 = vmatpush1.msra.mxu0 0.0
  %1001 = vmatprep.mubr.f32.mxu0 0.0
  %1002 = vmatmul.mubr.f32.gmra.mrb[0].mxu0 %v923
  %v1003 = vpop.f32.mrb[0].mxu0
  %v1004 = vadd.f32 %v920, %v1003
  %v1005 = vpop.f32.mrb[0].mxu0
  %1006 = vmatprep.mubr.f32.mxu0 0.0
  %1007 = vmatmul.mubr.f32.gmra.mrb[0].mxu0 %v926
  %v1008 = vpop.f32.mrb[0].mxu0
  %v1009 = vadd.f32 %v920, %v1008
  %v1010 = vpop.f32.mrb[0].mxu0
  %1011 = vmatprep.mubr.f32.mxu0 0.0
  %1012 = vmatmul.mubr.f32.gmra.mrb[0].mxu0 %v929
  %v1013 = vpop.f32.mrb[0].mxu0
  %v1014 = vadd.f32 %v920, %v1013
  %v1015 = vpop.f32.mrb[0].mxu0
  %1016 = vmatprep.mubr.f32.mxu0 0.0
  %1017 = vmatmul.mubr.f32.gmra.mrb[0].mxu0 %v932
  %v1018 = vpop.f32.mrb[0].mxu0
  %v1019 = vadd.f32 %v920, %v1018
  %v1020 = vpop.f32.mrb[0].mxu0
  %1021 = vmatprep.mubr.f32.mxu0 0.0
  %1022 = vmatmul.mubr.f32.gmra.mrb[0].mxu0 %v935
  %v1023 = vpop.f32.mrb[0].mxu0
  %v1024 = vadd.f32 %v920, %v1023
  %v1025 = vpop.f32.mrb[0].mxu0
  %1026 = vdwg.mxu0
  %v1027 = vadd.f32 %v640, %v1004
  %v1028 = vadd.f32 %v641, %v1009
  %v1029 = vadd.f32 %v642, %v1014
  %v1030 = vadd.f32 %v643, %v1019
  %v1031 = vadd.f32 %v644, %v1024
  %v1032 = vadd.f32 %v645, %v1004
  %v1033 = vadd.f32 %v646, %v1009
  %v1034 = vadd.f32 %v647, %v1014
  %v1035 = vadd.f32 %v648, %v1019
  %v1036 = vadd.f32 %v649, %v1024
  %vm1037 = vcmp.ge.s32.totalorder %v44, 4
  %vm1038 = vcmp.ge.s32.totalorder %v45, 4
  %vm1039 = vcmp.ge.s32.totalorder %v46, 4
  %vm1040 = vcmp.ge.s32.totalorder %v47, 4
  %vm1041 = vcmp.ge.s32.totalorder %v48, 4
  %v1042 = vrot.slane %v1027, 4
  %v1043 = vrot.slane %v1028, 4
  %v1044 = vrot.slane %v1029, 4
  %v1045 = vrot.slane %v1030, 4
  %v1046 = vrot.slane %v1031, 4
  %vm1047 = vcmp.lt.s32.totalorder %v294, 4
  %v1048 = vsel %vm1047, %v1045, %v1046
  %v1049 = vsel %vm1047, %v1044, %v1045
  %v1050 = vsel %vm1047, %v1043, %v1044
  %v1051 = vsel %vm1047, %v1042, %v1043
  %v1052 = vsel %vm1047, %v1046, %v1042
  %v1053 = vsel %vm1037, 1, 0
  %v1054 = vsel %vm1038, 1, 0
  %v1055 = vsel %vm1039, 1, 0
  %v1056 = vsel %vm1040, 1, 0
  %v1057 = vsel %vm1041, 1, 0
  %1058 = vset.pattern.permute.xlu0 0
  %1059 = vperm.xlu0 %1058, %v1053
  %v1060 = vpop.permute.xlu0 %1059
  %1061 = vset.pattern.permute.xlu0 0
  %1062 = vperm.xlu0 %1061, %v1054
  %v1063 = vpop.permute.xlu0 %1062
  %1064 = vset.pattern.permute.xlu0 0
  %1065 = vperm.xlu0 %1064, %v1055
  %v1066 = vpop.permute.xlu0 %1065
  %1067 = vset.pattern.permute.xlu0 0
  %1068 = vperm.xlu0 %1067, %v1056
  %v1069 = vpop.permute.xlu0 %1068
  %1070 = vset.pattern.permute.xlu0 0
  %1071 = vperm.xlu0 %1070, %v1057
  %v1072 = vpop.permute.xlu0 %1071
  %vm1073 = vcmp.eq.s32.totalorder %v1060, 1
  %vm1074 = vcmp.eq.s32.totalorder %v1063, 1
  %vm1075 = vcmp.eq.s32.totalorder %v1066, 1
  %vm1076 = vcmp.eq.s32.totalorder %v1069, 1
  %vm1077 = vcmp.eq.s32.totalorder %v1072, 1
  %v1078 = vsel %vm1073, %v1052, 0.0
  %v1079 = vsel %vm1074, %v1051, 0.0
  %v1080 = vsel %vm1075, %v1050, 0.0
  %v1081 = vsel %vm1076, %v1049, 0.0
  %v1082 = vsel %vm1077, %v1048, 0.0
  %1088 = vrot.lane.b32.xlu0 %v1078, 16
  %v1089 = vpop.permute.xlu0 %1088
  %1090 = vrot.lane.b32.xlu0 %v1079, 16
  %v1091 = vpop.permute.xlu0 %1090
  %1092 = vrot.lane.b32.xlu0 %v1080, 16
  %v1093 = vpop.permute.xlu0 %1092
  %1094 = vrot.lane.b32.xlu0 %v1081, 16
  %v1095 = vpop.permute.xlu0 %1094
  %1096 = vrot.lane.b32.xlu0 %v1082, 16
  %v1097 = vpop.permute.xlu0 %1096
  %v1103 = vsel %vm177, %v1027, %v1089
  %v1104 = vsel %vm177, %v1028, %v1091
  %v1105 = vsel %vm177, %v1029, %v1093
  %v1106 = vsel %vm177, %v1030, %v1095
  %v1107 = vsel %vm177, %v1031, %v1097
  %s1108 = scalar_lea.vmem %s6, 64
  %v1109 = vld [vmem:[%s1108] sm:$0xff]
  %v1110 = vld [vmem:[%s1108 + $0x8] sm:$0xff]
  %v1111 = vld [vmem:[%s1108 + $0x10] sm:$0xff]
  %v1112 = vld [vmem:[%s1108 + $0x18] sm:$0xff]
  %1113 = vrot.lane.b32.xlu0 %v260, 64
  %v1114 = vpop.permute.xlu0 %1113
  %1115 = vrot.lane.b32.xlu0 %v265, 64
  %v1116 = vpop.permute.xlu0 %1115
  %1117 = vrot.lane.b32.xlu0 %v270, 64
  %v1118 = vpop.permute.xlu0 %1117
  %1119 = vrot.lane.b32.xlu0 %v275, 64
  %v1120 = vpop.permute.xlu0 %1119
  %1121 = vrot.lane.b32.xlu0 %v280, 64
  %v1122 = vpop.permute.xlu0 %1121
  %v1129 = vsel %vm360, %v1103, 0
  %v1132 = vsel %vm360, %v1104, 0
  %v1135 = vsel %vm360, %v1105, 0
  %v1138 = vsel %vm360, %v1106, 0
  %v1141 = vsel %vm360, %v1107, 0
  %1143 = vmatprep.subr.mxu0 0.0
  %1144 = vmatpush1.msra.mxu0 %v1109
  %1145 = vmatprep.subr.mxu0 0.0
  %1146 = vmatpush1.msra.mxu0 %v1110
  %1147 = vmatprep.subr.mxu0 0.0
  %1148 = vmatpush1.msra.mxu0 %v1111
  %1149 = vmatprep.subr.mxu0 0.0
  %1150 = vmatpush1.msra.mxu0 %v1112
  %1151 = vmatprep.subr.mxu0 0.0
  %1152 = vmatpush1.msra.mxu0 0.0
  %1153 = vmatprep.subr.mxu0 0.0
  %1154 = vmatpush1.msra.mxu0 0.0
  %1155 = vmatprep.subr.mxu0 0.0
  %1156 = vmatpush1.msra.mxu0 0.0
  %1157 = vmatprep.subr.mxu0 0.0
  %1158 = vmatpush1.msra.mxu0 0.0
  %1159 = vmatprep.subr.mxu0 0.0
  %1160 = vmatpush1.msra.mxu0 0.0
  %1161 = vmatprep.subr.mxu0 0.0
  %1162 = vmatpush1.msra.mxu0 0.0
  %1163 = vmatprep.subr.mxu0 0.0
  %1164 = vmatpush1.msra.mxu0 0.0
  %1165 = vmatprep.subr.mxu0 0.0
  %1166 = vmatpush1.msra.mxu0 0.0
  %1167 = vmatprep.subr.mxu0 0.0
  %1168 = vmatpush1.msra.mxu0 0.0
  %1169 = vmatprep.subr.mxu0 0.0
  %1170 = vmatpush1.msra.mxu0 0.0
  %1171 = vmatprep.subr.mxu0 0.0
  %1172 = vmatpush1.msra.mxu0 0.0
  %1173 = vmatprep.subr.mxu0 0.0
  %1174 = vmatpush1.msra.mxu0 0.0
  %1175 = vmatprep.subr.mxu0 0.0
  %1176 = vmatpush1.msra.mxu0 0.0
  %1177 = vmatprep.subr.mxu0 0.0
  %1178 = vmatpush1.msra.mxu0 0.0
  %1179 = vmatprep.subr.mxu0 0.0
  %1180 = vmatpush1.msra.mxu0 0.0
  %1181 = vmatprep.subr.mxu0 0.0
  %1182 = vmatpush1.msra.mxu0 0.0
  %1183 = vmatprep.subr.mxu0 0.0
  %1184 = vmatpush1.msra.mxu0 0.0
  %1185 = vmatprep.subr.mxu0 0.0
  %1186 = vmatpush1.msra.mxu0 0.0
  %1187 = vmatprep.subr.mxu0 0.0
  %1188 = vmatpush1.msra.mxu0 0.0
  %1189 = vmatprep.subr.mxu0 0.0
  %1190 = vmatpush1.msra.mxu0 0.0
  %1191 = vmatprep.subr.mxu0 0.0
  %1192 = vmatpush1.msra.mxu0 0.0
  %1193 = vmatprep.subr.mxu0 0.0
  %1194 = vmatpush1.msra.mxu0 0.0
  %1195 = vmatprep.subr.mxu0 0.0
  %1196 = vmatpush1.msra.mxu0 0.0
  %1197 = vmatprep.subr.mxu0 0.0
  %1198 = vmatpush1.msra.mxu0 0.0
  %1199 = vmatprep.subr.mxu0 0.0
  %1200 = vmatpush1.msra.mxu0 0.0
  %1201 = vmatprep.subr.mxu0 0.0
  %1202 = vmatpush1.msra.mxu0 0.0
  %1203 = vmatprep.subr.mxu0 0.0
  %1204 = vmatpush1.msra.mxu0 0.0
  %1205 = vmatprep.subr.mxu0 0.0
  %1206 = vmatpush1.msra.mxu0 0.0
  %1207 = vmatprep.mubr.f32.mxu0 0.0
  %1208 = vmatmul.mubr.f32.gmra.mrb[0].mxu0 %v1129
  %v1209 = vpop.f32.mrb[0].mxu0
  %v1210 = vadd.f32 %v1114, %v1209
  %v1211 = vpop.f32.mrb[0].mxu0
  %1212 = vmatprep.mubr.f32.mxu0 0.0
  %1213 = vmatmul.mubr.f32.gmra.mrb[0].mxu0 %v1132
  %v1214 = vpop.f32.mrb[0].mxu0
  %v1215 = vadd.f32 %v1116, %v1214
  %v1216 = vpop.f32.mrb[0].mxu0
  %1217 = vmatprep.mubr.f32.mxu0 0.0
  %1218 = vmatmul.mubr.f32.gmra.mrb[0].mxu0 %v1135
  %v1219 = vpop.f32.mrb[0].mxu0
  %v1220 = vadd.f32 %v1118, %v1219
  %v1221 = vpop.f32.mrb[0].mxu0
  %1222 = vmatprep.mubr.f32.mxu0 0.0
  %1223 = vmatmul.mubr.f32.gmra.mrb[0].mxu0 %v1138
  %v1224 = vpop.f32.mrb[0].mxu0
  %v1225 = vadd.f32 %v1120, %v1224
  %v1226 = vpop.f32.mrb[0].mxu0
  %1227 = vmatprep.mubr.f32.mxu0 0.0
  %1228 = vmatmul.mubr.f32.gmra.mrb[0].mxu0 %v1141
  %v1229 = vpop.f32.mrb[0].mxu0
  %v1230 = vadd.f32 %v1122, %v1229
  %v1231 = vpop.f32.mrb[0].mxu0
  %1232 = vdwg.mxu0
  %v1233 = vtanh.pop %v1210
  %v1234 = vtanh.pop %v1215
  %v1235 = vtanh.pop %v1220
  %v1236 = vtanh.pop %v1225
  %v1237 = vtanh.pop %v1230
  %v1238 = vxor.u32 %v1210, 2147483648
  %v1239 = vxor.u32 %v1215, 2147483648
  %v1240 = vxor.u32 %v1220, 2147483648
  %v1241 = vxor.u32 %v1225, 2147483648
  %v1242 = vxor.u32 %v1230, 2147483648
  %v1243 = vmul.f32 %v1238, 1.442695
  %v1244 = vpow.pop %v1243
  %v1245 = vmul.f32 %v1239, 1.442695
  %v1246 = vpow.pop %v1245
  %v1247 = vmul.f32 %v1240, 1.442695
  %v1248 = vpow.pop %v1247
  %v1249 = vmul.f32 %v1241, 1.442695
  %v1250 = vpow.pop %v1249
  %v1251 = vmul.f32 %v1242, 1.442695
  %v1252 = vpow.pop %v1251
  %v1253 = vadd.f32 %v1244, 1.0
  %v1254 = vadd.f32 %v1246, 1.0
  %v1255 = vadd.f32 %v1248, 1.0
  %v1256 = vadd.f32 %v1250, 1.0
  %v1257 = vadd.f32 %v1252, 1.0
  %v1258 = vrcp.pop %v1253
  %v1259 = vmul.f32 1.0, %v1258
  %v1260 = vrcp.pop %v1254
  %v1261 = vmul.f32 1.0, %v1260
  %v1262 = vrcp.pop %v1255
  %v1263 = vmul.f32 1.0, %v1262
  %v1264 = vrcp.pop %v1256
  %v1265 = vmul.f32 1.0, %v1264
  %v1266 = vrcp.pop %v1257
  %v1267 = vmul.f32 1.0, %v1266
  %1273 = vrot.lane.b32.xlu0 %v1259, 112
  %v1274 = vpop.permute.xlu0 %1273
  %1275 = vrot.lane.b32.xlu0 %v1261, 112
  %v1276 = vpop.permute.xlu0 %1275
  %1277 = vrot.lane.b32.xlu0 %v1263, 112
  %v1278 = vpop.permute.xlu0 %1277
  %1279 = vrot.lane.b32.xlu0 %v1265, 112
  %v1280 = vpop.permute.xlu0 %1279
  %1281 = vrot.lane.b32.xlu0 %v1267, 112
  %v1282 = vpop.permute.xlu0 %1281
  %v1288 = vmul.f32 %v1233, %v1274
  %v1289 = vmul.f32 %v1234, %v1276
  %v1290 = vmul.f32 %v1235, %v1278
  %v1291 = vmul.f32 %v1236, %v1280
  %v1292 = vmul.f32 %v1237, %v1282
  %s1293 = scalar_lea.vmem %s7, 32
  %v1294 = vld [vmem:[%s1293] sm:$0xff]
  %v1295 = vld [vmem:[%s1293 + $0x8] sm:$0xff]
  %s1296 = scalar_lea.vmem %s8, 2
  %v1297 = vld [vmem:[%s1296] sm:$0x1]
  %v1299 = vlaneseq
  %v1300 = vshrl.u32 %v1299, 7
  %v1301 = vsub.s32 0, %v1300
  %v1302 = vrot.slane %v1297, %v1301
  %v1305 = vsel %vm177, %v1288, 0
  %v1308 = vsel %vm177, %v1289, 0
  %v1311 = vsel %vm177, %v1290, 0
  %v1314 = vsel %vm177, %v1291, 0
  %v1317 = vsel %vm177, %v1292, 0
  %1319 = vmatprep.subr.mxu0 0.0
  %1320 = vmatpush1.msra.mxu0 %v1294
  %1321 = vmatprep.subr.mxu0 0.0
  %1322 = vmatpush1.msra.mxu0 %v1295
  %1323 = vmatprep.subr.mxu0 0.0
  %1324 = vmatpush1.msra.mxu0 0.0
  %1325 = vmatprep.subr.mxu0 0.0
  %1326 = vmatpush1.msra.mxu0 0.0
  %1327 = vmatprep.subr.mxu0 0.0
  %1328 = vmatpush1.msra.mxu0 0.0
  %1329 = vmatprep.subr.mxu0 0.0
  %1330 = vmatpush1.msra.mxu0 0.0
  %1331 = vmatprep.subr.mxu0 0.0
  %1332 = vmatpush1.msra.mxu0 0.0
  %1333 = vmatprep.subr.mxu0 0.0
  %1334 = vmatpush1.msra.mxu0 0.0
  %1335 = vmatprep.subr.mxu0 0.0
  %1336 = vmatpush1.msra.mxu0 0.0
  %1337 = vmatprep.subr.mxu0 0.0
  %1338 = vmatpush1.msra.mxu0 0.0
  %1339 = vmatprep.subr.mxu0 0.0
  %1340 = vmatpush1.msra.mxu0 0.0
  %1341 = vmatprep.subr.mxu0 0.0
  %1342 = vmatpush1.msra.mxu0 0.0
  %1343 = vmatprep.subr.mxu0 0.0
  %1344 = vmatpush1.msra.mxu0 0.0
  %1345 = vmatprep.subr.mxu0 0.0
  %1346 = vmatpush1.msra.mxu0 0.0
  %1347 = vmatprep.subr.mxu0 0.0
  %1348 = vmatpush1.msra.mxu0 0.0
  %1349 = vmatprep.subr.mxu0 0.0
  %1350 = vmatpush1.msra.mxu0 0.0
  %1351 = vmatprep.subr.mxu0 0.0
  %1352 = vmatpush1.msra.mxu0 0.0
  %1353 = vmatprep.subr.mxu0 0.0
  %1354 = vmatpush1.msra.mxu0 0.0
  %1355 = vmatprep.subr.mxu0 0.0
  %1356 = vmatpush1.msra.mxu0 0.0
  %1357 = vmatprep.subr.mxu0 0.0
  %1358 = vmatpush1.msra.mxu0 0.0
  %1359 = vmatprep.subr.mxu0 0.0
  %1360 = vmatpush1.msra.mxu0 0.0
  %1361 = vmatprep.subr.mxu0 0.0
  %1362 = vmatpush1.msra.mxu0 0.0
  %1363 = vmatprep.subr.mxu0 0.0
  %1364 = vmatpush1.msra.mxu0 0.0
  %1365 = vmatprep.subr.mxu0 0.0
  %1366 = vmatpush1.msra.mxu0 0.0
  %1367 = vmatprep.subr.mxu0 0.0
  %1368 = vmatpush1.msra.mxu0 0.0
  %1369 = vmatprep.subr.mxu0 0.0
  %1370 = vmatpush1.msra.mxu0 0.0
  %1371 = vmatprep.subr.mxu0 0.0
  %1372 = vmatpush1.msra.mxu0 0.0
  %1373 = vmatprep.subr.mxu0 0.0
  %1374 = vmatpush1.msra.mxu0 0.0
  %1375 = vmatprep.subr.mxu0 0.0
  %1376 = vmatpush1.msra.mxu0 0.0
  %1377 = vmatprep.subr.mxu0 0.0
  %1378 = vmatpush1.msra.mxu0 0.0
  %1379 = vmatprep.subr.mxu0 0.0
  %1380 = vmatpush1.msra.mxu0 0.0
  %1381 = vmatprep.subr.mxu0 0.0
  %1382 = vmatpush1.msra.mxu0 0.0
  %1383 = vmatprep.mubr.f32.mxu0 0.0
  %1384 = vmatmul.mubr.f32.gmra.mrb[0].mxu0 %v1305
  %v1385 = vpop.f32.mrb[0].mxu0
  %v1386 = vadd.f32 %v1302, %v1385
  %v1387 = vpop.f32.mrb[0].mxu0
  %1388 = vmatprep.mubr.f32.mxu0 0.0
  %1389 = vmatmul.mubr.f32.gmra.mrb[0].mxu0 %v1308
  %v1390 = vpop.f32.mrb[0].mxu0
  %v1391 = vadd.f32 %v1302, %v1390
  %v1392 = vpop.f32.mrb[0].mxu0
  %1393 = vmatprep.mubr.f32.mxu0 0.0
  %1394 = vmatmul.mubr.f32.gmra.mrb[0].mxu0 %v1311
  %v1395 = vpop.f32.mrb[0].mxu0
  %v1396 = vadd.f32 %v1302, %v1395
  %v1397 = vpop.f32.mrb[0].mxu0
  %1398 = vmatprep.mubr.f32.mxu0 0.0
  %1399 = vmatmul.mubr.f32.gmra.mrb[0].mxu0 %v1314
  %v1400 = vpop.f32.mrb[0].mxu0
  %v1401 = vadd.f32 %v1302, %v1400
  %v1402 = vpop.f32.mrb[0].mxu0
  %1403 = vmatprep.mubr.f32.mxu0 0.0
  %1404 = vmatmul.mubr.f32.gmra.mrb[0].mxu0 %v1317
  %v1405 = vpop.f32.mrb[0].mxu0
  %v1406 = vadd.f32 %v1302, %v1405
  %v1407 = vpop.f32.mrb[0].mxu0
  %1408 = vdwg.mxu0
  %v1409 = vadd.f32 %v1032, %v1386
  %v1410 = vadd.f32 %v1033, %v1391
  %v1411 = vadd.f32 %v1034, %v1396
  %v1412 = vadd.f32 %v1035, %v1401
  %v1413 = vadd.f32 %v1036, %v1406
  %v1414 = vmax.f32 %v1409, 0.0
  %v1415 = vmax.f32 %v1410, 0.0
  %v1416 = vmax.f32 %v1411, 0.0
  %v1417 = vmax.f32 %v1412, 0.0
  %v1418 = vmax.f32 %v1413, 0.0
  %v1419 = vld [vmem:[%s9] sm:$0xff]
  %v1420 = vld [vmem:[%s9 + $0x8] sm:$0xff]
  %v1421 = vld [vmem:[%s10] sm:$0x1]
  %v1423 = vlaneseq
  %v1424 = vshrl.u32 %v1423, 7
  %v1425 = vsub.s32 0, %v1424
  %v1426 = vrot.slane %v1421, %v1425
  %1433 = vrot.lane.b32.xlu0 %v1414, 112
  %v1434 = vpop.permute.xlu0 %1433
  %1435 = vrot.lane.b32.xlu0 %v1415, 112
  %v1436 = vpop.permute.xlu0 %1435
  %1437 = vrot.lane.b32.xlu0 %v1416, 112
  %v1438 = vpop.permute.xlu0 %1437
  %1439 = vrot.lane.b32.xlu0 %v1417, 112
  %v1440 = vpop.permute.xlu0 %1439
  %1441 = vrot.lane.b32.xlu0 %v1418, 112
  %v1442 = vpop.permute.xlu0 %1441
  %v1443 = vsel %vm177, %v1434, 0
  %v1445 = vsel %vm177, %v1436, 0
  %v1447 = vsel %vm177, %v1438, 0
  %v1449 = vsel %vm177, %v1440, 0
  %v1451 = vsel %vm177, %v1442, 0
  %1453 = vmatprep.subr.mxu0 0.0
  %1454 = vmatpush1.msra.mxu0 %v1419
  %1455 = vmatprep.subr.mxu0 0.0
  %1456 = vmatpush1.msra.mxu0 %v1420
  %1457 = vmatprep.subr.mxu0 0.0
  %1458 = vmatpush1.msra.mxu0 0.0
  %1459 = vmatprep.subr.mxu0 0.0
  %1460 = vmatpush1.msra.mxu0 0.0
  %1461 = vmatprep.subr.mxu0 0.0
  %1462 = vmatpush1.msra.mxu0 0.0
  %1463 = vmatprep.subr.mxu0 0.0
  %1464 = vmatpush1.msra.mxu0 0.0
  %1465 = vmatprep.subr.mxu0 0.0
  %1466 = vmatpush1.msra.mxu0 0.0
  %1467 = vmatprep.subr.mxu0 0.0
  %1468 = vmatpush1.msra.mxu0 0.0
  %1469 = vmatprep.subr.mxu0 0.0
  %1470 = vmatpush1.msra.mxu0 0.0
  %1471 = vmatprep.subr.mxu0 0.0
  %1472 = vmatpush1.msra.mxu0 0.0
  %1473 = vmatprep.subr.mxu0 0.0
  %1474 = vmatpush1.msra.mxu0 0.0
  %1475 = vmatprep.subr.mxu0 0.0
  %1476 = vmatpush1.msra.mxu0 0.0
  %1477 = vmatprep.subr.mxu0 0.0
  %1478 = vmatpush1.msra.mxu0 0.0
  %1479 = vmatprep.subr.mxu0 0.0
  %1480 = vmatpush1.msra.mxu0 0.0
  %1481 = vmatprep.subr.mxu0 0.0
  %1482 = vmatpush1.msra.mxu0 0.0
  %1483 = vmatprep.subr.mxu0 0.0
  %1484 = vmatpush1.msra.mxu0 0.0
  %1485 = vmatprep.subr.mxu0 0.0
  %1486 = vmatpush1.msra.mxu0 0.0
  %1487 = vmatprep.subr.mxu0 0.0
  %1488 = vmatpush1.msra.mxu0 0.0
  %1489 = vmatprep.subr.mxu0 0.0
  %1490 = vmatpush1.msra.mxu0 0.0
  %1491 = vmatprep.subr.mxu0 0.0
  %1492 = vmatpush1.msra.mxu0 0.0
  %1493 = vmatprep.subr.mxu0 0.0
  %1494 = vmatpush1.msra.mxu0 0.0
  %1495 = vmatprep.subr.mxu0 0.0
  %1496 = vmatpush1.msra.mxu0 0.0
  %1497 = vmatprep.subr.mxu0 0.0
  %1498 = vmatpush1.msra.mxu0 0.0
  %1499 = vmatprep.subr.mxu0 0.0
  %1500 = vmatpush1.msra.mxu0 0.0
  %1501 = vmatprep.subr.mxu0 0.0
  %1502 = vmatpush1.msra.mxu0 0.0
  %1503 = vmatprep.subr.mxu0 0.0
  %1504 = vmatpush1.msra.mxu0 0.0
  %1505 = vmatprep.subr.mxu0 0.0
  %1506 = vmatpush1.msra.mxu0 0.0
  %1507 = vmatprep.subr.mxu0 0.0
  %1508 = vmatpush1.msra.mxu0 0.0
  %1509 = vmatprep.subr.mxu0 0.0
  %1510 = vmatpush1.msra.mxu0 0.0
  %1511 = vmatprep.subr.mxu0 0.0
  %1512 = vmatpush1.msra.mxu0 0.0
  %1513 = vmatprep.subr.mxu0 0.0
  %1514 = vmatpush1.msra.mxu0 0.0
  %1515 = vmatprep.subr.mxu0 0.0
  %1516 = vmatpush1.msra.mxu0 0.0
  %1517 = vmatprep.mubr.f32.mxu0 0.0
  %1518 = vmatmul.mubr.f32.gmra.mrb[0].mxu0 %v1443
  %v1519 = vpop.f32.mrb[0].mxu0
  %v1520 = vadd.f32 %v1426, %v1519
  %v1521 = vpop.f32.mrb[0].mxu0
  %1522 = vmatprep.mubr.f32.mxu0 0.0
  %1523 = vmatmul.mubr.f32.gmra.mrb[0].mxu0 %v1445
  %v1524 = vpop.f32.mrb[0].mxu0
  %v1525 = vadd.f32 %v1426, %v1524
  %v1526 = vpop.f32.mrb[0].mxu0
  %1527 = vmatprep.mubr.f32.mxu0 0.0
  %1528 = vmatmul.mubr.f32.gmra.mrb[0].mxu0 %v1447
  %v1529 = vpop.f32.mrb[0].mxu0
  %v1530 = vadd.f32 %v1426, %v1529
  %v1531 = vpop.f32.mrb[0].mxu0
  %1532 = vmatprep.mubr.f32.mxu0 0.0
  %1533 = vmatmul.mubr.f32.gmra.mrb[0].mxu0 %v1449
  %v1534 = vpop.f32.mrb[0].mxu0
  %v1535 = vadd.f32 %v1426, %v1534
  %v1536 = vpop.f32.mrb[0].mxu0
  %1537 = vmatprep.mubr.f32.mxu0 0.0
  %1538 = vmatmul.mubr.f32.gmra.mrb[0].mxu0 %v1451
  %v1539 = vpop.f32.mrb[0].mxu0
  %v1540 = vadd.f32 %v1426, %v1539
  %v1541 = vpop.f32.mrb[0].mxu0
  %1542 = vdwg.mxu0
  %v1543 = vmax.f32 %v1520, 0.0
  %v1544 = vmax.f32 %v1525, 0.0
  %v1545 = vmax.f32 %v1530, 0.0
  %v1546 = vmax.f32 %v1535, 0.0
  %v1547 = vmax.f32 %v1540, 0.0
  %v1548 = vld [vmem:[%s11] sm:$0xff]
  %v1549 = vld [vmem:[%s11 + $0x8] sm:$0xff]
  %v1550 = vld [vmem:[%s11 + $0x10] sm:$0xff]
  %v1551 = vld [vmem:[%s11 + $0x18] sm:$0xff]
  %v1552 = vld [vmem:[%s12] sm:$0x1]
  %v1554 = vlaneseq
  %v1555 = vshrl.u32 %v1554, 7
  %v1556 = vsub.s32 0, %v1555
  %v1557 = vrot.slane %v1552, %v1556
  %v1560 = vsel %vm360, %v1543, 0
  %v1563 = vsel %vm360, %v1544, 0
  %v1566 = vsel %vm360, %v1545, 0
  %v1569 = vsel %vm360, %v1546, 0
  %v1572 = vsel %vm360, %v1547, 0
  %1574 = vmatprep.subr.mxu0 0.0
  %1575 = vmatpush1.msra.mxu0 %v1548
  %1576 = vmatprep.subr.mxu0 0.0
  %1577 = vmatpush1.msra.mxu0 %v1549
  %1578 = vmatprep.subr.mxu0 0.0
  %1579 = vmatpush1.msra.mxu0 %v1550
  %1580 = vmatprep.subr.mxu0 0.0
  %1581 = vmatpush1.msra.mxu0 %v1551
  %1582 = vmatprep.subr.mxu0 0.0
  %1583 = vmatpush1.msra.mxu0 0.0
  %1584 = vmatprep.subr.mxu0 0.0
  %1585 = vmatpush1.msra.mxu0 0.0
  %1586 = vmatprep.subr.mxu0 0.0
  %1587 = vmatpush1.msra.mxu0 0.0
  %1588 = vmatprep.subr.mxu0 0.0
  %1589 = vmatpush1.msra.mxu0 0.0
  %1590 = vmatprep.subr.mxu0 0.0
  %1591 = vmatpush1.msra.mxu0 0.0
  %1592 = vmatprep.subr.mxu0 0.0
  %1593 = vmatpush1.msra.mxu0 0.0
  %1594 = vmatprep.subr.mxu0 0.0
  %1595 = vmatpush1.msra.mxu0 0.0
  %1596 = vmatprep.subr.mxu0 0.0
  %1597 = vmatpush1.msra.mxu0 0.0
  %1598 = vmatprep.subr.mxu0 0.0
  %1599 = vmatpush1.msra.mxu0 0.0
  %1600 = vmatprep.subr.mxu0 0.0
  %1601 = vmatpush1.msra.mxu0 0.0
  %1602 = vmatprep.subr.mxu0 0.0
  %1603 = vmatpush1.msra.mxu0 0.0
  %1604 = vmatprep.subr.mxu0 0.0
  %1605 = vmatpush1.msra.mxu0 0.0
  %1606 = vmatprep.subr.mxu0 0.0
  %1607 = vmatpush1.msra.mxu0 0.0
  %1608 = vmatprep.subr.mxu0 0.0
  %1609 = vmatpush1.msra.mxu0 0.0
  %1610 = vmatprep.subr.mxu0 0.0
  %1611 = vmatpush1.msra.mxu0 0.0
  %1612 = vmatprep.subr.mxu0 0.0
  %1613 = vmatpush1.msra.mxu0 0.0
  %1614 = vmatprep.subr.mxu0 0.0
  %1615 = vmatpush1.msra.mxu0 0.0
  %1616 = vmatprep.subr.mxu0 0.0
  %1617 = vmatpush1.msra.mxu0 0.0
  %1618 = vmatprep.subr.mxu0 0.0
  %1619 = vmatpush1.msra.mxu0 0.0
  %1620 = vmatprep.subr.mxu0 0.0
  %1621 = vmatpush1.msra.mxu0 0.0
  %1622 = vmatprep.subr.mxu0 0.0
  %1623 = vmatpush1.msra.mxu0 0.0
  %1624 = vmatprep.subr.mxu0 0.0
  %1625 = vmatpush1.msra.mxu0 0.0
  %1626 = vmatprep.subr.mxu0 0.0
  %1627 = vmatpush1.msra.mxu0 0.0
  %1628 = vmatprep.subr.mxu0 0.0
  %1629 = vmatpush1.msra.mxu0 0.0
  %1630 = vmatprep.subr.mxu0 0.0
  %1631 = vmatpush1.msra.mxu0 0.0
  %1632 = vmatprep.subr.mxu0 0.0
  %1633 = vmatpush1.msra.mxu0 0.0
  %1634 = vmatprep.subr.mxu0 0.0
  %1635 = vmatpush1.msra.mxu0 0.0
  %1636 = vmatprep.subr.mxu0 0.0
  %1637 = vmatpush1.msra.mxu0 0.0
  %1638 = vmatprep.mubr.f32.mxu0 0.0
  %1639 = vmatmul.mubr.f32.gmra.mrb[0].mxu0 %v1560
  %v1640 = vpop.f32.mrb[0].mxu0
  %v1641 = vadd.f32 %v1557, %v1640
  %v1642 = vpop.f32.mrb[0].mxu0
  %1643 = vmatprep.mubr.f32.mxu0 0.0
  %1644 = vmatmul.mubr.f32.gmra.mrb[0].mxu0 %v1563
  %v1645 = vpop.f32.mrb[0].mxu0
  %v1646 = vadd.f32 %v1557, %v1645
  %v1647 = vpop.f32.mrb[0].mxu0
  %1648 = vmatprep.mubr.f32.mxu0 0.0
  %1649 = vmatmul.mubr.f32.gmra.mrb[0].mxu0 %v1566
  %v1650 = vpop.f32.mrb[0].mxu0
  %v1651 = vadd.f32 %v1557, %v1650
  %v1652 = vpop.f32.mrb[0].mxu0
  %1653 = vmatprep.mubr.f32.mxu0 0.0
  %1654 = vmatmul.mubr.f32.gmra.mrb[0].mxu0 %v1569
  %v1655 = vpop.f32.mrb[0].mxu0
  %v1656 = vadd.f32 %v1557, %v1655
  %v1657 = vpop.f32.mrb[0].mxu0
  %1658 = vmatprep.mubr.f32.mxu0 0.0
  %1659 = vmatmul.mubr.f32.gmra.mrb[0].mxu0 %v1572
  %v1660 = vpop.f32.mrb[0].mxu0
  %v1661 = vadd.f32 %v1557, %v1660
  %v1662 = vpop.f32.mrb[0].mxu0
  %1663 = vdwg.mxu0
  %1664 = vst.msk [vmem:[%s13] sm:$0xff] %vm360, %v1641
  %1665 = vst.msk [vmem:[%s13 + $0x8] sm:$0xff] %vm360, %v1646
  %1666 = vst.msk [vmem:[%s13 + $0x10] sm:$0xff] %vm360, %v1651
  %1667 = vst.msk [vmem:[%s13 + $0x18] sm:$0xff] %vm360, %v1656
  %1668 = vst.msk [vmem:[%s13 + $0x20] sm:$0xff] %vm360, %v1661
  // Predicated region
  $region54: #{_lambda_.3} parent=0 // pred_check
    _
  $region55: #{_lambda_.3} parent=0 // pred_check_branch
    %1670 = sbr.rel (0) target = $region57
  $region56: #{_lambda_.3} parent=0 // pred_region
    _
  $region57: #{_lambda_.3} parent=0 // pred_fallthru
    _
  // Predicated region
  $region58: #{_lambda_.3} parent=0 // pred_check
    _
  $region59: #{_lambda_.3} parent=0 // pred_check_branch
    %1672 = sbr.rel (0) target = $region61
  $region60: #{_lambda_.3} parent=0 // pred_region
    _
  $region61: #{_lambda_.3} parent=0 // pred_fallthru
    _

</llo_original>
